<compile_context>
chip_gen: v5e
topology: v5e:2x2
jax: 0.10.0
libtpu: 0.0.40
codegen_flags: <defaults>
</compile_context>

<pallas_src>
import functools

import jax
import jax.numpy as jnp
from jax import lax
from jax.experimental import pallas as pl
from jax.experimental.pallas import tpu as pltpu


# ----------------------------------------------------------------------------
# Fused ResidualGroup kernel.
# ----------------------------------------------------------------------------
def _group_kernel(mask_ref, x_ref,
                  w1_ref, b1_ref, w2_ref, b2_ref,
                  caw1_ref, cab1_ref, caw2_ref, cab2_ref,
                  o_ref,
                  res_ref, h1_ref,
                  *, H, W, q_lo, n_blocks):
    # mask_ref : (1, npix) interior-column mask (1 inside image, 0 on pad cols)
    # x_ref    : (1, C, Lp) padded-flat transposed image (resident across b)
    # w1_ref   : (1, C, 9C) conv1 weights, bf16 (tail conv at the last step)
    # b1_ref   : (1, C, 1)  f32
    # w2_ref   : (1, C, 9C) conv2 weights, bf16 (clamped/unused at tail step)
    # b2_ref   : (1, C, 1)
    # caw1_ref : (1, Cr, C) CA squeeze FC;  cab1_ref: (1, Cr, 1)
    # caw2_ref : (1, C, Cr) CA excite FC;   cab2_ref: (1, C, 1)
    # o_ref    : (1, C, Lp) padded-flat output (written only at the last step)
    # res_ref  : (C, Lp) f32 scratch -- running activation
    # h1_ref   : (C, Lp) f32 scratch -- conv1 output
    Wp = W + 2
    npix = H * Wp                       # full padded rows; pad cols re-masked
    b = pl.program_id(1)

    mask = mask_ref[...]                # (1, npix)

    def conv3x3(src_ref, wk, bk, relu):
        # src_ref: (C, Lp) f32 buffer with zero halo/guard lanes.
        # wk: (C, 9C) bf16, bk: (C, 1) f32.  Returns masked (C, npix) f32.
        src = src_ref[...].astype(jnp.bfloat16)            # one cast pass
        taps = []
        for ky in range(3):
            for kx in range(3):
                s0 = q_lo + (ky - 1) * Wp + (kx - 1)       # static lane offset
                taps.append(src[:, s0:s0 + npix])
        xcat = jnp.concatenate(taps, axis=0)               # (9C, npix) sublane stack
        out = jnp.dot(wk, xcat, preferred_element_type=jnp.float32) + bk
        if relu:
            out = jnp.maximum(out, 0.0)
        return out * mask                                  # zero the pad columns

    # ---- per-image init: load the (already zero-padded) image into VMEM ----
    @pl.when(b == 0)
    def _init():
        res_ref[...] = x_ref[0].astype(jnp.float32)
        h1_ref[...] = jnp.zeros_like(h1_ref)               # keep halo/guards zero

    # ---- RCAB: conv+ReLU -> conv -> channel attention -> + residual ----
    @pl.when(b < n_blocks)
    def _rcab():
        h1 = conv3x3(res_ref, w1_ref[0], b1_ref[0], relu=True)      # (C, npix)
        h1_ref[:, q_lo:q_lo + npix] = h1
        h2 = conv3x3(h1_ref, w2_ref[0], b2_ref[0], relu=False)      # (C, npix)

        # Channel attention. Pad columns are zero, so the full-window sum is
        # exactly the interior sum.
        pooled = jnp.sum(h2, axis=1, keepdims=True) * (1.0 / (H * W))   # (C, 1)
        z = jnp.maximum(
            jnp.dot(caw1_ref[0], pooled, preferred_element_type=jnp.float32)
            + cab1_ref[0], 0.0)                                          # (Cr, 1)
        s = jax.nn.sigmoid(
            jnp.dot(caw2_ref[0], z, preferred_element_type=jnp.float32)
            + cab2_ref[0])                                               # (C, 1)

        res_ref[:, q_lo:q_lo + npix] = h2 * s + res_ref[:, q_lo:q_lo + npix]

    # ---- tail conv + group skip, write the output once ----
    @pl.when(b == n_blocks)
    def _tail():
        t = conv3x3(res_ref, w1_ref[0], b1_ref[0], relu=False)       # tail conv
        o_ref[...] = jnp.zeros_like(o_ref)          # deterministic guard lanes
        o_ref[0, :, q_lo:q_lo + npix] = (
            t + x_ref[0, :, q_lo:q_lo + npix]).astype(o_ref.dtype)


# ----------------------------------------------------------------------------
# Wrapper: layout plumbing + single pallas_call for the whole group.
# ----------------------------------------------------------------------------
def residual_group(x, params):
    """x: NHWC (N, H, W, C) f32."""
    N, H, W, C = x.shape
    blocks = params["blocks"]
    B = len(blocks)
    Cr = blocks[0]["ca_w1"].shape[-1]
    Hp, Wp = H + 2, W + 2
    L = Hp * Wp
    npix = H * Wp
    K9 = 9 * C

    # Lane layout: computed window starts 128-aligned; buffer lanes are a
    # multiple of 128.  off >= 1 guard lane below flat index 0 is required.
    off = (-Wp) % 128
    if off == 0:
        off = 128
    q_lo = off + Wp
    Lp = -(-(off + L + 1) // 128) * 128

    # Padded-flat transposed input: (N, C, Lp), channels on sublanes.
    xp = jnp.pad(x, ((0, 0), (1, 1), (1, 1), (0, 0)))                 # (N,Hp,Wp,C)
    xt = jnp.transpose(xp, (0, 3, 1, 2)).reshape(N, C, L)
    xflat = jnp.pad(xt, ((0, 0), (0, 0), (off, Lp - off - L)))        # (N,C,Lp)

    # Interior-column mask over the computed window (1, npix).
    colid = jnp.arange(npix, dtype=jnp.int32) % Wp
    maskT = ((colid != 0) & (colid != Wp - 1)).astype(jnp.float32)[None, :]

    # Conv weights -> (Cout, 9*Cin), matmul-ready, pre-cast to bf16.
    def conv_w_t(w):
        return (w.reshape(9, C, C).transpose(2, 0, 1)
                .reshape(C, K9).astype(jnp.bfloat16))

    w1s = jnp.stack([conv_w_t(p["w1"]) for p in blocks]
                    + [conv_w_t(params["tail_w"])])                   # (B+1, C, 9C)
    b1s = jnp.stack([p["b1"].reshape(C, 1) for p in blocks]
                    + [params["tail_b"].reshape(C, 1)])               # (B+1, C, 1)
    w2s = jnp.stack([conv_w_t(p["w2"]) for p in blocks])              # (B, C, 9C)
    b2s = jnp.stack([p["b2"].reshape(C, 1) for p in blocks])
    caw1s = jnp.stack([p["ca_w1"].T for p in blocks])                 # (B, Cr, C)
    cab1s = jnp.stack([p["ca_b1"].reshape(Cr, 1) for p in blocks])
    caw2s = jnp.stack([p["ca_w2"].T for p in blocks])                 # (B, C, Cr)
    cab2s = jnp.stack([p["ca_b2"].reshape(C, 1) for p in blocks])

    kernel = functools.partial(_group_kernel, H=H, W=W, q_lo=q_lo, n_blocks=B)

    img = lambda n, b: (n, 0, 0)
    blk = lambda n, b: (b, 0, 0)
    # Clamp at the tail step: same block index as the previous step, so the
    # pipeline skips the (useless) re-fetch and no zero blocks are stacked.
    clamped = lambda n, b: (jnp.minimum(b, B - 1), 0, 0)

    # VMEM budget (resident scratch + double-buffered blocks + matmul temps).
    npix_pad = -(-npix // 128) * 128
    vmem_bytes = (2 * C * Lp * 4            # res / h1 scratch
                  + 4 * C * Lp * 4          # x, o blocks (double-buffered)
                  + 4 * C * K9 * 2          # w1/w2 blocks (double-buffered, bf16)
                  + 2 * K9 * npix_pad * 2   # im2col temps (bf16)
                  + 8 * C * npix_pad * 4    # conv outputs / misc f32 temps
                  + (2 << 20))              # compiler headroom
    vmem_limit = int(min(max(vmem_bytes, 16 << 20), 64 << 20))

    out_flat = pl.pallas_call(
        kernel,
        out_shape=jax.ShapeDtypeStruct((N, C, Lp), x.dtype),
        grid=(N, B + 1),
        in_specs=[
            pl.BlockSpec((1, npix), lambda n, b: (0, 0)),
            pl.BlockSpec((1, C, Lp), img),
            pl.BlockSpec((1, C, K9), blk),
            pl.BlockSpec((1, C, 1), blk),
            pl.BlockSpec((1, C, K9), clamped),
            pl.BlockSpec((1, C, 1), clamped),
            pl.BlockSpec((1, Cr, C), clamped),
            pl.BlockSpec((1, Cr, 1), clamped),
            pl.BlockSpec((1, C, Cr), clamped),
            pl.BlockSpec((1, C, 1), clamped),
        ],
        out_specs=pl.BlockSpec((1, C, Lp), img),
        scratch_shapes=[pltpu.VMEM((C, Lp), jnp.float32),
                        pltpu.VMEM((C, Lp), jnp.float32)],
        compiler_params=pltpu.CompilerParams(
            dimension_semantics=("parallel", "arbitrary"),
            vmem_limit_bytes=vmem_limit),
    )(maskT, xflat, w1s, b1s, w2s, b2s, caw1s, cab1s, caw2s, cab2s)

    # Strip guards + halo back to NHWC.
    out = out_flat[:, :, off:off + L].reshape(N, C, Hp, Wp)[:, :, 1:-1, 1:-1]
    return jnp.transpose(out, (0, 2, 3, 1))


# ----------------------------------------------------------------------------
# Pure-JAX f32 reference (correctness check).
# ----------------------------------------------------------------------------
def _ref_conv3x3(x, w, b, relu=False):
    out = lax.conv_general_dilated(
        x, w, window_strides=(1, 1), padding="SAME",
        dimension_numbers=("NHWC", "HWIO", "NHWC"))
    out = out + b.reshape(1, 1, 1, -1)
    return jnp.maximum(out, 0.0) if relu else out


def _ref_residual_group(x, params):
    res = x
    for p in params["blocks"]:
        h = _ref_conv3x3(res, p["w1"], p["b1"], relu=True)
        h = _ref_conv3x3(h, p["w2"], p["b2"], relu=False)
        pooled = jnp.mean(h, axis=(1, 2))                              # (N, C)
        z = jnp.maximum(pooled @ p["ca_w1"] + p["ca_b1"], 0.0)
        s = jax.nn.sigmoid(z @ p["ca_w2"] + p["ca_b2"])                # (N, C)
        res = h * s[:, None, None, :] + res
    res = _ref_conv3x3(res, params["tail_w"], params["tail_b"], relu=False)
    return res + x


# ----------------------------------------------------------------------------
# Deterministic parameter init + driver.
# ----------------------------------------------------------------------------
def init_params(key, n_feat, reduction, n_resblocks):
    cr = n_feat // reduction
    blocks = []
    for _ in range(n_resblocks):
        keys = jax.random.split(key, 9)
        key = keys[0]
        blocks.append(dict(
            w1=jax.random.normal(keys[1], (3, 3, n_feat, n_feat), jnp.float32) * 0.05,
            b1=jax.random.normal(keys[2], (n_feat,), jnp.float32) * 0.05,
            w2=jax.random.normal(keys[3], (3, 3, n_feat, n_feat), jnp.float32) * 0.05,
            b2=jax.random.normal(keys[4], (n_feat,), jnp.float32) * 0.05,
            ca_w1=jax.random.normal(keys[5], (n_feat, cr), jnp.float32) * 0.05,
            ca_b1=jax.random.normal(keys[6], (cr,), jnp.float32) * 0.05,
            ca_w2=jax.random.normal(keys[7], (cr, n_feat), jnp.float32) * 0.05,
            ca_b2=jax.random.normal(keys[8], (n_feat,), jnp.float32) * 0.05,
        ))
    k1, k2, _ = jax.random.split(key, 3)
    return dict(
        blocks=blocks,
        tail_w=jax.random.normal(k1, (3, 3, n_feat, n_feat), jnp.float32) * 0.05,
        tail_b=jax.random.normal(k2, (n_feat,), jnp.float32) * 0.05,
    )


if __name__ == "__main__":
    N, H, W = 2, 16, 16
    n_feat, reduction, n_resblocks = 32, 8, 4

    root = jax.random.PRNGKey(0)
    kd, kp = jax.random.split(root)
    x = jax.random.normal(kd, (N, H, W, n_feat), jnp.float32)
    params = init_params(kp, n_feat, reduction, n_resblocks)

    out = jax.jit(residual_group)(x, params)
    out = jax.block_until_ready(out)

    ref = _ref_residual_group(x, params)
    assert out.shape == (N, H, W, n_feat)
    # bf16 MXU operands (f32 accumulation) vs. f32 XLA reference:
    # expected normalized max error ~1e-3; assert a comfortable 3e-2 bound.
    err = float(jnp.max(jnp.abs(out - ref)))
    scale = float(jnp.max(jnp.abs(ref))) + 1e-6
    assert err / scale < 3e-2, f"mismatch vs JAX reference: err={err}, scale={scale}"

    print("KERNEL_OK")
</pallas_src>

<mosaic_0001>
module attributes {stable_mosaic.version = 11 : i64} {
  func.func @_group_kernel(%arg0: i32, %arg1: i32, %arg2: memref<1x288xf32, #tpu.memory_space<vmem>>, %arg3: memref<1x32x512xf32, #tpu.memory_space<vmem>>, %arg4: memref<1x32x288xbf16, #tpu.memory_space<vmem>>, %arg5: memref<1x32x1xf32, #tpu.memory_space<vmem>>, %arg6: memref<1x32x288xbf16, #tpu.memory_space<vmem>>, %arg7: memref<1x32x1xf32, #tpu.memory_space<vmem>>, %arg8: memref<1x4x32xf32, #tpu.memory_space<vmem>>, %arg9: memref<1x4x1xf32, #tpu.memory_space<vmem>>, %arg10: memref<1x32x4xf32, #tpu.memory_space<vmem>>, %arg11: memref<1x32x1xf32, #tpu.memory_space<vmem>>, %arg12: memref<1x32x512xf32, #tpu.memory_space<vmem>>, %arg13: memref<32x512xf32, #tpu.memory_space<vmem>>, %arg14: memref<32x512xf32, #tpu.memory_space<vmem>>) attributes {dimension_semantics = [#tpu.dimension_semantics<parallel>, #tpu.dimension_semantics<arbitrary>], iteration_bounds = array<i64: 2, 5>, scalar_prefetch = 0 : i64, scratch_operands = 2 : i64, tpu.core_type = #tpu.core_type<tc>, window_params = [{pipeline_mode = #tpu.pipeline_mode<synchronous>, transform_indices = @transform_0, window_bounds = array<i64: 1, 288>}, {transform_indices = @transform_1, window_bounds = array<i64: 1, 32, 512>}, {transform_indices = @transform_2, window_bounds = array<i64: 1, 32, 288>}, {transform_indices = @transform_3, window_bounds = array<i64: 1, 32, 1>}, {transform_indices = @transform_4, window_bounds = array<i64: 1, 32, 288>}, {transform_indices = @transform_5, window_bounds = array<i64: 1, 32, 1>}, {transform_indices = @transform_6, window_bounds = array<i64: 1, 4, 32>}, {transform_indices = @transform_7, window_bounds = array<i64: 1, 4, 1>}, {transform_indices = @transform_8, window_bounds = array<i64: 1, 32, 4>}, {transform_indices = @transform_9, window_bounds = array<i64: 1, 32, 1>}, {transform_indices = @transform_10, window_bounds = array<i64: 1, 32, 512>}]} {
    %c0 = arith.constant 0 : index
    %c0_0 = arith.constant 0 : index
    %0 = vector.load %arg2[%c0, %c0_0] : memref<1x288xf32, #tpu.memory_space<vmem>>, vector<1x288xf32>
    %c0_i32 = arith.constant 0 : i32
    %1 = arith.cmpi eq, %arg1, %c0_i32 : i32
    %2 = arith.extui %1 : i1 to i32
    %c0_i32_1 = arith.constant 0 : i32
    %3 = arith.cmpi ne, %2, %c0_i32_1 : i32
    scf.if %3 {
      %c0_5 = arith.constant 0 : index
      %c0_6 = arith.constant 0 : index
      %c0_7 = arith.constant 0 : index
      %10 = vector.load %arg3[%c0_5, %c0_6, %c0_7] : memref<1x32x512xf32, #tpu.memory_space<vmem>>, vector<1x32x512xf32>
      %11 = vector.shape_cast %10 : vector<1x32x512xf32> to vector<32x512xf32>
      %c0_8 = arith.constant 0 : index
      %c0_9 = arith.constant 0 : index
      %12 = vector.load %arg13[%c0_8, %c0_9] : memref<32x512xf32, #tpu.memory_space<vmem>>, vector<32x512xf32>
      tpu.vector_store %arg13[%c0_8, %c0_9], %11 {strides = array<i32>} : memref<32x512xf32, #tpu.memory_space<vmem>>, vector<32x512xf32>,
      %cst = arith.constant 0.000000e+00 : f32
      %13 = vector.broadcast %cst : f32 to vector<32x512xf32>
      %c0_10 = arith.constant 0 : index
      %c0_11 = arith.constant 0 : index
      %14 = vector.load %arg14[%c0_10, %c0_11] : memref<32x512xf32, #tpu.memory_space<vmem>>, vector<32x512xf32>
      tpu.vector_store %arg14[%c0_10, %c0_11], %13 {strides = array<i32>} : memref<32x512xf32, #tpu.memory_space<vmem>>, vector<32x512xf32>,
    } else {
    }
    %c4_i32 = arith.constant 4 : i32
    %4 = arith.cmpi slt, %arg1, %c4_i32 : i32
    %5 = arith.extui %4 : i1 to i32
    %c0_i32_2 = arith.constant 0 : i32
    %6 = arith.cmpi ne, %5, %c0_i32_2 : i32
    scf.if %6 {
      %c0_5 = arith.constant 0 : index
      %c0_6 = arith.constant 0 : index
      %c0_7 = arith.constant 0 : index
      %10 = vector.load %arg4[%c0_5, %c0_6, %c0_7] : memref<1x32x288xbf16, #tpu.memory_space<vmem>>, vector<1x32x288xbf16>
      %11 = vector.shape_cast %10 : vector<1x32x288xbf16> to vector<32x288xbf16>
      %c0_8 = arith.constant 0 : index
      %c0_9 = arith.constant 0 : index
      %c0_10 = arith.constant 0 : index
      %12 = vector.load %arg5[%c0_8, %c0_9, %c0_10] : memref<1x32x1xf32, #tpu.memory_space<vmem>>, vector<1x32x1xf32>
      %13 = vector.shape_cast %12 : vector<1x32x1xf32> to vector<32x1xf32>
      %c0_11 = arith.constant 0 : index
      %c0_12 = arith.constant 0 : index
      %14 = vector.load %arg13[%c0_11, %c0_12] : memref<32x512xf32, #tpu.memory_space<vmem>>, vector<32x512xf32>
      %15 = arith.truncf %14 : vector<32x512xf32> to vector<32x512xbf16>
      %16 = vector.extract_strided_slice %15 {offsets = [0, 109], sizes = [32, 288], strides = [1, 1]} : vector<32x512xbf16> to vector<32x288xbf16>
      %17 = vector.extract_strided_slice %15 {offsets = [0, 110], sizes = [32, 288], strides = [1, 1]} : vector<32x512xbf16> to vector<32x288xbf16>
      %18 = vector.extract_strided_slice %15 {offsets = [0, 111], sizes = [32, 288], strides = [1, 1]} : vector<32x512xbf16> to vector<32x288xbf16>
      %19 = vector.extract_strided_slice %15 {offsets = [0, 127], sizes = [32, 288], strides = [1, 1]} : vector<32x512xbf16> to vector<32x288xbf16>
      %20 = vector.extract_strided_slice %15 {offsets = [0, 128], sizes = [32, 288], strides = [1, 1]} : vector<32x512xbf16> to vector<32x288xbf16>
      %21 = vector.extract_strided_slice %15 {offsets = [0, 129], sizes = [32, 288], strides = [1, 1]} : vector<32x512xbf16> to vector<32x288xbf16>
      %22 = vector.extract_strided_slice %15 {offsets = [0, 145], sizes = [32, 288], strides = [1, 1]} : vector<32x512xbf16> to vector<32x288xbf16>
      %23 = vector.extract_strided_slice %15 {offsets = [0, 146], sizes = [32, 288], strides = [1, 1]} : vector<32x512xbf16> to vector<32x288xbf16>
      %24 = vector.extract_strided_slice %15 {offsets = [0, 147], sizes = [32, 288], strides = [1, 1]} : vector<32x512xbf16> to vector<32x288xbf16>
      %25 = tpu.concatenate %16, %17, %18, %19, %20, %21, %22, %23, %24 in 0 : vector<32x288xbf16>, vector<32x288xbf16>, vector<32x288xbf16>, vector<32x288xbf16>, vector<32x288xbf16>, vector<32x288xbf16>, vector<32x288xbf16>, vector<32x288xbf16>, vector<32x288xbf16> -> vector<288x288xbf16>
      %cst = arith.constant dense<0.000000e+00> : vector<32x288xf32>
      %26 = tpu.matmul %11, %25, %cst {dimension_numbers = #tpu.dot_dimension_numbers<[1], [0], [0], [1], [0, 0, 1, 1], [], []>} : vector<32x288xbf16>, vector<288x288xbf16>, vector<32x288xf32> -> vector<32x288xf32>
      %27 = vector.broadcast %13 : vector<32x1xf32> to vector<32x288xf32>
      %28 = arith.addf %26, %27 : vector<32x288xf32>
      %cst_13 = arith.constant 0.000000e+00 : f32
      %29 = vector.broadcast %cst_13 : f32 to vector<32x288xf32>
      %30 = arith.maximumf %28, %29 : vector<32x288xf32>
      %31 = vector.broadcast %0 : vector<1x288xf32> to vector<32x288xf32>
      %32 = arith.mulf %30, %31 : vector<32x288xf32>
      %c0_14 = arith.constant 0 : index
      %c128 = arith.constant 128 : index
      %33 = vector.load %arg14[%c0_14, %c128] : memref<32x512xf32, #tpu.memory_space<vmem>>, vector<32x288xf32>
      tpu.vector_store %arg14[%c0_14, %c128], %32 {strides = array<i32>} : memref<32x512xf32, #tpu.memory_space<vmem>>, vector<32x288xf32>,
      %c0_15 = arith.constant 0 : index
      %c0_16 = arith.constant 0 : index
      %c0_17 = arith.constant 0 : index
      %34 = vector.load %arg6[%c0_15, %c0_16, %c0_17] : memref<1x32x288xbf16, #tpu.memory_space<vmem>>, vector<1x32x288xbf16>
      %35 = vector.shape_cast %34 : vector<1x32x288xbf16> to vector<32x288xbf16>
      %c0_18 = arith.constant 0 : index
      %c0_19 = arith.constant 0 : index
      %c0_20 = arith.constant 0 : index
      %36 = vector.load %arg7[%c0_18, %c0_19, %c0_20] : memref<1x32x1xf32, #tpu.memory_space<vmem>>, vector<1x32x1xf32>
      %37 = vector.shape_cast %36 : vector<1x32x1xf32> to vector<32x1xf32>
      %c0_21 = arith.constant 0 : index
      %c0_22 = arith.constant 0 : index
      %38 = vector.load %arg14[%c0_21, %c0_22] : memref<32x512xf32, #tpu.memory_space<vmem>>, vector<32x512xf32>
      %39 = arith.truncf %38 : vector<32x512xf32> to vector<32x512xbf16>
      %40 = vector.extract_strided_slice %39 {offsets = [0, 109], sizes = [32, 288], strides = [1, 1]} : vector<32x512xbf16> to vector<32x288xbf16>
      %41 = vector.extract_strided_slice %39 {offsets = [0, 110], sizes = [32, 288], strides = [1, 1]} : vector<32x512xbf16> to vector<32x288xbf16>
      %42 = vector.extract_strided_slice %39 {offsets = [0, 111], sizes = [32, 288], strides = [1, 1]} : vector<32x512xbf16> to vector<32x288xbf16>
      %43 = vector.extract_strided_slice %39 {offsets = [0, 127], sizes = [32, 288], strides = [1, 1]} : vector<32x512xbf16> to vector<32x288xbf16>
      %44 = vector.extract_strided_slice %39 {offsets = [0, 128], sizes = [32, 288], strides = [1, 1]} : vector<32x512xbf16> to vector<32x288xbf16>
      %45 = vector.extract_strided_slice %39 {offsets = [0, 129], sizes = [32, 288], strides = [1, 1]} : vector<32x512xbf16> to vector<32x288xbf16>
      %46 = vector.extract_strided_slice %39 {offsets = [0, 145], sizes = [32, 288], strides = [1, 1]} : vector<32x512xbf16> to vector<32x288xbf16>
      %47 = vector.extract_strided_slice %39 {offsets = [0, 146], sizes = [32, 288], strides = [1, 1]} : vector<32x512xbf16> to vector<32x288xbf16>
      %48 = vector.extract_strided_slice %39 {offsets = [0, 147], sizes = [32, 288], strides = [1, 1]} : vector<32x512xbf16> to vector<32x288xbf16>
      %49 = tpu.concatenate %40, %41, %42, %43, %44, %45, %46, %47, %48 in 0 : vector<32x288xbf16>, vector<32x288xbf16>, vector<32x288xbf16>, vector<32x288xbf16>, vector<32x288xbf16>, vector<32x288xbf16>, vector<32x288xbf16>, vector<32x288xbf16>, vector<32x288xbf16> -> vector<288x288xbf16>
      %cst_23 = arith.constant dense<0.000000e+00> : vector<32x288xf32>
      %50 = tpu.matmul %35, %49, %cst_23 {dimension_numbers = #tpu.dot_dimension_numbers<[1], [0], [0], [1], [0, 0, 1, 1], [], []>} : vector<32x288xbf16>, vector<288x288xbf16>, vector<32x288xf32> -> vector<32x288xf32>
      %51 = vector.broadcast %37 : vector<32x1xf32> to vector<32x288xf32>
      %52 = arith.addf %50, %51 : vector<32x288xf32>
      %53 = vector.broadcast %0 : vector<1x288xf32> to vector<32x288xf32>
      %54 = arith.mulf %52, %53 : vector<32x288xf32>
      %cst_24 = arith.constant dense<0.000000e+00> : vector<32xf32>
      %55 = vector.multi_reduction <add>, %54, %cst_24 [1] : vector<32x288xf32> to vector<32xf32>
      %56 = vector.shape_cast %55 : vector<32xf32> to vector<32x1xf32>
      %cst_25 = arith.constant 3.906250e-03 : f32
      %57 = vector.broadcast %cst_25 : f32 to vector<32x1xf32>
      %58 = arith.mulf %56, %57 : vector<32x1xf32>
      %c0_26 = arith.constant 0 : index
      %c0_27 = arith.constant 0 : index
      %c0_28 = arith.constant 0 : index
      %59 = vector.load %arg8[%c0_26, %c0_27, %c0_28] : memref<1x4x32xf32, #tpu.memory_space<vmem>>, vector<1x4x32xf32>
      %60 = vector.shape_cast %59 : vector<1x4x32xf32> to vector<4x32xf32>
      %cst_29 = arith.constant dense<0.000000e+00> : vector<4x1xf32>
      %61 = tpu.matmul %60, %58, %cst_29 {dimension_numbers = #tpu.dot_dimension_numbers<[1], [0], [0], [1], [0, 0, 1, 1], [], []>} : vector<4x32xf32>, vector<32x1xf32>, vector<4x1xf32> -> vector<4x1xf32>
      %c0_30 = arith.constant 0 : index
      %c0_31 = arith.constant 0 : index
      %c0_32 = arith.constant 0 : index
      %62 = vector.load %arg9[%c0_30, %c0_31, %c0_32] : memref<1x4x1xf32, #tpu.memory_space<vmem>>, vector<1x4x1xf32>
      %63 = vector.shape_cast %62 : vector<1x4x1xf32> to vector<4x1xf32>
      %64 = arith.addf %61, %63 : vector<4x1xf32>
      %cst_33 = arith.constant 0.000000e+00 : f32
      %65 = vector.broadcast %cst_33 : f32 to vector<4x1xf32>
      %66 = arith.maximumf %64, %65 : vector<4x1xf32>
      %c0_34 = arith.constant 0 : index
      %c0_35 = arith.constant 0 : index
      %c0_36 = arith.constant 0 : index
      %67 = vector.load %arg10[%c0_34, %c0_35, %c0_36] : memref<1x32x4xf32, #tpu.memory_space<vmem>>, vector<1x32x4xf32>
      %68 = vector.shape_cast %67 : vector<1x32x4xf32> to vector<32x4xf32>
      %cst_37 = arith.constant dense<0.000000e+00> : vector<32x1xf32>
      %69 = tpu.matmul %68, %66, %cst_37 {dimension_numbers = #tpu.dot_dimension_numbers<[1], [0], [0], [1], [0, 0, 1, 1], [], []>} : vector<32x4xf32>, vector<4x1xf32>, vector<32x1xf32> -> vector<32x1xf32>
      %c0_38 = arith.constant 0 : index
      %c0_39 = arith.constant 0 : index
      %c0_40 = arith.constant 0 : index
      %70 = vector.load %arg11[%c0_38, %c0_39, %c0_40] : memref<1x32x1xf32, #tpu.memory_space<vmem>>, vector<1x32x1xf32>
      %71 = vector.shape_cast %70 : vector<1x32x1xf32> to vector<32x1xf32>
      %72 = arith.addf %69, %71 : vector<32x1xf32>
      %73 = arith.negf %72 : vector<32x1xf32>
      %74 = math.exp %73 : vector<32x1xf32>
      %cst_41 = arith.constant 1.000000e+00 : f32
      %75 = vector.broadcast %cst_41 : f32 to vector<32x1xf32>
      %76 = arith.addf %75, %74 : vector<32x1xf32>
      %77 = arith.divf %75, %76 : vector<32x1xf32>
      %78 = vector.broadcast %77 : vector<32x1xf32> to vector<32x288xf32>
      %79 = arith.mulf %54, %78 : vector<32x288xf32>
      %c0_42 = arith.constant 0 : index
      %c128_43 = arith.constant 128 : index
      %80 = vector.load %arg13[%c0_42, %c128_43] : memref<32x512xf32, #tpu.memory_space<vmem>>, vector<32x288xf32>
      %81 = arith.addf %79, %80 : vector<32x288xf32>
      %c0_44 = arith.constant 0 : index
      %c128_45 = arith.constant 128 : index
      %82 = vector.load %arg13[%c0_44, %c128_45] : memref<32x512xf32, #tpu.memory_space<vmem>>, vector<32x288xf32>
      tpu.vector_store %arg13[%c0_44, %c128_45], %81 {strides = array<i32>} : memref<32x512xf32, #tpu.memory_space<vmem>>, vector<32x288xf32>,
    } else {
    }
    %c4_i32_3 = arith.constant 4 : i32
    %7 = arith.cmpi eq, %arg1, %c4_i32_3 : i32
    %8 = arith.extui %7 : i1 to i32
    %c0_i32_4 = arith.constant 0 : i32
    %9 = arith.cmpi ne, %8, %c0_i32_4 : i32
    scf.if %9 {
      %c0_5 = arith.constant 0 : index
      %c0_6 = arith.constant 0 : index
      %c0_7 = arith.constant 0 : index
      %10 = vector.load %arg4[%c0_5, %c0_6, %c0_7] : memref<1x32x288xbf16, #tpu.memory_space<vmem>>, vector<1x32x288xbf16>
      %11 = vector.shape_cast %10 : vector<1x32x288xbf16> to vector<32x288xbf16>
      %c0_8 = arith.constant 0 : index
      %c0_9 = arith.constant 0 : index
      %c0_10 = arith.constant 0 : index
      %12 = vector.load %arg5[%c0_8, %c0_9, %c0_10] : memref<1x32x1xf32, #tpu.memory_space<vmem>>, vector<1x32x1xf32>
      %13 = vector.shape_cast %12 : vector<1x32x1xf32> to vector<32x1xf32>
      %c0_11 = arith.constant 0 : index
      %c0_12 = arith.constant 0 : index
      %14 = vector.load %arg13[%c0_11, %c0_12] : memref<32x512xf32, #tpu.memory_space<vmem>>, vector<32x512xf32>
      %15 = arith.truncf %14 : vector<32x512xf32> to vector<32x512xbf16>
      %16 = vector.extract_strided_slice %15 {offsets = [0, 109], sizes = [32, 288], strides = [1, 1]} : vector<32x512xbf16> to vector<32x288xbf16>
      %17 = vector.extract_strided_slice %15 {offsets = [0, 110], sizes = [32, 288], strides = [1, 1]} : vector<32x512xbf16> to vector<32x288xbf16>
      %18 = vector.extract_strided_slice %15 {offsets = [0, 111], sizes = [32, 288], strides = [1, 1]} : vector<32x512xbf16> to vector<32x288xbf16>
      %19 = vector.extract_strided_slice %15 {offsets = [0, 127], sizes = [32, 288], strides = [1, 1]} : vector<32x512xbf16> to vector<32x288xbf16>
      %20 = vector.extract_strided_slice %15 {offsets = [0, 128], sizes = [32, 288], strides = [1, 1]} : vector<32x512xbf16> to vector<32x288xbf16>
      %21 = vector.extract_strided_slice %15 {offsets = [0, 129], sizes = [32, 288], strides = [1, 1]} : vector<32x512xbf16> to vector<32x288xbf16>
      %22 = vector.extract_strided_slice %15 {offsets = [0, 145], sizes = [32, 288], strides = [1, 1]} : vector<32x512xbf16> to vector<32x288xbf16>
      %23 = vector.extract_strided_slice %15 {offsets = [0, 146], sizes = [32, 288], strides = [1, 1]} : vector<32x512xbf16> to vector<32x288xbf16>
      %24 = vector.extract_strided_slice %15 {offsets = [0, 147], sizes = [32, 288], strides = [1, 1]} : vector<32x512xbf16> to vector<32x288xbf16>
      %25 = tpu.concatenate %16, %17, %18, %19, %20, %21, %22, %23, %24 in 0 : vector<32x288xbf16>, vector<32x288xbf16>, vector<32x288xbf16>, vector<32x288xbf16>, vector<32x288xbf16>, vector<32x288xbf16>, vector<32x288xbf16>, vector<32x288xbf16>, vector<32x288xbf16> -> vector<288x288xbf16>
      %cst = arith.constant dense<0.000000e+00> : vector<32x288xf32>
      %26 = tpu.matmul %11, %25, %cst {dimension_numbers = #tpu.dot_dimension_numbers<[1], [0], [0], [1], [0, 0, 1, 1], [], []>} : vector<32x288xbf16>, vector<288x288xbf16>, vector<32x288xf32> -> vector<32x288xf32>
      %27 = vector.broadcast %13 : vector<32x1xf32> to vector<32x288xf32>
      %28 = arith.addf %26, %27 : vector<32x288xf32>
      %29 = vector.broadcast %0 : vector<1x288xf32> to vector<32x288xf32>
      %30 = arith.mulf %28, %29 : vector<32x288xf32>
      %cst_13 = arith.constant 0.000000e+00 : f32
      %31 = vector.broadcast %cst_13 : f32 to vector<1x32x512xf32>
      %c0_14 = arith.constant 0 : index
      %c0_15 = arith.constant 0 : index
      %c0_16 = arith.constant 0 : index
      %32 = vector.load %arg12[%c0_14, %c0_15, %c0_16] : memref<1x32x512xf32, #tpu.memory_space<vmem>>, vector<1x32x512xf32>
      tpu.vector_store %arg12[%c0_14, %c0_15, %c0_16], %31 {strides = array<i32>} : memref<1x32x512xf32, #tpu.memory_space<vmem>>, vector<1x32x512xf32>,
      %c0_17 = arith.constant 0 : index
      %c0_18 = arith.constant 0 : index
      %c128 = arith.constant 128 : index
      %33 = vector.load %arg3[%c0_17, %c0_18, %c128] : memref<1x32x512xf32, #tpu.memory_space<vmem>>, vector<1x32x288xf32>
      %34 = vector.shape_cast %33 : vector<1x32x288xf32> to vector<32x288xf32>
      %35 = arith.addf %30, %34 : vector<32x288xf32>
      %c0_19 = arith.constant 0 : index
      %c0_20 = arith.constant 0 : index
      %c128_21 = arith.constant 128 : index
      %36 = vector.load %arg12[%c0_19, %c0_20, %c128_21] : memref<1x32x512xf32, #tpu.memory_space<vmem>>, vector<1x32x288xf32>
      %37 = vector.shape_cast %36 : vector<1x32x288xf32> to vector<32x288xf32>
      %38 = vector.shape_cast %35 : vector<32x288xf32> to vector<1x32x288xf32>
      tpu.vector_store %arg12[%c0_19, %c0_20, %c128_21], %38 {strides = array<i32>} : memref<1x32x512xf32, #tpu.memory_space<vmem>>, vector<1x32x288xf32>,
    } else {
    }
    return
  }
  func.func @transform_0(%arg0: i32, %arg1: i32) -> (i32, i32) {
    %c0_i32 = arith.constant 0 : i32
    %c0_i32_0 = arith.constant 0 : i32
    %c0_i32_1 = arith.constant 0 : i32
    return %c0_i32, %c0_i32_0 : i32, i32
  }
  func.func @transform_1(%arg0: i32, %arg1: i32) -> (i32, i32, i32) {
    %c0_i32 = arith.constant 0 : i32
    %c0_i32_0 = arith.constant 0 : i32
    %c0_i32_1 = arith.constant 0 : i32
    return %arg0, %c0_i32, %c0_i32_0 : i32, i32, i32
  }
  func.func @transform_2(%arg0: i32, %arg1: i32) -> (i32, i32, i32) {
    %c0_i32 = arith.constant 0 : i32
    %c0_i32_0 = arith.constant 0 : i32
    %c0_i32_1 = arith.constant 0 : i32
    return %arg1, %c0_i32, %c0_i32_0 : i32, i32, i32
  }
  func.func @transform_3(%arg0: i32, %arg1: i32) -> (i32, i32, i32) {
    %c0_i32 = arith.constant 0 : i32
    %c0_i32_0 = arith.constant 0 : i32
    %c0_i32_1 = arith.constant 0 : i32
    return %arg1, %c0_i32, %c0_i32_0 : i32, i32, i32
  }
  func.func @transform_4(%arg0: i32, %arg1: i32) -> (i32, i32, i32) {
    %c3_i32 = arith.constant 3 : i32
    %0 = arith.minsi %arg1, %c3_i32 : i32
    %c0_i32 = arith.constant 0 : i32
    %c0_i32_0 = arith.constant 0 : i32
    %c0_i32_1 = arith.constant 0 : i32
    return %0, %c0_i32, %c0_i32_0 : i32, i32, i32
  }
  func.func @transform_5(%arg0: i32, %arg1: i32) -> (i32, i32, i32) {
    %c3_i32 = arith.constant 3 : i32
    %0 = arith.minsi %arg1, %c3_i32 : i32
    %c0_i32 = arith.constant 0 : i32
    %c0_i32_0 = arith.constant 0 : i32
    %c0_i32_1 = arith.constant 0 : i32
    return %0, %c0_i32, %c0_i32_0 : i32, i32, i32
  }
  func.func @transform_6(%arg0: i32, %arg1: i32) -> (i32, i32, i32) {
    %c3_i32 = arith.constant 3 : i32
    %0 = arith.minsi %arg1, %c3_i32 : i32
    %c0_i32 = arith.constant 0 : i32
    %c0_i32_0 = arith.constant 0 : i32
    %c0_i32_1 = arith.constant 0 : i32
    return %0, %c0_i32, %c0_i32_0 : i32, i32, i32
  }
  func.func @transform_7(%arg0: i32, %arg1: i32) -> (i32, i32, i32) {
    %c3_i32 = arith.constant 3 : i32
    %0 = arith.minsi %arg1, %c3_i32 : i32
    %c0_i32 = arith.constant 0 : i32
    %c0_i32_0 = arith.constant 0 : i32
    %c0_i32_1 = arith.constant 0 : i32
    return %0, %c0_i32, %c0_i32_0 : i32, i32, i32
  }
  func.func @transform_8(%arg0: i32, %arg1: i32) -> (i32, i32, i32) {
    %c3_i32 = arith.constant 3 : i32
    %0 = arith.minsi %arg1, %c3_i32 : i32
    %c0_i32 = arith.constant 0 : i32
    %c0_i32_0 = arith.constant 0 : i32
    %c0_i32_1 = arith.constant 0 : i32
    return %0, %c0_i32, %c0_i32_0 : i32, i32, i32
  }
  func.func @transform_9(%arg0: i32, %arg1: i32) -> (i32, i32, i32) {
    %c3_i32 = arith.constant 3 : i32
    %0 = arith.minsi %arg1, %c3_i32 : i32
    %c0_i32 = arith.constant 0 : i32
    %c0_i32_0 = arith.constant 0 : i32
    %c0_i32_1 = arith.constant 0 : i32
    return %0, %c0_i32, %c0_i32_0 : i32, i32, i32
  }
  func.func @transform_10(%arg0: i32, %arg1: i32) -> (i32, i32, i32) {
    %c0_i32 = arith.constant 0 : i32
    %c0_i32_0 = arith.constant 0 : i32
    %c0_i32_1 = arith.constant 0 : i32
    return %arg0, %c0_i32, %c0_i32_0 : i32, i32, i32
  }
}

</mosaic_0001>

<llo_original>
// kernel: residual_group.1
$region0: #{residual_group.1}
  #allocation0 [shape = 'u32[]', space=smem, size = 0x4, offset = 0x4, fixed_abs, tag = 'smem constant byte address 0x4 - core index']
  #allocation1 [shape = 'u32[72,128]{1,0:T(1,128)}', space=vmem, size = 0x9000, scoped, tag = 'internal scratch']
  #allocation2 [shape = 'f32[32,512]{1,0:T(8,128)}', space=vmem, size = 0x10000, scoped, tag = 'scratch operand']
  #allocation3 [shape = 'f32[32,512]{1,0:T(8,128)}', space=vmem, size = 0x10000, scoped, tag = 'scratch operand']
  %s0 = inlined_call_operand.vmem [shape: f32[1,288], index: 0, kind: input, shape index: {}]
  %s1 = inlined_call_operand.vmem [shape: f32[2,32,512], index: 1, kind: input, shape index: {}]
  %s2 = inlined_call_operand.vmem [shape: bf16[5,32,288], index: 2, kind: input, shape index: {}]
  %s3 = inlined_call_operand.vmem [shape: f32[5,32,1], index: 3, kind: input, shape index: {}]
  %s4 = inlined_call_operand.vmem [shape: bf16[4,32,288], index: 4, kind: input, shape index: {}]
  %s5 = inlined_call_operand.vmem [shape: f32[4,32,1], index: 5, kind: input, shape index: {}]
  %s6 = inlined_call_operand.vmem [shape: f32[4,4,32], index: 6, kind: input, shape index: {}]
  %s7 = inlined_call_operand.vmem [shape: f32[4,4,1], index: 7, kind: input, shape index: {}]
  %s8 = inlined_call_operand.vmem [shape: f32[4,32,4], index: 8, kind: input, shape index: {}]
  %s9 = inlined_call_operand.vmem [shape: f32[4,32,1], index: 9, kind: input, shape index: {}]
  %s10 = inlined_call_operand.vmem [shape: f32[2,32,512], index: 10, kind: output, shape index: {}]
  %s11 = sld [smem:[#allocation0]]
  $region85: #{residual_group.1} parent=0
    _
  %s13 = ssub.s32 1, %s11
  %s14 = scalar_select 0, %s13, %s11
  loop: start=0, step=1, limit=12
  $region2: #{residual_group.1} parent=0 // loop_pre_header
    _
  $region3: #{residual_group.1} parent=0 // loop_header
    %s16 = sphi 0, %s20
    %p17 = scmp.ge.s32.totalorder %s16, 12
    %s23 = sphi 0, %s35
    %s24 = sphi 0, %s31
    %s25 = sphi 0, %s23
    %s26 = sphi 0, %s24
    %s27 = sphi 0, %s25
    %s28 = sphi 0, %s26
    %s36 = sphi 0, %s36
    %s38 = sphi 0, %s36
    %s39 = sphi 0, %s38
    %s53 = sphi 0, %s39
    %s59 = sphi 0, %s61
    %s62 = sphi 0, %s59
    %s63 = sphi 0, %s62
    %s79 = sphi 0, %s63
    %s85 = sphi 0, %s87
    %s88 = sphi 0, %s85
    %s89 = sphi 0, %s88
    %s105 = sphi 0, %s89
    %s111 = sphi 0, %s113
    %s114 = sphi 0, %s111
    %s115 = sphi 0, %s114
    %s131 = sphi 0, %s115
    %s141 = sphi 0, %s143
    %s144 = sphi 0, %s141
    %s145 = sphi 0, %s144
    %s161 = sphi 0, %s145
    %s171 = sphi 0, %s173
    %s174 = sphi 0, %s171
    %s175 = sphi 0, %s174
    %s191 = sphi 0, %s175
    %s201 = sphi 0, %s203
    %s204 = sphi 0, %s201
    %s205 = sphi 0, %s204
    %s221 = sphi 0, %s205
    %s231 = sphi 0, %s233
    %s234 = sphi 0, %s231
    %s235 = sphi 0, %s234
    %s251 = sphi 0, %s235
    %s261 = sphi 0, %s263
    %s264 = sphi 0, %s261
    %s265 = sphi 0, %s264
    %s281 = sphi 0, %s265
    %s291 = sphi 0, %s293
    %s294 = sphi 0, %s291
    %s295 = sphi 0, %s294
    %s311 = sphi 0, %s295
    %s317 = sphi 0, %s319
    %s320 = sphi 0, %s317
    %s321 = sphi 0, %s320
    %s337 = sphi 0, %s321
  $region4: #{residual_group.1} parent=0 // loop_header_branch
    %19 = sbr.rel (%p17) target = $region8
  $region5: #{residual_group.1} parent=0 // loop_body
    %s21 = ssub.s32 %s16, 1
    %s22 = ssub.s32 %s16, 2
    %s29 = sadd.s32 1, %s24
    %p30 = scmp.ge.s32.totalorder %s29, 5
    %s31 = scalar_select %p30, 0, %s29
    %s32 = sadd.s32 1, %s23
    %s33 = scalar_select %p30, %s32, %s23
    %p34 = scmp.ge.s32.totalorder %s33, 2
    %s35 = scalar_select %p34, 0, %s33
    %s37 = sadd.s32 %s36, 1
    %p40 = scmp.eq.s32.totalorder %s16, 9
    %p41 = scmp.ne.s32.totalorder %s36, %s38
    %p42 = scmp.eq.s32.totalorder %s16, 0
    %p43 = por %p41, %p42
    %p44 = scmp.ne.s32.totalorder %s36, %s38
    %p45 = scmp.eq.s32.totalorder %s21, 9
    %p46 = por %p44, %p45
    %p47 = scmp.ne.s32.totalorder %s38, %s39
    %p48 = scmp.eq.s32.totalorder %s21, 0
    %p49 = por %p47, %p48
    %p50 = scmp.ne.s32.totalorder %s38, %s39
    %p51 = scmp.eq.s32.totalorder %s22, 9
    %p52 = por %p50, %p51
    %p54 = scmp.ne.s32.totalorder %s39, %s53
    %p55 = scmp.eq.s32.totalorder %s22, 0
    %p56 = por %p54, %p55
    %s57 = ssub.s32 %s23, %s35
    %p58 = scmp.eq.s32.totalorder %s57, 0
    %s60 = sadd.s32 %s59, 1
    %s61 = scalar_select %p58, %s59, %s60
    %p64 = pneg %p58
    %p65 = scmp.eq.s32.totalorder %s16, 9
    %p66 = por %p64, %p65
    %p67 = scmp.ne.s32.totalorder %s59, %s62
    %p68 = scmp.eq.s32.totalorder %s16, 0
    %p69 = por %p67, %p68
    %p70 = scmp.ne.s32.totalorder %s59, %s62
    %p71 = scmp.eq.s32.totalorder %s21, 9
    %p72 = por %p70, %p71
    %p73 = scmp.ne.s32.totalorder %s62, %s63
    %p74 = scmp.eq.s32.totalorder %s21, 0
    %p75 = por %p73, %p74
    %p76 = scmp.ne.s32.totalorder %s62, %s63
    %p77 = scmp.eq.s32.totalorder %s22, 9
    %p78 = por %p76, %p77
    %p80 = scmp.ne.s32.totalorder %s63, %s79
    %p81 = scmp.eq.s32.totalorder %s22, 0
    %p82 = por %p80, %p81
    %s83 = ssub.s32 %s24, %s31
    %p84 = scmp.eq.s32.totalorder %s83, 0
    %s86 = sadd.s32 %s85, 1
    %s87 = scalar_select %p84, %s85, %s86
    %p90 = pneg %p84
    %p91 = scmp.eq.s32.totalorder %s16, 9
    %p92 = por %p90, %p91
    %p93 = scmp.ne.s32.totalorder %s85, %s88
    %p94 = scmp.eq.s32.totalorder %s16, 0
    %p95 = por %p93, %p94
    %p96 = scmp.ne.s32.totalorder %s85, %s88
    %p97 = scmp.eq.s32.totalorder %s21, 9
    %p98 = por %p96, %p97
    %p99 = scmp.ne.s32.totalorder %s88, %s89
    %p100 = scmp.eq.s32.totalorder %s21, 0
    %p101 = por %p99, %p100
    %p102 = scmp.ne.s32.totalorder %s88, %s89
    %p103 = scmp.eq.s32.totalorder %s22, 9
    %p104 = por %p102, %p103
    %p106 = scmp.ne.s32.totalorder %s89, %s105
    %p107 = scmp.eq.s32.totalorder %s22, 0
    %p108 = por %p106, %p107
    %s109 = ssub.s32 %s24, %s31
    %p110 = scmp.eq.s32.totalorder %s109, 0
    %s112 = sadd.s32 %s111, 1
    %s113 = scalar_select %p110, %s111, %s112
    %p116 = pneg %p110
    %p117 = scmp.eq.s32.totalorder %s16, 9
    %p118 = por %p116, %p117
    %p119 = scmp.ne.s32.totalorder %s111, %s114
    %p120 = scmp.eq.s32.totalorder %s16, 0
    %p121 = por %p119, %p120
    %p122 = scmp.ne.s32.totalorder %s111, %s114
    %p123 = scmp.eq.s32.totalorder %s21, 9
    %p124 = por %p122, %p123
    %p125 = scmp.ne.s32.totalorder %s114, %s115
    %p126 = scmp.eq.s32.totalorder %s21, 0
    %p127 = por %p125, %p126
    %p128 = scmp.ne.s32.totalorder %s114, %s115
    %p129 = scmp.eq.s32.totalorder %s22, 9
    %p130 = por %p128, %p129
    %p132 = scmp.ne.s32.totalorder %s115, %s131
    %p133 = scmp.eq.s32.totalorder %s22, 0
    %p134 = por %p132, %p133
    %p135 = scmp.lt.s32.totalorder %s24, 3
    %s136 = scalar_select %p135, %s24, 3
    %p137 = scmp.lt.s32.totalorder %s31, 3
    %s138 = scalar_select %p137, %s31, 3
    %s139 = ssub.s32 %s136, %s138
    %p140 = scmp.eq.s32.totalorder %s139, 0
    %s142 = sadd.s32 %s141, 1
    %s143 = scalar_select %p140, %s141, %s142
    %p146 = pneg %p140
    %p147 = scmp.eq.s32.totalorder %s16, 9
    %p148 = por %p146, %p147
    %p149 = scmp.ne.s32.totalorder %s141, %s144
    %p150 = scmp.eq.s32.totalorder %s16, 0
    %p151 = por %p149, %p150
    %p152 = scmp.ne.s32.totalorder %s141, %s144
    %p153 = scmp.eq.s32.totalorder %s21, 9
    %p154 = por %p152, %p153
    %p155 = scmp.ne.s32.totalorder %s144, %s145
    %p156 = scmp.eq.s32.totalorder %s21, 0
    %p157 = por %p155, %p156
    %p158 = scmp.ne.s32.totalorder %s144, %s145
    %p159 = scmp.eq.s32.totalorder %s22, 9
    %p160 = por %p158, %p159
    %p162 = scmp.ne.s32.totalorder %s145, %s161
    %p163 = scmp.eq.s32.totalorder %s22, 0
    %p164 = por %p162, %p163
    %p165 = scmp.lt.s32.totalorder %s24, 3
    %s166 = scalar_select %p165, %s24, 3
    %p167 = scmp.lt.s32.totalorder %s31, 3
    %s168 = scalar_select %p167, %s31, 3
    %s169 = ssub.s32 %s166, %s168
    %p170 = scmp.eq.s32.totalorder %s169, 0
    %s172 = sadd.s32 %s171, 1
    %s173 = scalar_select %p170, %s171, %s172
    %p176 = pneg %p170
    %p177 = scmp.eq.s32.totalorder %s16, 9
    %p178 = por %p176, %p177
    %p179 = scmp.ne.s32.totalorder %s171, %s174
    %p180 = scmp.eq.s32.totalorder %s16, 0
    %p181 = por %p179, %p180
    %p182 = scmp.ne.s32.totalorder %s171, %s174
    %p183 = scmp.eq.s32.totalorder %s21, 9
    %p184 = por %p182, %p183
    %p185 = scmp.ne.s32.totalorder %s174, %s175
    %p186 = scmp.eq.s32.totalorder %s21, 0
    %p187 = por %p185, %p186
    %p188 = scmp.ne.s32.totalorder %s174, %s175
    %p189 = scmp.eq.s32.totalorder %s22, 9
    %p190 = por %p188, %p189
    %p192 = scmp.ne.s32.totalorder %s175, %s191
    %p193 = scmp.eq.s32.totalorder %s22, 0
    %p194 = por %p192, %p193
    %p195 = scmp.lt.s32.totalorder %s24, 3
    %s196 = scalar_select %p195, %s24, 3
    %p197 = scmp.lt.s32.totalorder %s31, 3
    %s198 = scalar_select %p197, %s31, 3
    %s199 = ssub.s32 %s196, %s198
    %p200 = scmp.eq.s32.totalorder %s199, 0
    %s202 = sadd.s32 %s201, 1
    %s203 = scalar_select %p200, %s201, %s202
    %p206 = pneg %p200
    %p207 = scmp.eq.s32.totalorder %s16, 9
    %p208 = por %p206, %p207
    %p209 = scmp.ne.s32.totalorder %s201, %s204
    %p210 = scmp.eq.s32.totalorder %s16, 0
    %p211 = por %p209, %p210
    %p212 = scmp.ne.s32.totalorder %s201, %s204
    %p213 = scmp.eq.s32.totalorder %s21, 9
    %p214 = por %p212, %p213
    %p215 = scmp.ne.s32.totalorder %s204, %s205
    %p216 = scmp.eq.s32.totalorder %s21, 0
    %p217 = por %p215, %p216
    %p218 = scmp.ne.s32.totalorder %s204, %s205
    %p219 = scmp.eq.s32.totalorder %s22, 9
    %p220 = por %p218, %p219
    %p222 = scmp.ne.s32.totalorder %s205, %s221
    %p223 = scmp.eq.s32.totalorder %s22, 0
    %p224 = por %p222, %p223
    %p225 = scmp.lt.s32.totalorder %s24, 3
    %s226 = scalar_select %p225, %s24, 3
    %p227 = scmp.lt.s32.totalorder %s31, 3
    %s228 = scalar_select %p227, %s31, 3
    %s229 = ssub.s32 %s226, %s228
    %p230 = scmp.eq.s32.totalorder %s229, 0
    %s232 = sadd.s32 %s231, 1
    %s233 = scalar_select %p230, %s231, %s232
    %p236 = pneg %p230
    %p237 = scmp.eq.s32.totalorder %s16, 9
    %p238 = por %p236, %p237
    %p239 = scmp.ne.s32.totalorder %s231, %s234
    %p240 = scmp.eq.s32.totalorder %s16, 0
    %p241 = por %p239, %p240
    %p242 = scmp.ne.s32.totalorder %s231, %s234
    %p243 = scmp.eq.s32.totalorder %s21, 9
    %p244 = por %p242, %p243
    %p245 = scmp.ne.s32.totalorder %s234, %s235
    %p246 = scmp.eq.s32.totalorder %s21, 0
    %p247 = por %p245, %p246
    %p248 = scmp.ne.s32.totalorder %s234, %s235
    %p249 = scmp.eq.s32.totalorder %s22, 9
    %p250 = por %p248, %p249
    %p252 = scmp.ne.s32.totalorder %s235, %s251
    %p253 = scmp.eq.s32.totalorder %s22, 0
    %p254 = por %p252, %p253
    %p255 = scmp.lt.s32.totalorder %s24, 3
    %s256 = scalar_select %p255, %s24, 3
    %p257 = scmp.lt.s32.totalorder %s31, 3
    %s258 = scalar_select %p257, %s31, 3
    %s259 = ssub.s32 %s256, %s258
    %p260 = scmp.eq.s32.totalorder %s259, 0
    %s262 = sadd.s32 %s261, 1
    %s263 = scalar_select %p260, %s261, %s262
    %p266 = pneg %p260
    %p267 = scmp.eq.s32.totalorder %s16, 9
    %p268 = por %p266, %p267
    %p269 = scmp.ne.s32.totalorder %s261, %s264
    %p270 = scmp.eq.s32.totalorder %s16, 0
    %p271 = por %p269, %p270
    %p272 = scmp.ne.s32.totalorder %s261, %s264
    %p273 = scmp.eq.s32.totalorder %s21, 9
    %p274 = por %p272, %p273
    %p275 = scmp.ne.s32.totalorder %s264, %s265
    %p276 = scmp.eq.s32.totalorder %s21, 0
    %p277 = por %p275, %p276
    %p278 = scmp.ne.s32.totalorder %s264, %s265
    %p279 = scmp.eq.s32.totalorder %s22, 9
    %p280 = por %p278, %p279
    %p282 = scmp.ne.s32.totalorder %s265, %s281
    %p283 = scmp.eq.s32.totalorder %s22, 0
    %p284 = por %p282, %p283
    %p285 = scmp.lt.s32.totalorder %s24, 3
    %s286 = scalar_select %p285, %s24, 3
    %p287 = scmp.lt.s32.totalorder %s31, 3
    %s288 = scalar_select %p287, %s31, 3
    %s289 = ssub.s32 %s286, %s288
    %p290 = scmp.eq.s32.totalorder %s289, 0
    %s292 = sadd.s32 %s291, 1
    %s293 = scalar_select %p290, %s291, %s292
    %p296 = pneg %p290
    %p297 = scmp.eq.s32.totalorder %s16, 9
    %p298 = por %p296, %p297
    %p299 = scmp.ne.s32.totalorder %s291, %s294
    %p300 = scmp.eq.s32.totalorder %s16, 0
    %p301 = por %p299, %p300
    %p302 = scmp.ne.s32.totalorder %s291, %s294
    %p303 = scmp.eq.s32.totalorder %s21, 9
    %p304 = por %p302, %p303
    %p305 = scmp.ne.s32.totalorder %s294, %s295
    %p306 = scmp.eq.s32.totalorder %s21, 0
    %p307 = por %p305, %p306
    %p308 = scmp.ne.s32.totalorder %s294, %s295
    %p309 = scmp.eq.s32.totalorder %s22, 9
    %p310 = por %p308, %p309
    %p312 = scmp.ne.s32.totalorder %s295, %s311
    %p313 = scmp.eq.s32.totalorder %s22, 0
    %p314 = por %p312, %p313
    %s315 = ssub.s32 %s23, %s35
    %p316 = scmp.eq.s32.totalorder %s315, 0
    %s318 = sadd.s32 %s317, 1
    %s319 = scalar_select %p316, %s317, %s318
    %p322 = pneg %p316
    %p323 = scmp.eq.s32.totalorder %s16, 9
    %p324 = por %p322, %p323
    %p325 = scmp.ne.s32.totalorder %s317, %s320
    %p326 = scmp.eq.s32.totalorder %s16, 0
    %p327 = por %p325, %p326
    %p328 = scmp.ne.s32.totalorder %s317, %s320
    %p329 = scmp.eq.s32.totalorder %s21, 9
    %p330 = por %p328, %p329
    %p331 = scmp.ne.s32.totalorder %s320, %s321
    %p332 = scmp.eq.s32.totalorder %s21, 0
    %p333 = por %p331, %p332
    %p334 = scmp.ne.s32.totalorder %s320, %s321
    %p335 = scmp.eq.s32.totalorder %s22, 9
    %p336 = por %p334, %p335
    %p338 = scmp.ne.s32.totalorder %s321, %s337
    %p339 = scmp.eq.s32.totalorder %s22, 0
    %p340 = por %p338, %p339
    %p341 = scmp.le.s32.totalorder 1, %s16
    %p342 = scmp.lt.s32.totalorder %s16, 11
    %p343 = pnand %p341, %p342
    %p344 = pneg %p343
    // Predicated region
    $region9: #{residual_group.1} parent=5 // pred_check
      _
    $region10: #{residual_group.1} parent=5 // pred_check_branch
      %346 = sbr.rel (%p343) target = $region12
    $region11: #{residual_group.1} parent=5 // pred_region
      %s347 = ssub.s32 %s16, 1
      // Predicated region
      $region13: #{residual_group.1} parent=11 // pred_check
        %p348 = pneg %p49
      $region14: #{residual_group.1} parent=11 // pred_check_branch
        %350 = sbr.rel (%p348) target = $region16
      $region15: #{residual_group.1} parent=11 // pred_region
        _
      $region16: #{residual_group.1} parent=11 // pred_fallthru
        _
    $region12: #{residual_group.1} parent=5 // pred_fallthru
      _
    %p351 = scmp.lt.s32.totalorder %s16, 10
    // Predicated region
    $region17: #{residual_group.1} parent=5 // pred_check
      %p352 = pneg %p351
    $region18: #{residual_group.1} parent=5 // pred_check_branch
      %354 = sbr.rel (%p352) target = $region20
    $region19: #{residual_group.1} parent=5 // pred_region
      // Predicated region
      $region21: #{residual_group.1} parent=19 // pred_check
        %p355 = pneg %p69
      $region22: #{residual_group.1} parent=19 // pred_check_branch
        %357 = sbr.rel (%p355) target = $region24
      $region23: #{residual_group.1} parent=19 // pred_region
        %p358 = scmp.lt.s32.totalorder %s23, 1
        %s359 = scalar_select %p358, %s23, 1
        %s360 = smul.addr %s359, 16
        %s361 = smul.addr %s360, 8
        %s362 = scalar_lea.vmem %s1, %s361
      $region24: #{residual_group.1} parent=19 // pred_fallthru
        _
      // Predicated region
      $region25: #{residual_group.1} parent=19 // pred_check
        %p363 = pneg %p95
      $region26: #{residual_group.1} parent=19 // pred_check_branch
        %365 = sbr.rel (%p363) target = $region28
      $region27: #{residual_group.1} parent=19 // pred_region
        %p366 = scmp.lt.s32.totalorder %s24, 4
        %s367 = scalar_select %p366, %s24, 4
        %s368 = smul.addr %s367, 12
        %s369 = smul.addr %s368, 4
        %s370 = scalar_lea.vmem %s2, %s369
      $region28: #{residual_group.1} parent=19 // pred_fallthru
        _
      // Predicated region
      $region29: #{residual_group.1} parent=19 // pred_check
        %p371 = pneg %p121
      $region30: #{residual_group.1} parent=19 // pred_check_branch
        %373 = sbr.rel (%p371) target = $region32
      $region31: #{residual_group.1} parent=19 // pred_region
        %p374 = scmp.lt.s32.totalorder %s24, 4
        %s375 = scalar_select %p374, %s24, 4
        %s376 = smul.addr %s375, 4
        %s377 = smul.addr %s376, 8
        %s378 = scalar_lea.vmem %s3, %s377
      $region32: #{residual_group.1} parent=19 // pred_fallthru
        _
      // Predicated region
      $region33: #{residual_group.1} parent=19 // pred_check
        %p379 = pneg %p151
      $region34: #{residual_group.1} parent=19 // pred_check_branch
        %381 = sbr.rel (%p379) target = $region36
      $region35: #{residual_group.1} parent=19 // pred_region
        %p382 = scmp.lt.s32.totalorder %s24, 3
        %s383 = scalar_select %p382, %s24, 3
        %p384 = scmp.lt.s32.totalorder %s383, 3
        %s385 = scalar_select %p384, %s383, 3
        %s386 = smul.addr %s385, 12
        %s387 = smul.addr %s386, 4
        %s388 = scalar_lea.vmem %s4, %s387
        %p389 = scmp.lt.s32.totalorder %s24, 3
        %s390 = scalar_select %p389, %s24, 3
      $region36: #{residual_group.1} parent=19 // pred_fallthru
        _
      // Predicated region
      $region37: #{residual_group.1} parent=19 // pred_check
        %p391 = pneg %p181
      $region38: #{residual_group.1} parent=19 // pred_check_branch
        %393 = sbr.rel (%p391) target = $region40
      $region39: #{residual_group.1} parent=19 // pred_region
        %p394 = scmp.lt.s32.totalorder %s24, 3
        %s395 = scalar_select %p394, %s24, 3
        %p396 = scmp.lt.s32.totalorder %s395, 3
        %s397 = scalar_select %p396, %s395, 3
        %s398 = smul.addr %s397, 4
        %s399 = smul.addr %s398, 8
        %s400 = scalar_lea.vmem %s5, %s399
        %p401 = scmp.lt.s32.totalorder %s24, 3
        %s402 = scalar_select %p401, %s24, 3
      $region40: #{residual_group.1} parent=19 // pred_fallthru
        _
      // Predicated region
      $region41: #{residual_group.1} parent=19 // pred_check
        %p403 = pneg %p211
      $region42: #{residual_group.1} parent=19 // pred_check_branch
        %405 = sbr.rel (%p403) target = $region44
      $region43: #{residual_group.1} parent=19 // pred_region
        %p406 = scmp.lt.s32.totalorder %s24, 3
        %s407 = scalar_select %p406, %s24, 3
        %p408 = scmp.lt.s32.totalorder %s407, 3
        %s409 = scalar_select %p408, %s407, 3
        %s410 = smul.addr %s409, 4
        %s411 = scalar_lea.vmem %s6, %s410
        %p412 = scmp.lt.s32.totalorder %s24, 3
        %s413 = scalar_select %p412, %s24, 3
      $region44: #{residual_group.1} parent=19 // pred_fallthru
        _
      // Predicated region
      $region45: #{residual_group.1} parent=19 // pred_check
        %p414 = pneg %p241
      $region46: #{residual_group.1} parent=19 // pred_check_branch
        %416 = sbr.rel (%p414) target = $region48
      $region47: #{residual_group.1} parent=19 // pred_region
        %p417 = scmp.lt.s32.totalorder %s24, 3
        %s418 = scalar_select %p417, %s24, 3
        %p419 = scmp.lt.s32.totalorder %s418, 3
        %s420 = scalar_select %p419, %s418, 3
        %s421 = smul.addr %s420, 4
        %s422 = scalar_lea.vmem %s7, %s421
        %p423 = scmp.lt.s32.totalorder %s24, 3
        %s424 = scalar_select %p423, %s24, 3
      $region48: #{residual_group.1} parent=19 // pred_fallthru
        _
      // Predicated region
      $region49: #{residual_group.1} parent=19 // pred_check
        %p425 = pneg %p271
      $region50: #{residual_group.1} parent=19 // pred_check_branch
        %427 = sbr.rel (%p425) target = $region52
      $region51: #{residual_group.1} parent=19 // pred_region
        %p428 = scmp.lt.s32.totalorder %s24, 3
        %s429 = scalar_select %p428, %s24, 3
        %p430 = scmp.lt.s32.totalorder %s429, 3
        %s431 = scalar_select %p430, %s429, 3
        %s432 = smul.addr %s431, 4
        %s433 = smul.addr %s432, 8
        %s434 = scalar_lea.vmem %s8, %s433
        %p435 = scmp.lt.s32.totalorder %s24, 3
        %s436 = scalar_select %p435, %s24, 3
      $region52: #{residual_group.1} parent=19 // pred_fallthru
        _
      // Predicated region
      $region53: #{residual_group.1} parent=19 // pred_check
        %p437 = pneg %p301
      $region54: #{residual_group.1} parent=19 // pred_check_branch
        %439 = sbr.rel (%p437) target = $region56
      $region55: #{residual_group.1} parent=19 // pred_region
        %p440 = scmp.lt.s32.totalorder %s24, 3
        %s441 = scalar_select %p440, %s24, 3
        %p442 = scmp.lt.s32.totalorder %s441, 3
        %s443 = scalar_select %p442, %s441, 3
        %s444 = smul.addr %s443, 4
        %s445 = smul.addr %s444, 8
        %s446 = scalar_lea.vmem %s9, %s445
        %p447 = scmp.lt.s32.totalorder %s24, 3
        %s448 = scalar_select %p447, %s24, 3
      $region56: #{residual_group.1} parent=19 // pred_fallthru
        _
    $region20: #{residual_group.1} parent=5 // pred_fallthru
      _
    %p449 = scmp.le.s32.totalorder 1, %s16
    %p450 = scmp.lt.s32.totalorder %s16, 11
    %p451 = pnand %p449, %p450
    %p452 = pneg %p451
    // Predicated region
    $region57: #{residual_group.1} parent=5 // pred_check
      _
    $region58: #{residual_group.1} parent=5 // pred_check_branch
      %454 = sbr.rel (%p451) target = $region60
    $region59: #{residual_group.1} parent=5 // pred_region
      %s455 = ssub.s32 %s16, 1
      %p456 = pneg %p49
      %p457 = pneg %p46
      %p458 = scmp.lt.s32.totalorder %s25, 1
      %s459 = scalar_select %p458, %s25, 1
      %s460 = smul.addr %s459, 16
      %s461 = smul.addr %s460, 8
      %s462 = scalar_lea.vmem %s1, %s461
      %p463 = pneg %p75
      %p464 = pneg %p72
      %p465 = scmp.lt.s32.totalorder %s26, 4
      %s466 = scalar_select %p465, %s26, 4
      %s467 = smul.addr %s466, 12
      %s468 = smul.addr %s467, 4
      %s469 = scalar_lea.vmem %s2, %s468
      %p470 = pneg %p101
      %p471 = pneg %p98
      %p472 = scmp.lt.s32.totalorder %s26, 4
      %s473 = scalar_select %p472, %s26, 4
      %s474 = smul.addr %s473, 4
      %s475 = smul.addr %s474, 8
      %s476 = scalar_lea.vmem %s3, %s475
      %p477 = pneg %p127
      %p478 = pneg %p124
      %p479 = scmp.lt.s32.totalorder %s26, 3
      %s480 = scalar_select %p479, %s26, 3
      %p481 = scmp.lt.s32.totalorder %s480, 3
      %s482 = scalar_select %p481, %s480, 3
      %s483 = smul.addr %s482, 12
      %s484 = smul.addr %s483, 4
      %s485 = scalar_lea.vmem %s4, %s484
      %p486 = pneg %p157
      %p487 = pneg %p154
      %p488 = scmp.lt.s32.totalorder %s26, 3
      %s489 = scalar_select %p488, %s26, 3
      %p490 = scmp.lt.s32.totalorder %s489, 3
      %s491 = scalar_select %p490, %s489, 3
      %s492 = smul.addr %s491, 4
      %s493 = smul.addr %s492, 8
      %s494 = scalar_lea.vmem %s5, %s493
      %p495 = pneg %p187
      %p496 = pneg %p184
      %p497 = scmp.lt.s32.totalorder %s26, 3
      %s498 = scalar_select %p497, %s26, 3
      %p499 = scmp.lt.s32.totalorder %s498, 3
      %s500 = scalar_select %p499, %s498, 3
      %s501 = smul.addr %s500, 4
      %s502 = scalar_lea.vmem %s6, %s501
      %p503 = pneg %p217
      %p504 = pneg %p214
      %p505 = scmp.lt.s32.totalorder %s26, 3
      %s506 = scalar_select %p505, %s26, 3
      %p507 = scmp.lt.s32.totalorder %s506, 3
      %s508 = scalar_select %p507, %s506, 3
      %s509 = smul.addr %s508, 4
      %s510 = scalar_lea.vmem %s7, %s509
      %p511 = pneg %p247
      %p512 = pneg %p244
      %p513 = scmp.lt.s32.totalorder %s26, 3
      %s514 = scalar_select %p513, %s26, 3
      %p515 = scmp.lt.s32.totalorder %s514, 3
      %s516 = scalar_select %p515, %s514, 3
      %s517 = smul.addr %s516, 4
      %s518 = smul.addr %s517, 8
      %s519 = scalar_lea.vmem %s8, %s518
      %p520 = pneg %p277
      %p521 = pneg %p274
      %p522 = scmp.lt.s32.totalorder %s26, 3
      %s523 = scalar_select %p522, %s26, 3
      %p524 = scmp.lt.s32.totalorder %s523, 3
      %s525 = scalar_select %p524, %s523, 3
      %s526 = smul.addr %s525, 4
      %s527 = smul.addr %s526, 8
      %s528 = scalar_lea.vmem %s9, %s527
      %p529 = pneg %p307
      %p530 = pneg %p304
      %p531 = pneg %p333
      %p532 = pneg %p330
      %p533 = scmp.lt.s32.totalorder %s25, 1
      %s534 = scalar_select %p533, %s25, 1
      %s535 = smul.addr %s534, 16
      %s536 = smul.addr %s535, 8
      %s537 = scalar_lea.vmem %s10, %s536
      %p538 = scmp.lt.s32.totalorder %s25, 1
      %s539 = scalar_select %p538, %s25, 1
      %s540 = smul.addr %s539, 16
      %s541 = smul.addr %s540, 8
      %s542 = scalar_lea.vmem %s1, %s541
      %p543 = scmp.lt.s32.totalorder %s26, 4
      %s544 = scalar_select %p543, %s26, 4
      %s545 = smul.addr %s544, 12
      %s546 = smul.addr %s545, 4
      %s547 = scalar_lea.vmem %s2, %s546
      %p548 = scmp.lt.s32.totalorder %s26, 4
      %s549 = scalar_select %p548, %s26, 4
      %s550 = smul.addr %s549, 4
      %s551 = smul.addr %s550, 8
      %s552 = scalar_lea.vmem %s3, %s551
      %p553 = scmp.lt.s32.totalorder %s26, 3
      %s554 = scalar_select %p553, %s26, 3
      %p555 = scmp.lt.s32.totalorder %s554, 3
      %s556 = scalar_select %p555, %s554, 3
      %s557 = smul.addr %s556, 12
      %s558 = smul.addr %s557, 4
      %s559 = scalar_lea.vmem %s4, %s558
      %p560 = scmp.lt.s32.totalorder %s26, 3
      %s561 = scalar_select %p560, %s26, 3
      %p562 = scmp.lt.s32.totalorder %s26, 3
      %s563 = scalar_select %p562, %s26, 3
      %p564 = scmp.lt.s32.totalorder %s563, 3
      %s565 = scalar_select %p564, %s563, 3
      %s566 = smul.addr %s565, 4
      %s567 = smul.addr %s566, 8
      %s568 = scalar_lea.vmem %s5, %s567
      %p569 = scmp.lt.s32.totalorder %s26, 3
      %s570 = scalar_select %p569, %s26, 3
      %p571 = scmp.lt.s32.totalorder %s26, 3
      %s572 = scalar_select %p571, %s26, 3
      %p573 = scmp.lt.s32.totalorder %s572, 3
      %s574 = scalar_select %p573, %s572, 3
      %s575 = smul.addr %s574, 4
      %s576 = scalar_lea.vmem %s6, %s575
      %p577 = scmp.lt.s32.totalorder %s26, 3
      %s578 = scalar_select %p577, %s26, 3
      %p579 = scmp.lt.s32.totalorder %s26, 3
      %s580 = scalar_select %p579, %s26, 3
      %p581 = scmp.lt.s32.totalorder %s580, 3
      %s582 = scalar_select %p581, %s580, 3
      %s583 = smul.addr %s582, 4
      %s584 = scalar_lea.vmem %s7, %s583
      %p585 = scmp.lt.s32.totalorder %s26, 3
      %s586 = scalar_select %p585, %s26, 3
      %p587 = scmp.lt.s32.totalorder %s26, 3
      %s588 = scalar_select %p587, %s26, 3
      %p589 = scmp.lt.s32.totalorder %s588, 3
      %s590 = scalar_select %p589, %s588, 3
      %s591 = smul.addr %s590, 4
      %s592 = smul.addr %s591, 8
      %s593 = scalar_lea.vmem %s8, %s592
      %p594 = scmp.lt.s32.totalorder %s26, 3
      %s595 = scalar_select %p594, %s26, 3
      %p596 = scmp.lt.s32.totalorder %s26, 3
      %s597 = scalar_select %p596, %s26, 3
      %p598 = scmp.lt.s32.totalorder %s597, 3
      %s599 = scalar_select %p598, %s597, 3
      %s600 = smul.addr %s599, 4
      %s601 = smul.addr %s600, 8
      %s602 = scalar_lea.vmem %s9, %s601
      %p603 = scmp.lt.s32.totalorder %s26, 3
      %s604 = scalar_select %p603, %s26, 3
      %p605 = scmp.lt.s32.totalorder %s25, 1
      %s606 = scalar_select %p605, %s25, 1
      %s607 = smul.addr %s606, 16
      %s608 = smul.addr %s607, 8
      %s609 = scalar_lea.vmem %s10, %s608
      %v611 = vld [vmem:[%s0] sm:$0x7]
      %p612 = scmp.eq.s32.totalorder %s26, 0
      // Predicated region
      $region61: #{residual_group.1} parent=59 // pred_check
        %p613 = pneg %p612
      $region62: #{residual_group.1} parent=59 // pred_check_branch
        %615 = sbr.rel (%p613) target = $region64
      $region63: #{residual_group.1} parent=59 // pred_region
        %v616 = vld [vmem:[%s542] sm:$0xff]
        %v617 = vld [vmem:[%s542 + $0x8] sm:$0xff]
        %v618 = vld [vmem:[%s542 + $0x10] sm:$0xff]
        %v619 = vld [vmem:[%s542 + $0x18] sm:$0xff]
        %v620 = vld [vmem:[%s542 + $0x20] sm:$0xff]
        %v621 = vld [vmem:[%s542 + $0x28] sm:$0xff]
        %v622 = vld [vmem:[%s542 + $0x30] sm:$0xff]
        %v623 = vld [vmem:[%s542 + $0x38] sm:$0xff]
        %v624 = vld [vmem:[%s542 + $0x40] sm:$0xff]
        %v625 = vld [vmem:[%s542 + $0x48] sm:$0xff]
        %v626 = vld [vmem:[%s542 + $0x50] sm:$0xff]
        %v627 = vld [vmem:[%s542 + $0x58] sm:$0xff]
        %v628 = vld [vmem:[%s542 + $0x60] sm:$0xff]
        %v629 = vld [vmem:[%s542 + $0x68] sm:$0xff]
        %v630 = vld [vmem:[%s542 + $0x70] sm:$0xff]
        %v631 = vld [vmem:[%s542 + $0x78] sm:$0xff]
        %632 = vst [vmem:[#allocation2] sm:$0xff] %v616
        %633 = vst [vmem:[#allocation2 + $0x8] sm:$0xff] %v617
        %634 = vst [vmem:[#allocation2 + $0x10] sm:$0xff] %v618
        %635 = vst [vmem:[#allocation2 + $0x18] sm:$0xff] %v619
        %636 = vst [vmem:[#allocation2 + $0x20] sm:$0xff] %v620
        %637 = vst [vmem:[#allocation2 + $0x28] sm:$0xff] %v621
        %638 = vst [vmem:[#allocation2 + $0x30] sm:$0xff] %v622
        %639 = vst [vmem:[#allocation2 + $0x38] sm:$0xff] %v623
        %640 = vst [vmem:[#allocation2 + $0x40] sm:$0xff] %v624
        %641 = vst [vmem:[#allocation2 + $0x48] sm:$0xff] %v625
        %642 = vst [vmem:[#allocation2 + $0x50] sm:$0xff] %v626
        %643 = vst [vmem:[#allocation2 + $0x58] sm:$0xff] %v627
        %644 = vst [vmem:[#allocation2 + $0x60] sm:$0xff] %v628
        %645 = vst [vmem:[#allocation2 + $0x68] sm:$0xff] %v629
        %646 = vst [vmem:[#allocation2 + $0x70] sm:$0xff] %v630
        %647 = vst [vmem:[#allocation2 + $0x78] sm:$0xff] %v631
        %648 = vst [vmem:[#allocation3] sm:$0xff] 0.0
        %649 = vst [vmem:[#allocation3 + $0x8] sm:$0xff] 0.0
        %650 = vst [vmem:[#allocation3 + $0x10] sm:$0xff] 0.0
        %651 = vst [vmem:[#allocation3 + $0x18] sm:$0xff] 0.0
        %652 = vst [vmem:[#allocation3 + $0x20] sm:$0xff] 0.0
        %653 = vst [vmem:[#allocation3 + $0x28] sm:$0xff] 0.0
        %654 = vst [vmem:[#allocation3 + $0x30] sm:$0xff] 0.0
        %655 = vst [vmem:[#allocation3 + $0x38] sm:$0xff] 0.0
        %656 = vst [vmem:[#allocation3 + $0x40] sm:$0xff] 0.0
        %657 = vst [vmem:[#allocation3 + $0x48] sm:$0xff] 0.0
        %658 = vst [vmem:[#allocation3 + $0x50] sm:$0xff] 0.0
        %659 = vst [vmem:[#allocation3 + $0x58] sm:$0xff] 0.0
        %660 = vst [vmem:[#allocation3 + $0x60] sm:$0xff] 0.0
        %661 = vst [vmem:[#allocation3 + $0x68] sm:$0xff] 0.0
        %662 = vst [vmem:[#allocation3 + $0x70] sm:$0xff] 0.0
        %663 = vst [vmem:[#allocation3 + $0x78] sm:$0xff] 0.0
      $region64: #{residual_group.1} parent=59 // pred_fallthru
        _
      %p664 = scmp.lt.s32.totalorder %s26, 4
      // Predicated region
      $region65: #{residual_group.1} parent=59 // pred_check
        %p665 = pneg %p664
      $region66: #{residual_group.1} parent=59 // pred_check_branch
        %667 = sbr.rel (%p665) target = $region68
      $region67: #{residual_group.1} parent=59 // pred_region
        %v668 = vld [vmem:[%s547] sm:$0xff]
        %v669 = vld [vmem:[%s547 + $0x8] sm:$0xf]
        %v670 = vld [vmem:[%s547 + $0xc] sm:$0xff]
        %v671 = vld [vmem:[%s547 + $0x14] sm:$0xf]
        %v672 = vld [vmem:[%s547 + $0x18] sm:$0xff]
        %v673 = vld [vmem:[%s547 + $0x20] sm:$0xf]
        %v674 = vld [vmem:[%s547 + $0x24] sm:$0xff]
        %v675 = vld [vmem:[%s547 + $0x2c] sm:$0xf]
        %v676 = vld [vmem:[%s552] sm:$0xff]
        %v677 = vld [vmem:[%s552 + $0x8] sm:$0xff]
        %v678 = vld [vmem:[%s552 + $0x10] sm:$0xff]
        %v679 = vld [vmem:[%s552 + $0x18] sm:$0xff]
        %v680 = vld [vmem:[#allocation2] sm:$0xff]
        %v681 = vld [vmem:[#allocation2 + $0x8] sm:$0xff]
        %v682 = vld [vmem:[#allocation2 + $0x10] sm:$0xff]
        %v683 = vld [vmem:[#allocation2 + $0x18] sm:$0xff]
        %v684 = vld [vmem:[#allocation2 + $0x20] sm:$0xff]
        %v685 = vld [vmem:[#allocation2 + $0x28] sm:$0xff]
        %v686 = vld [vmem:[#allocation2 + $0x30] sm:$0xff]
        %v687 = vld [vmem:[#allocation2 + $0x38] sm:$0xff]
        %v688 = vld [vmem:[#allocation2 + $0x40] sm:$0xff]
        %v689 = vld [vmem:[#allocation2 + $0x48] sm:$0xff]
        %v690 = vld [vmem:[#allocation2 + $0x50] sm:$0xff]
        %v691 = vld [vmem:[#allocation2 + $0x58] sm:$0xff]
        %v692 = vld [vmem:[#allocation2 + $0x60] sm:$0xff]
        %v693 = vld [vmem:[#allocation2 + $0x68] sm:$0xff]
        %v694 = vld [vmem:[#allocation2 + $0x70] sm:$0xff]
        %v695 = vld [vmem:[#allocation2 + $0x78] sm:$0xff]
        %v696 = vpack.c.bf16 %v681, %v680
        %v697 = vpack.c.bf16 %v683, %v682
        %v698 = vpack.c.bf16 %v685, %v684
        %v699 = vpack.c.bf16 %v687, %v686
        %v700 = vpack.c.bf16 %v689, %v688
        %v701 = vpack.c.bf16 %v691, %v690
        %v702 = vpack.c.bf16 %v693, %v692
        %v703 = vpack.c.bf16 %v695, %v694
        %v712 = vunpack.c.l.b16 %v696
        %v713 = vunpack.c.h.b16 %v696
        %v714 = vunpack.c.l.b16 %v697
        %v715 = vunpack.c.h.b16 %v697
        %v716 = vunpack.c.l.b16 %v698
        %v717 = vunpack.c.h.b16 %v698
        %v718 = vunpack.c.l.b16 %v699
        %v719 = vunpack.c.h.b16 %v699
        %v720 = vunpack.c.l.b16 %v700
        %v721 = vunpack.c.h.b16 %v700
        %v722 = vunpack.c.l.b16 %v701
        %v723 = vunpack.c.h.b16 %v701
        %v724 = vunpack.c.l.b16 %v702
        %v725 = vunpack.c.h.b16 %v702
        %v726 = vunpack.c.l.b16 %v703
        %v727 = vunpack.c.h.b16 %v703
        %v728 = vpack.c.b16 %v716, %v712
        %v729 = vpack.c.b16 %v717, %v713
        %v730 = vpack.c.b16 %v718, %v714
        %v731 = vpack.c.b16 %v719, %v715
        %v732 = vpack.c.b16 %v724, %v720
        %v733 = vpack.c.b16 %v725, %v721
        %v734 = vpack.c.b16 %v726, %v722
        %v735 = vpack.c.b16 %v727, %v723
        %736 = vrot.lane.b32.xlu0 %v728, 127
        %v737 = vpop.permute.xlu0 %736
        %738 = vrot.lane.b32.xlu0 %v729, 127
        %v739 = vpop.permute.xlu0 %738
        %740 = vrot.lane.b32.xlu0 %v730, 127
        %v741 = vpop.permute.xlu0 %740
        %742 = vrot.lane.b32.xlu0 %v731, 127
        %v743 = vpop.permute.xlu0 %742
        %744 = vrot.lane.b32.xlu0 %v732, 127
        %v745 = vpop.permute.xlu0 %744
        %746 = vrot.lane.b32.xlu0 %v733, 127
        %v747 = vpop.permute.xlu0 %746
        %748 = vrot.lane.b32.xlu0 %v734, 127
        %v749 = vpop.permute.xlu0 %748
        %750 = vrot.lane.b32.xlu0 %v735, 127
        %v751 = vpop.permute.xlu0 %750
        %vm752 = vcmask 1039360
        %v753 = vsel %vm752, %v737, %v739
        %v754 = vsel %vm752, %v739, %v741
        %v755 = vsel %vm752, %v741, %v743
        %v756 = vsel %vm752, %v745, %v747
        %v757 = vsel %vm752, %v747, %v749
        %v758 = vsel %vm752, %v749, %v751
        %759 = vrot.lane.b32.xlu0 %v728, 126
        %v760 = vpop.permute.xlu0 %759
        %761 = vrot.lane.b32.xlu0 %v729, 126
        %v762 = vpop.permute.xlu0 %761
        %763 = vrot.lane.b32.xlu0 %v730, 126
        %v764 = vpop.permute.xlu0 %763
        %765 = vrot.lane.b32.xlu0 %v731, 126
        %v766 = vpop.permute.xlu0 %765
        %767 = vrot.lane.b32.xlu0 %v732, 126
        %v768 = vpop.permute.xlu0 %767
        %769 = vrot.lane.b32.xlu0 %v733, 126
        %v770 = vpop.permute.xlu0 %769
        %771 = vrot.lane.b32.xlu0 %v734, 126
        %v772 = vpop.permute.xlu0 %771
        %773 = vrot.lane.b32.xlu0 %v735, 126
        %v774 = vpop.permute.xlu0 %773
        %vm775 = vcmask 1031168
        %v776 = vsel %vm775, %v760, %v762
        %v777 = vsel %vm775, %v762, %v764
        %v778 = vsel %vm775, %v764, %v766
        %v779 = vsel %vm775, %v768, %v770
        %v780 = vsel %vm775, %v770, %v772
        %v781 = vsel %vm775, %v772, %v774
        %782 = vrot.lane.b32.xlu0 %v728, 110
        %v783 = vpop.permute.xlu0 %782
        %784 = vrot.lane.b32.xlu0 %v729, 110
        %v785 = vpop.permute.xlu0 %784
        %786 = vrot.lane.b32.xlu0 %v730, 110
        %v787 = vpop.permute.xlu0 %786
        %788 = vrot.lane.b32.xlu0 %v731, 110
        %v789 = vpop.permute.xlu0 %788
        %790 = vrot.lane.b32.xlu0 %v732, 110
        %v791 = vpop.permute.xlu0 %790
        %792 = vrot.lane.b32.xlu0 %v733, 110
        %v793 = vpop.permute.xlu0 %792
        %794 = vrot.lane.b32.xlu0 %v734, 110
        %v795 = vpop.permute.xlu0 %794
        %796 = vrot.lane.b32.xlu0 %v735, 110
        %v797 = vpop.permute.xlu0 %796
        %vm798 = vcmask 900096
        %v799 = vsel %vm798, %v783, %v785
        %v800 = vsel %vm798, %v785, %v787
        %v801 = vsel %vm798, %v787, %v789
        %v802 = vsel %vm798, %v791, %v793
        %v803 = vsel %vm798, %v793, %v795
        %v804 = vsel %vm798, %v795, %v797
        %805 = vrot.lane.b32.xlu0 %v729, 109
        %v806 = vpop.permute.xlu0 %805
        %807 = vrot.lane.b32.xlu0 %v730, 109
        %v808 = vpop.permute.xlu0 %807
        %809 = vrot.lane.b32.xlu0 %v731, 109
        %v810 = vpop.permute.xlu0 %809
        %811 = vrot.lane.b32.xlu0 %v733, 109
        %v812 = vpop.permute.xlu0 %811
        %813 = vrot.lane.b32.xlu0 %v734, 109
        %v814 = vpop.permute.xlu0 %813
        %815 = vrot.lane.b32.xlu0 %v735, 109
        %v816 = vpop.permute.xlu0 %815
        %vm817 = vcmask 891904
        %v818 = vsel %vm817, %v806, %v808
        %v819 = vsel %vm817, %v808, %v810
        %v820 = vsel %vm817, %v812, %v814
        %v821 = vsel %vm817, %v814, %v816
        %822 = vrot.lane.b32.xlu0 %v729, 108
        %v823 = vpop.permute.xlu0 %822
        %824 = vrot.lane.b32.xlu0 %v730, 108
        %v825 = vpop.permute.xlu0 %824
        %826 = vrot.lane.b32.xlu0 %v731, 108
        %v827 = vpop.permute.xlu0 %826
        %828 = vrot.lane.b32.xlu0 %v733, 108
        %v829 = vpop.permute.xlu0 %828
        %830 = vrot.lane.b32.xlu0 %v734, 108
        %v831 = vpop.permute.xlu0 %830
        %832 = vrot.lane.b32.xlu0 %v735, 108
        %v833 = vpop.permute.xlu0 %832
        %vm834 = vcmask 883712
        %v835 = vsel %vm834, %v823, %v825
        %v836 = vsel %vm834, %v825, %v827
        %v837 = vsel %vm834, %v829, %v831
        %v838 = vsel %vm834, %v831, %v833
        %839 = vrot.lane.b32.xlu0 %v729, 92
        %v840 = vpop.permute.xlu0 %839
        %841 = vrot.lane.b32.xlu0 %v730, 92
        %v842 = vpop.permute.xlu0 %841
        %843 = vrot.lane.b32.xlu0 %v731, 92
        %v844 = vpop.permute.xlu0 %843
        %845 = vrot.lane.b32.xlu0 %v733, 92
        %v846 = vpop.permute.xlu0 %845
        %847 = vrot.lane.b32.xlu0 %v734, 92
        %v848 = vpop.permute.xlu0 %847
        %849 = vrot.lane.b32.xlu0 %v735, 92
        %v850 = vpop.permute.xlu0 %849
        %vm851 = vcmask 752640
        %v852 = vsel %vm851, %v840, %v842
        %v853 = vsel %vm851, %v842, %v844
        %v854 = vsel %vm851, %v846, %v848
        %v855 = vsel %vm851, %v848, %v850
        %856 = vrot.lane.b32.xlu0 %v729, 91
        %v857 = vpop.permute.xlu0 %856
        %858 = vrot.lane.b32.xlu0 %v730, 91
        %v859 = vpop.permute.xlu0 %858
        %860 = vrot.lane.b32.xlu0 %v731, 91
        %v861 = vpop.permute.xlu0 %860
        %862 = vrot.lane.b32.xlu0 %v733, 91
        %v863 = vpop.permute.xlu0 %862
        %864 = vrot.lane.b32.xlu0 %v734, 91
        %v865 = vpop.permute.xlu0 %864
        %866 = vrot.lane.b32.xlu0 %v735, 91
        %v867 = vpop.permute.xlu0 %866
        %vm868 = vcmask 744448
        %v869 = vsel %vm868, %v857, %v859
        %v870 = vsel %vm868, %v859, %v861
        %v871 = vsel %vm868, %v863, %v865
        %v872 = vsel %vm868, %v865, %v867
        %873 = vrot.lane.b32.xlu0 %v729, 90
        %v874 = vpop.permute.xlu0 %873
        %875 = vrot.lane.b32.xlu0 %v730, 90
        %v876 = vpop.permute.xlu0 %875
        %877 = vrot.lane.b32.xlu0 %v731, 90
        %v878 = vpop.permute.xlu0 %877
        %879 = vrot.lane.b32.xlu0 %v733, 90
        %v880 = vpop.permute.xlu0 %879
        %881 = vrot.lane.b32.xlu0 %v734, 90
        %v882 = vpop.permute.xlu0 %881
        %883 = vrot.lane.b32.xlu0 %v735, 90
        %v884 = vpop.permute.xlu0 %883
        %vm885 = vcmask 736256
        %v886 = vsel %vm885, %v874, %v876
        %v887 = vsel %vm885, %v876, %v878
        %v888 = vsel %vm885, %v880, %v882
        %v889 = vsel %vm885, %v882, %v884
        %891 = vset.pattern.permute.xlu0 0
        %892 = vperm.xlu0 %891, %v676
        %v893 = vpop.permute.xlu0 %892
        %896 = vset.pattern.permute.xlu0 0
        %897 = vperm.xlu0 %896, %v677
        %v898 = vpop.permute.xlu0 %897
        %901 = vset.pattern.permute.xlu0 0
        %902 = vperm.xlu0 %901, %v678
        %v903 = vpop.permute.xlu0 %902
        %906 = vset.pattern.permute.xlu0 0
        %907 = vperm.xlu0 %906, %v679
        %v908 = vpop.permute.xlu0 %907
        %v918 = vunpack.c.l.b16 %v668
        %v919 = vunpack.c.h.b16 %v668
        %v920 = vunpack.c.l.b16 %v669
        %v921 = vunpack.c.l.b16 %v670
        %v922 = vunpack.c.h.b16 %v670
        %v923 = vunpack.c.l.b16 %v671
        %v924 = vunpack.c.l.b16 %v672
        %v925 = vunpack.c.h.b16 %v672
        %v926 = vunpack.c.l.b16 %v673
        %v927 = vunpack.c.l.b16 %v674
        %v928 = vunpack.c.h.b16 %v674
        %v929 = vunpack.c.l.b16 %v675
        %v930 = vpack.c.b16 %v921, %v918
        %v931 = vpack.c.b16 %v922, %v919
        %v932 = vpack.c.b16 %v923, %v920
        %v933 = vpack.c.b16 %v927, %v924
        %v934 = vpack.c.b16 %v928, %v925
        %v935 = vpack.c.b16 %v929, %v926
        %940 = vrot.lane.b32.xlu0 %v728, 19
        %v941 = vpop.permute.xlu0 %940
        %942 = vrot.lane.b32.xlu0 %v729, 19
        %v943 = vpop.permute.xlu0 %942
        %944 = vrot.lane.b32.xlu0 %v730, 19
        %v945 = vpop.permute.xlu0 %944
        %946 = vrot.lane.b32.xlu0 %v731, 19
        %v947 = vpop.permute.xlu0 %946
        %948 = vrot.lane.b32.xlu0 %v732, 19
        %v949 = vpop.permute.xlu0 %948
        %950 = vrot.lane.b32.xlu0 %v733, 19
        %v951 = vpop.permute.xlu0 %950
        %952 = vrot.lane.b32.xlu0 %v734, 19
        %v953 = vpop.permute.xlu0 %952
        %954 = vrot.lane.b32.xlu0 %v735, 19
        %v955 = vpop.permute.xlu0 %954
        %956 = vrot.lane.b32.xlu0 %v753, 19
        %v957 = vpop.permute.xlu0 %956
        %958 = vrot.lane.b32.xlu0 %v754, 19
        %v959 = vpop.permute.xlu0 %958
        %960 = vrot.lane.b32.xlu0 %v755, 19
        %v961 = vpop.permute.xlu0 %960
        %962 = vrot.lane.b32.xlu0 %v743, 19
        %v963 = vpop.permute.xlu0 %962
        %964 = vrot.lane.b32.xlu0 %v756, 19
        %v965 = vpop.permute.xlu0 %964
        %966 = vrot.lane.b32.xlu0 %v757, 19
        %v967 = vpop.permute.xlu0 %966
        %968 = vrot.lane.b32.xlu0 %v758, 19
        %v969 = vpop.permute.xlu0 %968
        %970 = vrot.lane.b32.xlu0 %v751, 19
        %v971 = vpop.permute.xlu0 %970
        %972 = vrot.lane.b32.xlu0 %v776, 19
        %v973 = vpop.permute.xlu0 %972
        %974 = vrot.lane.b32.xlu0 %v777, 19
        %v975 = vpop.permute.xlu0 %974
        %976 = vrot.lane.b32.xlu0 %v778, 19
        %v977 = vpop.permute.xlu0 %976
        %978 = vrot.lane.b32.xlu0 %v766, 19
        %v979 = vpop.permute.xlu0 %978
        %980 = vrot.lane.b32.xlu0 %v779, 19
        %v981 = vpop.permute.xlu0 %980
        %982 = vrot.lane.b32.xlu0 %v780, 19
        %v983 = vpop.permute.xlu0 %982
        %984 = vrot.lane.b32.xlu0 %v781, 19
        %v985 = vpop.permute.xlu0 %984
        %986 = vrot.lane.b32.xlu0 %v774, 19
        %v987 = vpop.permute.xlu0 %986
        %988 = vrot.lane.b32.xlu0 %v799, 19
        %v989 = vpop.permute.xlu0 %988
        %990 = vrot.lane.b32.xlu0 %v800, 19
        %v991 = vpop.permute.xlu0 %990
        %992 = vrot.lane.b32.xlu0 %v801, 19
        %v993 = vpop.permute.xlu0 %992
        %994 = vrot.lane.b32.xlu0 %v789, 19
        %v995 = vpop.permute.xlu0 %994
        %996 = vrot.lane.b32.xlu0 %v802, 19
        %v997 = vpop.permute.xlu0 %996
        %998 = vrot.lane.b32.xlu0 %v803, 19
        %v999 = vpop.permute.xlu0 %998
        %1000 = vrot.lane.b32.xlu0 %v804, 19
        %v1001 = vpop.permute.xlu0 %1000
        %1002 = vrot.lane.b32.xlu0 %v797, 19
        %v1003 = vpop.permute.xlu0 %1002
        %1004 = vrot.lane.b32.xlu0 %v806, 19
        %v1005 = vpop.permute.xlu0 %1004
        %1006 = vrot.lane.b32.xlu0 %v818, 19
        %v1007 = vpop.permute.xlu0 %1006
        %1008 = vrot.lane.b32.xlu0 %v819, 19
        %v1009 = vpop.permute.xlu0 %1008
        %1010 = vrot.lane.b32.xlu0 %v810, 19
        %v1011 = vpop.permute.xlu0 %1010
        %1012 = vrot.lane.b32.xlu0 %v812, 19
        %v1013 = vpop.permute.xlu0 %1012
        %1014 = vrot.lane.b32.xlu0 %v820, 19
        %v1015 = vpop.permute.xlu0 %1014
        %1016 = vrot.lane.b32.xlu0 %v821, 19
        %v1017 = vpop.permute.xlu0 %1016
        %1018 = vrot.lane.b32.xlu0 %v816, 19
        %v1019 = vpop.permute.xlu0 %1018
        %1020 = vrot.lane.b32.xlu0 %v823, 19
        %v1021 = vpop.permute.xlu0 %1020
        %1022 = vrot.lane.b32.xlu0 %v835, 19
        %v1023 = vpop.permute.xlu0 %1022
        %1024 = vrot.lane.b32.xlu0 %v836, 19
        %v1025 = vpop.permute.xlu0 %1024
        %1026 = vrot.lane.b32.xlu0 %v827, 19
        %v1027 = vpop.permute.xlu0 %1026
        %1028 = vrot.lane.b32.xlu0 %v829, 19
        %v1029 = vpop.permute.xlu0 %1028
        %1030 = vrot.lane.b32.xlu0 %v837, 19
        %v1031 = vpop.permute.xlu0 %1030
        %1032 = vrot.lane.b32.xlu0 %v838, 19
        %v1033 = vpop.permute.xlu0 %1032
        %1034 = vrot.lane.b32.xlu0 %v833, 19
        %v1035 = vpop.permute.xlu0 %1034
        %1036 = vrot.lane.b32.xlu0 %v840, 19
        %v1037 = vpop.permute.xlu0 %1036
        %1038 = vrot.lane.b32.xlu0 %v852, 19
        %v1039 = vpop.permute.xlu0 %1038
        %1040 = vrot.lane.b32.xlu0 %v853, 19
        %v1041 = vpop.permute.xlu0 %1040
        %1042 = vrot.lane.b32.xlu0 %v844, 19
        %v1043 = vpop.permute.xlu0 %1042
        %1044 = vrot.lane.b32.xlu0 %v846, 19
        %v1045 = vpop.permute.xlu0 %1044
        %1046 = vrot.lane.b32.xlu0 %v854, 19
        %v1047 = vpop.permute.xlu0 %1046
        %1048 = vrot.lane.b32.xlu0 %v855, 19
        %v1049 = vpop.permute.xlu0 %1048
        %1050 = vrot.lane.b32.xlu0 %v850, 19
        %v1051 = vpop.permute.xlu0 %1050
        %1052 = vrot.lane.b32.xlu0 %v857, 19
        %v1053 = vpop.permute.xlu0 %1052
        %1054 = vrot.lane.b32.xlu0 %v869, 19
        %v1055 = vpop.permute.xlu0 %1054
        %1056 = vrot.lane.b32.xlu0 %v870, 19
        %v1057 = vpop.permute.xlu0 %1056
        %1058 = vrot.lane.b32.xlu0 %v861, 19
        %v1059 = vpop.permute.xlu0 %1058
        %1060 = vrot.lane.b32.xlu0 %v863, 19
        %v1061 = vpop.permute.xlu0 %1060
        %1062 = vrot.lane.b32.xlu0 %v871, 19
        %v1063 = vpop.permute.xlu0 %1062
        %1064 = vrot.lane.b32.xlu0 %v872, 19
        %v1065 = vpop.permute.xlu0 %1064
        %1066 = vrot.lane.b32.xlu0 %v867, 19
        %v1067 = vpop.permute.xlu0 %1066
        %1068 = vrot.lane.b32.xlu0 %v874, 19
        %v1069 = vpop.permute.xlu0 %1068
        %1070 = vrot.lane.b32.xlu0 %v886, 19
        %v1071 = vpop.permute.xlu0 %1070
        %1072 = vrot.lane.b32.xlu0 %v887, 19
        %v1073 = vpop.permute.xlu0 %1072
        %1074 = vrot.lane.b32.xlu0 %v878, 19
        %v1075 = vpop.permute.xlu0 %1074
        %1076 = vrot.lane.b32.xlu0 %v880, 19
        %v1077 = vpop.permute.xlu0 %1076
        %1078 = vrot.lane.b32.xlu0 %v888, 19
        %v1079 = vpop.permute.xlu0 %1078
        %1080 = vrot.lane.b32.xlu0 %v889, 19
        %v1081 = vpop.permute.xlu0 %1080
        %1082 = vrot.lane.b32.xlu0 %v884, 19
        %v1083 = vpop.permute.xlu0 %1082
        %vm1084 = vcmask 154624
        %v1085 = vsel %vm1084, %v941, %v943
        %v1086 = vsel %vm1084, %v943, %v945
        %v1087 = vsel %vm1084, %v945, %v947
        %v1088 = vsel %vm1084, %v949, %v951
        %v1089 = vsel %vm1084, %v951, %v953
        %v1090 = vsel %vm1084, %v953, %v955
        %v1091 = vsel %vm1084, %v957, %v959
        %v1092 = vsel %vm1084, %v959, %v961
        %v1093 = vsel %vm1084, %v961, %v963
        %v1094 = vsel %vm1084, %v965, %v967
        %v1095 = vsel %vm1084, %v967, %v969
        %v1096 = vsel %vm1084, %v969, %v971
        %v1097 = vsel %vm1084, %v973, %v975
        %v1098 = vsel %vm1084, %v975, %v977
        %v1099 = vsel %vm1084, %v977, %v979
        %v1100 = vsel %vm1084, %v981, %v983
        %v1101 = vsel %vm1084, %v983, %v985
        %v1102 = vsel %vm1084, %v985, %v987
        %v1103 = vsel %vm1084, %v989, %v991
        %v1104 = vsel %vm1084, %v991, %v993
        %v1105 = vsel %vm1084, %v993, %v995
        %v1106 = vsel %vm1084, %v997, %v999
        %v1107 = vsel %vm1084, %v999, %v1001
        %v1108 = vsel %vm1084, %v1001, %v1003
        %v1109 = vsel %vm1084, %v1005, %v1007
        %v1110 = vsel %vm1084, %v1007, %v1009
        %v1111 = vsel %vm1084, %v1009, %v1011
        %v1112 = vsel %vm1084, %v1013, %v1015
        %v1113 = vsel %vm1084, %v1015, %v1017
        %v1114 = vsel %vm1084, %v1017, %v1019
        %v1115 = vsel %vm1084, %v1021, %v1023
        %v1116 = vsel %vm1084, %v1023, %v1025
        %v1117 = vsel %vm1084, %v1025, %v1027
        %v1118 = vsel %vm1084, %v1029, %v1031
        %v1119 = vsel %vm1084, %v1031, %v1033
        %v1120 = vsel %vm1084, %v1033, %v1035
        %v1121 = vsel %vm1084, %v1037, %v1039
        %v1122 = vsel %vm1084, %v1039, %v1041
        %v1123 = vsel %vm1084, %v1041, %v1043
        %v1124 = vsel %vm1084, %v1045, %v1047
        %v1125 = vsel %vm1084, %v1047, %v1049
        %v1126 = vsel %vm1084, %v1049, %v1051
        %v1127 = vsel %vm1084, %v1053, %v1055
        %v1128 = vsel %vm1084, %v1055, %v1057
        %v1129 = vsel %vm1084, %v1057, %v1059
        %v1130 = vsel %vm1084, %v1061, %v1063
        %v1131 = vsel %vm1084, %v1063, %v1065
        %v1132 = vsel %vm1084, %v1065, %v1067
        %v1133 = vsel %vm1084, %v1069, %v1071
        %v1134 = vsel %vm1084, %v1071, %v1073
        %v1135 = vsel %vm1084, %v1073, %v1075
        %v1136 = vsel %vm1084, %v1077, %v1079
        %v1137 = vsel %vm1084, %v1079, %v1081
        %v1138 = vsel %vm1084, %v1081, %v1083
        %vm1193 = vcmask 261120
        %v1195 = vsel %vm1193, %v932, 0
        %v1198 = vsel %vm1193, %v935, 0
        %1200 = vmatpush.bf16.msra.mxu0 %v1106
        %1201 = vmatpush.bf16.msra.mxu0 %v1103
        %1202 = vmatpush.bf16.msra.mxu0 %v1100
        %1203 = vmatpush.bf16.msra.mxu0 %v1097
        %1204 = vmatpush.bf16.msra.mxu0 %v1094
        %1205 = vmatpush.bf16.msra.mxu0 %v1091
        %1206 = vmatpush.bf16.msra.mxu0 %v1088
        %1207 = vmatpush.bf16.msra.mxu0 %v1085
        %1208 = vmatmul.bf16.gmra.mxu0 %v930
        %v1209 = vpop.f32.mrf.mxu0
        %v1210 = vadd.f32 %v893, %v1209
        %v1211 = vpop.f32.mrf.mxu0
        %v1212 = vadd.f32 %v898, %v1211
        %1213 = vmatmul.bf16.gmra.mxu0 %v933
        %v1214 = vpop.f32.mrf.mxu0
        %v1215 = vadd.f32 %v903, %v1214
        %v1216 = vpop.f32.mrf.mxu0
        %v1217 = vadd.f32 %v908, %v1216
        %1218 = vdwg.mxu0
        %1219 = vmatpush.bf16.msra.mxu0 %v1130
        %1220 = vmatpush.bf16.msra.mxu0 %v1127
        %1221 = vmatpush.bf16.msra.mxu0 %v1124
        %1222 = vmatpush.bf16.msra.mxu0 %v1121
        %1223 = vmatpush.bf16.msra.mxu0 %v1118
        %1224 = vmatpush.bf16.msra.mxu0 %v1115
        %1225 = vmatpush.bf16.msra.mxu0 %v1112
        %1226 = vmatpush.bf16.msra.mxu0 %v1109
        %1227 = vmatmul.bf16.gmra.mxu0 %v931
        %v1228 = vpop.f32.mrf.mxu0
        %v1229 = vadd.f32 %v1210, %v1228
        %v1230 = vpop.f32.mrf.mxu0
        %v1231 = vadd.f32 %v1212, %v1230
        %1232 = vmatmul.bf16.gmra.mxu0 %v934
        %v1233 = vpop.f32.mrf.mxu0
        %v1234 = vadd.f32 %v1215, %v1233
        %v1235 = vpop.f32.mrf.mxu0
        %v1236 = vadd.f32 %v1217, %v1235
        %1237 = vdwg.mxu0
        %1238 = vmatpush.bf16.msra.mxu0 0
        %1239 = vmatpush.bf16.msra.mxu0 0
        %1240 = vmatpush.bf16.msra.mxu0 0
        %1241 = vmatpush.bf16.msra.mxu0 0
        %1242 = vmatpush.bf16.msra.mxu0 0
        %1243 = vmatpush.bf16.msra.mxu0 0
        %1244 = vmatpush.bf16.msra.mxu0 %v1136
        %1245 = vmatpush.bf16.msra.mxu0 %v1133
        %1246 = vmatmul.bf16.gmra.mxu0 %v1195
        %v1247 = vpop.f32.mrf.mxu0
        %v1248 = vadd.f32 %v1229, %v1247
        %v1249 = vpop.f32.mrf.mxu0
        %v1250 = vadd.f32 %v1231, %v1249
        %1251 = vmatmul.bf16.gmra.mxu0 %v1198
        %v1252 = vpop.f32.mrf.mxu0
        %v1253 = vadd.f32 %v1234, %v1252
        %v1254 = vpop.f32.mrf.mxu0
        %v1255 = vadd.f32 %v1236, %v1254
        %1256 = vdwg.mxu0
        %1257 = vmatpush.bf16.msra.mxu0 %v1107
        %1258 = vmatpush.bf16.msra.mxu0 %v1104
        %1259 = vmatpush.bf16.msra.mxu0 %v1101
        %1260 = vmatpush.bf16.msra.mxu0 %v1098
        %1261 = vmatpush.bf16.msra.mxu0 %v1095
        %1262 = vmatpush.bf16.msra.mxu0 %v1092
        %1263 = vmatpush.bf16.msra.mxu0 %v1089
        %1264 = vmatpush.bf16.msra.mxu0 %v1086
        %1265 = vmatmul.bf16.gmra.mxu0 %v930
        %v1266 = vpop.f32.mrf.mxu0
        %v1267 = vadd.f32 %v893, %v1266
        %v1268 = vpop.f32.mrf.mxu0
        %v1269 = vadd.f32 %v898, %v1268
        %1270 = vmatmul.bf16.gmra.mxu0 %v933
        %v1271 = vpop.f32.mrf.mxu0
        %v1272 = vadd.f32 %v903, %v1271
        %v1273 = vpop.f32.mrf.mxu0
        %v1274 = vadd.f32 %v908, %v1273
        %1275 = vdwg.mxu0
        %1276 = vmatpush.bf16.msra.mxu0 %v1131
        %1277 = vmatpush.bf16.msra.mxu0 %v1128
        %1278 = vmatpush.bf16.msra.mxu0 %v1125
        %1279 = vmatpush.bf16.msra.mxu0 %v1122
        %1280 = vmatpush.bf16.msra.mxu0 %v1119
        %1281 = vmatpush.bf16.msra.mxu0 %v1116
        %1282 = vmatpush.bf16.msra.mxu0 %v1113
        %1283 = vmatpush.bf16.msra.mxu0 %v1110
        %1284 = vmatmul.bf16.gmra.mxu0 %v931
        %v1285 = vpop.f32.mrf.mxu0
        %v1286 = vadd.f32 %v1267, %v1285
        %v1287 = vpop.f32.mrf.mxu0
        %v1288 = vadd.f32 %v1269, %v1287
        %1289 = vmatmul.bf16.gmra.mxu0 %v934
        %v1290 = vpop.f32.mrf.mxu0
        %v1291 = vadd.f32 %v1272, %v1290
        %v1292 = vpop.f32.mrf.mxu0
        %v1293 = vadd.f32 %v1274, %v1292
        %1294 = vdwg.mxu0
        %1295 = vmatpush.bf16.msra.mxu0 0
        %1296 = vmatpush.bf16.msra.mxu0 0
        %1297 = vmatpush.bf16.msra.mxu0 0
        %1298 = vmatpush.bf16.msra.mxu0 0
        %1299 = vmatpush.bf16.msra.mxu0 0
        %1300 = vmatpush.bf16.msra.mxu0 0
        %1301 = vmatpush.bf16.msra.mxu0 %v1137
        %1302 = vmatpush.bf16.msra.mxu0 %v1134
        %1303 = vmatmul.bf16.gmra.mxu0 %v1195
        %v1304 = vpop.f32.mrf.mxu0
        %v1305 = vadd.f32 %v1286, %v1304
        %v1306 = vpop.f32.mrf.mxu0
        %v1307 = vadd.f32 %v1288, %v1306
        %1308 = vmatmul.bf16.gmra.mxu0 %v1198
        %v1309 = vpop.f32.mrf.mxu0
        %v1310 = vadd.f32 %v1291, %v1309
        %v1311 = vpop.f32.mrf.mxu0
        %v1312 = vadd.f32 %v1293, %v1311
        %1313 = vdwg.mxu0
        %1314 = vmatpush.bf16.msra.mxu0 %v1108
        %1315 = vmatpush.bf16.msra.mxu0 %v1105
        %1316 = vmatpush.bf16.msra.mxu0 %v1102
        %1317 = vmatpush.bf16.msra.mxu0 %v1099
        %1318 = vmatpush.bf16.msra.mxu0 %v1096
        %1319 = vmatpush.bf16.msra.mxu0 %v1093
        %1320 = vmatpush.bf16.msra.mxu0 %v1090
        %1321 = vmatpush.bf16.msra.mxu0 %v1087
        %1322 = vmatmul.bf16.gmra.mxu0 %v930
        %v1323 = vpop.f32.mrf.mxu0
        %v1324 = vadd.f32 %v893, %v1323
        %v1325 = vpop.f32.mrf.mxu0
        %v1326 = vadd.f32 %v898, %v1325
        %1327 = vmatmul.bf16.gmra.mxu0 %v933
        %v1328 = vpop.f32.mrf.mxu0
        %v1329 = vadd.f32 %v903, %v1328
        %v1330 = vpop.f32.mrf.mxu0
        %v1331 = vadd.f32 %v908, %v1330
        %1332 = vdwg.mxu0
        %1333 = vmatpush.bf16.msra.mxu0 %v1132
        %1334 = vmatpush.bf16.msra.mxu0 %v1129
        %1335 = vmatpush.bf16.msra.mxu0 %v1126
        %1336 = vmatpush.bf16.msra.mxu0 %v1123
        %1337 = vmatpush.bf16.msra.mxu0 %v1120
        %1338 = vmatpush.bf16.msra.mxu0 %v1117
        %1339 = vmatpush.bf16.msra.mxu0 %v1114
        %1340 = vmatpush.bf16.msra.mxu0 %v1111
        %1341 = vmatmul.bf16.gmra.mxu0 %v931
        %v1342 = vpop.f32.mrf.mxu0
        %v1343 = vadd.f32 %v1324, %v1342
        %v1344 = vpop.f32.mrf.mxu0
        %v1345 = vadd.f32 %v1326, %v1344
        %1346 = vmatmul.bf16.gmra.mxu0 %v934
        %v1347 = vpop.f32.mrf.mxu0
        %v1348 = vadd.f32 %v1329, %v1347
        %v1349 = vpop.f32.mrf.mxu0
        %v1350 = vadd.f32 %v1331, %v1349
        %1351 = vdwg.mxu0
        %1352 = vmatpush.bf16.msra.mxu0 0
        %1353 = vmatpush.bf16.msra.mxu0 0
        %1354 = vmatpush.bf16.msra.mxu0 0
        %1355 = vmatpush.bf16.msra.mxu0 0
        %1356 = vmatpush.bf16.msra.mxu0 0
        %1357 = vmatpush.bf16.msra.mxu0 0
        %1358 = vmatpush.bf16.msra.mxu0 %v1138
        %1359 = vmatpush.bf16.msra.mxu0 %v1135
        %1360 = vmatmul.bf16.gmra.mxu0 %v1195
        %v1361 = vpop.f32.mrf.mxu0
        %v1362 = vadd.f32 %v1343, %v1361
        %v1363 = vpop.f32.mrf.mxu0
        %v1364 = vadd.f32 %v1345, %v1363
        %1365 = vmatmul.bf16.gmra.mxu0 %v1198
        %v1366 = vpop.f32.mrf.mxu0
        %v1367 = vadd.f32 %v1348, %v1366
        %v1368 = vpop.f32.mrf.mxu0
        %v1369 = vadd.f32 %v1350, %v1368
        %1370 = vdwg.mxu0
        %v1371 = vmax.f32 %v1248, 0.0
        %v1372 = vmax.f32 %v1305, 0.0
        %v1373 = vmax.f32 %v1362, 0.0
        %v1374 = vmax.f32 %v1250, 0.0
        %v1375 = vmax.f32 %v1307, 0.0
        %v1376 = vmax.f32 %v1364, 0.0
        %v1377 = vmax.f32 %v1253, 0.0
        %v1378 = vmax.f32 %v1310, 0.0
        %v1379 = vmax.f32 %v1367, 0.0
        %v1380 = vmax.f32 %v1255, 0.0
        %v1381 = vmax.f32 %v1312, 0.0
        %v1382 = vmax.f32 %v1369, 0.0
        %v1384 = vperm.slane %v611, 0
        %v1385 = vperm.slane %v611, 1
        %v1386 = vperm.slane %v611, 2
        %v1390 = vmul.f32 %v1371, %v1384
        %v1391 = vmul.f32 %v1372, %v1385
        %v1392 = vmul.f32 %v1373, %v1386
        %v1393 = vmul.f32 %v1374, %v1384
        %v1394 = vmul.f32 %v1375, %v1385
        %v1395 = vmul.f32 %v1376, %v1386
        %v1396 = vmul.f32 %v1377, %v1384
        %v1397 = vmul.f32 %v1378, %v1385
        %v1398 = vmul.f32 %v1379, %v1386
        %v1399 = vmul.f32 %v1380, %v1384
        %v1400 = vmul.f32 %v1381, %v1385
        %v1401 = vmul.f32 %v1382, %v1386
        %1402 = vst [vmem:[#allocation3 + $0x8] sm:$0xff] %v1390
        %1403 = vst [vmem:[#allocation3 + $0x10] sm:$0xff] %v1391
        %1404 = vst.msk [vmem:[#allocation3 + $0x18] sm:$0xff] %vm1193, %v1392
        %1405 = vst [vmem:[#allocation3 + $0x28] sm:$0xff] %v1393
        %1406 = vst [vmem:[#allocation3 + $0x30] sm:$0xff] %v1394
        %1407 = vst.msk [vmem:[#allocation3 + $0x38] sm:$0xff] %vm1193, %v1395
        %1408 = vst [vmem:[#allocation3 + $0x48] sm:$0xff] %v1396
        %1409 = vst [vmem:[#allocation3 + $0x50] sm:$0xff] %v1397
        %1410 = vst.msk [vmem:[#allocation3 + $0x58] sm:$0xff] %vm1193, %v1398
        %1411 = vst [vmem:[#allocation3 + $0x68] sm:$0xff] %v1399
        %1412 = vst [vmem:[#allocation3 + $0x70] sm:$0xff] %v1400
        %1413 = vst.msk [vmem:[#allocation3 + $0x78] sm:$0xff] %vm1193, %v1401
        %v1414 = vld [vmem:[%s559] sm:$0xff]
        %v1415 = vld [vmem:[%s559 + $0x8] sm:$0xf]
        %v1416 = vld [vmem:[%s559 + $0xc] sm:$0xff]
        %v1417 = vld [vmem:[%s559 + $0x14] sm:$0xf]
        %v1418 = vld [vmem:[%s559 + $0x18] sm:$0xff]
        %v1419 = vld [vmem:[%s559 + $0x20] sm:$0xf]
        %v1420 = vld [vmem:[%s559 + $0x24] sm:$0xff]
        %v1421 = vld [vmem:[%s559 + $0x2c] sm:$0xf]
        %v1422 = vld [vmem:[%s568] sm:$0xff]
        %v1423 = vld [vmem:[%s568 + $0x8] sm:$0xff]
        %v1424 = vld [vmem:[%s568 + $0x10] sm:$0xff]
        %v1425 = vld [vmem:[%s568 + $0x18] sm:$0xff]
        %v1426 = vld [vmem:[#allocation3] sm:$0xff]
        %v1427 = vld [vmem:[#allocation3 + $0x8] sm:$0xff]
        %v1428 = vld [vmem:[#allocation3 + $0x10] sm:$0xff]
        %v1429 = vld [vmem:[#allocation3 + $0x18] sm:$0xff]
        %v1430 = vld [vmem:[#allocation3 + $0x20] sm:$0xff]
        %v1431 = vld [vmem:[#allocation3 + $0x28] sm:$0xff]
        %v1432 = vld [vmem:[#allocation3 + $0x30] sm:$0xff]
        %v1433 = vld [vmem:[#allocation3 + $0x38] sm:$0xff]
        %v1434 = vld [vmem:[#allocation3 + $0x40] sm:$0xff]
        %v1435 = vld [vmem:[#allocation3 + $0x48] sm:$0xff]
        %v1436 = vld [vmem:[#allocation3 + $0x50] sm:$0xff]
        %v1437 = vld [vmem:[#allocation3 + $0x58] sm:$0xff]
        %v1438 = vld [vmem:[#allocation3 + $0x60] sm:$0xff]
        %v1439 = vld [vmem:[#allocation3 + $0x68] sm:$0xff]
        %v1440 = vld [vmem:[#allocation3 + $0x70] sm:$0xff]
        %v1441 = vld [vmem:[#allocation3 + $0x78] sm:$0xff]
        %v1442 = vpack.c.bf16 %v1427, %v1426
        %v1443 = vpack.c.bf16 %v1429, %v1428
        %v1444 = vpack.c.bf16 %v1431, %v1430
        %v1445 = vpack.c.bf16 %v1433, %v1432
        %v1446 = vpack.c.bf16 %v1435, %v1434
        %v1447 = vpack.c.bf16 %v1437, %v1436
        %v1448 = vpack.c.bf16 %v1439, %v1438
        %v1449 = vpack.c.bf16 %v1441, %v1440
        %v1458 = vunpack.c.l.b16 %v1442
        %v1459 = vunpack.c.h.b16 %v1442
        %v1460 = vunpack.c.l.b16 %v1443
        %v1461 = vunpack.c.h.b16 %v1443
        %v1462 = vunpack.c.l.b16 %v1444
        %v1463 = vunpack.c.h.b16 %v1444
        %v1464 = vunpack.c.l.b16 %v1445
        %v1465 = vunpack.c.h.b16 %v1445
        %v1466 = vunpack.c.l.b16 %v1446
        %v1467 = vunpack.c.h.b16 %v1446
        %v1468 = vunpack.c.l.b16 %v1447
        %v1469 = vunpack.c.h.b16 %v1447
        %v1470 = vunpack.c.l.b16 %v1448
        %v1471 = vunpack.c.h.b16 %v1448
        %v1472 = vunpack.c.l.b16 %v1449
        %v1473 = vunpack.c.h.b16 %v1449
        %v1474 = vpack.c.b16 %v1462, %v1458
        %v1475 = vpack.c.b16 %v1463, %v1459
        %v1476 = vpack.c.b16 %v1464, %v1460
        %v1477 = vpack.c.b16 %v1465, %v1461
        %v1478 = vpack.c.b16 %v1470, %v1466
        %v1479 = vpack.c.b16 %v1471, %v1467
        %v1480 = vpack.c.b16 %v1472, %v1468
        %v1481 = vpack.c.b16 %v1473, %v1469
        %1482 = vrot.lane.b32.xlu0 %v1474, 127
        %v1483 = vpop.permute.xlu0 %1482
        %1484 = vrot.lane.b32.xlu0 %v1475, 127
        %v1485 = vpop.permute.xlu0 %1484
        %1486 = vrot.lane.b32.xlu0 %v1476, 127
        %v1487 = vpop.permute.xlu0 %1486
        %1488 = vrot.lane.b32.xlu0 %v1477, 127
        %v1489 = vpop.permute.xlu0 %1488
        %1490 = vrot.lane.b32.xlu0 %v1478, 127
        %v1491 = vpop.permute.xlu0 %1490
        %1492 = vrot.lane.b32.xlu0 %v1479, 127
        %v1493 = vpop.permute.xlu0 %1492
        %1494 = vrot.lane.b32.xlu0 %v1480, 127
        %v1495 = vpop.permute.xlu0 %1494
        %1496 = vrot.lane.b32.xlu0 %v1481, 127
        %v1497 = vpop.permute.xlu0 %1496
        %v1498 = vsel %vm752, %v1483, %v1485
        %v1499 = vsel %vm752, %v1485, %v1487
        %v1500 = vsel %vm752, %v1487, %v1489
        %v1501 = vsel %vm752, %v1491, %v1493
        %v1502 = vsel %vm752, %v1493, %v1495
        %v1503 = vsel %vm752, %v1495, %v1497
        %1504 = vrot.lane.b32.xlu0 %v1474, 126
        %v1505 = vpop.permute.xlu0 %1504
        %1506 = vrot.lane.b32.xlu0 %v1475, 126
        %v1507 = vpop.permute.xlu0 %1506
        %1508 = vrot.lane.b32.xlu0 %v1476, 126
        %v1509 = vpop.permute.xlu0 %1508
        %1510 = vrot.lane.b32.xlu0 %v1477, 126
        %v1511 = vpop.permute.xlu0 %1510
        %1512 = vrot.lane.b32.xlu0 %v1478, 126
        %v1513 = vpop.permute.xlu0 %1512
        %1514 = vrot.lane.b32.xlu0 %v1479, 126
        %v1515 = vpop.permute.xlu0 %1514
        %1516 = vrot.lane.b32.xlu0 %v1480, 126
        %v1517 = vpop.permute.xlu0 %1516
        %1518 = vrot.lane.b32.xlu0 %v1481, 126
        %v1519 = vpop.permute.xlu0 %1518
        %v1520 = vsel %vm775, %v1505, %v1507
        %v1521 = vsel %vm775, %v1507, %v1509
        %v1522 = vsel %vm775, %v1509, %v1511
        %v1523 = vsel %vm775, %v1513, %v1515
        %v1524 = vsel %vm775, %v1515, %v1517
        %v1525 = vsel %vm775, %v1517, %v1519
        %1526 = vrot.lane.b32.xlu0 %v1474, 110
        %v1527 = vpop.permute.xlu0 %1526
        %1528 = vrot.lane.b32.xlu0 %v1475, 110
        %v1529 = vpop.permute.xlu0 %1528
        %1530 = vrot.lane.b32.xlu0 %v1476, 110
        %v1531 = vpop.permute.xlu0 %1530
        %1532 = vrot.lane.b32.xlu0 %v1477, 110
        %v1533 = vpop.permute.xlu0 %1532
        %1534 = vrot.lane.b32.xlu0 %v1478, 110
        %v1535 = vpop.permute.xlu0 %1534
        %1536 = vrot.lane.b32.xlu0 %v1479, 110
        %v1537 = vpop.permute.xlu0 %1536
        %1538 = vrot.lane.b32.xlu0 %v1480, 110
        %v1539 = vpop.permute.xlu0 %1538
        %1540 = vrot.lane.b32.xlu0 %v1481, 110
        %v1541 = vpop.permute.xlu0 %1540
        %v1542 = vsel %vm798, %v1527, %v1529
        %v1543 = vsel %vm798, %v1529, %v1531
        %v1544 = vsel %vm798, %v1531, %v1533
        %v1545 = vsel %vm798, %v1535, %v1537
        %v1546 = vsel %vm798, %v1537, %v1539
        %v1547 = vsel %vm798, %v1539, %v1541
        %1548 = vrot.lane.b32.xlu0 %v1475, 109
        %v1549 = vpop.permute.xlu0 %1548
        %1550 = vrot.lane.b32.xlu0 %v1476, 109
        %v1551 = vpop.permute.xlu0 %1550
        %1552 = vrot.lane.b32.xlu0 %v1477, 109
        %v1553 = vpop.permute.xlu0 %1552
        %1554 = vrot.lane.b32.xlu0 %v1479, 109
        %v1555 = vpop.permute.xlu0 %1554
        %1556 = vrot.lane.b32.xlu0 %v1480, 109
        %v1557 = vpop.permute.xlu0 %1556
        %1558 = vrot.lane.b32.xlu0 %v1481, 109
        %v1559 = vpop.permute.xlu0 %1558
        %v1560 = vsel %vm817, %v1549, %v1551
        %v1561 = vsel %vm817, %v1551, %v1553
        %v1562 = vsel %vm817, %v1555, %v1557
        %v1563 = vsel %vm817, %v1557, %v1559
        %1564 = vrot.lane.b32.xlu0 %v1475, 108
        %v1565 = vpop.permute.xlu0 %1564
        %1566 = vrot.lane.b32.xlu0 %v1476, 108
        %v1567 = vpop.permute.xlu0 %1566
        %1568 = vrot.lane.b32.xlu0 %v1477, 108
        %v1569 = vpop.permute.xlu0 %1568
        %1570 = vrot.lane.b32.xlu0 %v1479, 108
        %v1571 = vpop.permute.xlu0 %1570
        %1572 = vrot.lane.b32.xlu0 %v1480, 108
        %v1573 = vpop.permute.xlu0 %1572
        %1574 = vrot.lane.b32.xlu0 %v1481, 108
        %v1575 = vpop.permute.xlu0 %1574
        %v1576 = vsel %vm834, %v1565, %v1567
        %v1577 = vsel %vm834, %v1567, %v1569
        %v1578 = vsel %vm834, %v1571, %v1573
        %v1579 = vsel %vm834, %v1573, %v1575
        %1580 = vrot.lane.b32.xlu0 %v1475, 92
        %v1581 = vpop.permute.xlu0 %1580
        %1582 = vrot.lane.b32.xlu0 %v1476, 92
        %v1583 = vpop.permute.xlu0 %1582
        %1584 = vrot.lane.b32.xlu0 %v1477, 92
        %v1585 = vpop.permute.xlu0 %1584
        %1586 = vrot.lane.b32.xlu0 %v1479, 92
        %v1587 = vpop.permute.xlu0 %1586
        %1588 = vrot.lane.b32.xlu0 %v1480, 92
        %v1589 = vpop.permute.xlu0 %1588
        %1590 = vrot.lane.b32.xlu0 %v1481, 92
        %v1591 = vpop.permute.xlu0 %1590
        %v1592 = vsel %vm851, %v1581, %v1583
        %v1593 = vsel %vm851, %v1583, %v1585
        %v1594 = vsel %vm851, %v1587, %v1589
        %v1595 = vsel %vm851, %v1589, %v1591
        %1596 = vrot.lane.b32.xlu0 %v1475, 91
        %v1597 = vpop.permute.xlu0 %1596
        %1598 = vrot.lane.b32.xlu0 %v1476, 91
        %v1599 = vpop.permute.xlu0 %1598
        %1600 = vrot.lane.b32.xlu0 %v1477, 91
        %v1601 = vpop.permute.xlu0 %1600
        %1602 = vrot.lane.b32.xlu0 %v1479, 91
        %v1603 = vpop.permute.xlu0 %1602
        %1604 = vrot.lane.b32.xlu0 %v1480, 91
        %v1605 = vpop.permute.xlu0 %1604
        %1606 = vrot.lane.b32.xlu0 %v1481, 91
        %v1607 = vpop.permute.xlu0 %1606
        %v1608 = vsel %vm868, %v1597, %v1599
        %v1609 = vsel %vm868, %v1599, %v1601
        %v1610 = vsel %vm868, %v1603, %v1605
        %v1611 = vsel %vm868, %v1605, %v1607
        %1612 = vrot.lane.b32.xlu0 %v1475, 90
        %v1613 = vpop.permute.xlu0 %1612
        %1614 = vrot.lane.b32.xlu0 %v1476, 90
        %v1615 = vpop.permute.xlu0 %1614
        %1616 = vrot.lane.b32.xlu0 %v1477, 90
        %v1617 = vpop.permute.xlu0 %1616
        %1618 = vrot.lane.b32.xlu0 %v1479, 90
        %v1619 = vpop.permute.xlu0 %1618
        %1620 = vrot.lane.b32.xlu0 %v1480, 90
        %v1621 = vpop.permute.xlu0 %1620
        %1622 = vrot.lane.b32.xlu0 %v1481, 90
        %v1623 = vpop.permute.xlu0 %1622
        %v1624 = vsel %vm885, %v1613, %v1615
        %v1625 = vsel %vm885, %v1615, %v1617
        %v1626 = vsel %vm885, %v1619, %v1621
        %v1627 = vsel %vm885, %v1621, %v1623
        %1629 = vset.pattern.permute.xlu0 0
        %1630 = vperm.xlu0 %1629, %v1422
        %v1631 = vpop.permute.xlu0 %1630
        %1634 = vset.pattern.permute.xlu0 0
        %1635 = vperm.xlu0 %1634, %v1423
        %v1636 = vpop.permute.xlu0 %1635
        %1639 = vset.pattern.permute.xlu0 0
        %1640 = vperm.xlu0 %1639, %v1424
        %v1641 = vpop.permute.xlu0 %1640
        %1644 = vset.pattern.permute.xlu0 0
        %1645 = vperm.xlu0 %1644, %v1425
        %v1646 = vpop.permute.xlu0 %1645
        %v1656 = vunpack.c.l.b16 %v1414
        %v1657 = vunpack.c.h.b16 %v1414
        %v1658 = vunpack.c.l.b16 %v1415
        %v1659 = vunpack.c.l.b16 %v1416
        %v1660 = vunpack.c.h.b16 %v1416
        %v1661 = vunpack.c.l.b16 %v1417
        %v1662 = vunpack.c.l.b16 %v1418
        %v1663 = vunpack.c.h.b16 %v1418
        %v1664 = vunpack.c.l.b16 %v1419
        %v1665 = vunpack.c.l.b16 %v1420
        %v1666 = vunpack.c.h.b16 %v1420
        %v1667 = vunpack.c.l.b16 %v1421
        %v1668 = vpack.c.b16 %v1659, %v1656
        %v1669 = vpack.c.b16 %v1660, %v1657
        %v1670 = vpack.c.b16 %v1661, %v1658
        %v1671 = vpack.c.b16 %v1665, %v1662
        %v1672 = vpack.c.b16 %v1666, %v1663
        %v1673 = vpack.c.b16 %v1667, %v1664
        %1678 = vrot.lane.b32.xlu0 %v1474, 19
        %v1679 = vpop.permute.xlu0 %1678
        %1680 = vrot.lane.b32.xlu0 %v1475, 19
        %v1681 = vpop.permute.xlu0 %1680
        %1682 = vrot.lane.b32.xlu0 %v1476, 19
        %v1683 = vpop.permute.xlu0 %1682
        %1684 = vrot.lane.b32.xlu0 %v1477, 19
        %v1685 = vpop.permute.xlu0 %1684
        %1686 = vrot.lane.b32.xlu0 %v1478, 19
        %v1687 = vpop.permute.xlu0 %1686
        %1688 = vrot.lane.b32.xlu0 %v1479, 19
        %v1689 = vpop.permute.xlu0 %1688
        %1690 = vrot.lane.b32.xlu0 %v1480, 19
        %v1691 = vpop.permute.xlu0 %1690
        %1692 = vrot.lane.b32.xlu0 %v1481, 19
        %v1693 = vpop.permute.xlu0 %1692
        %1694 = vrot.lane.b32.xlu0 %v1498, 19
        %v1695 = vpop.permute.xlu0 %1694
        %1696 = vrot.lane.b32.xlu0 %v1499, 19
        %v1697 = vpop.permute.xlu0 %1696
        %1698 = vrot.lane.b32.xlu0 %v1500, 19
        %v1699 = vpop.permute.xlu0 %1698
        %1700 = vrot.lane.b32.xlu0 %v1489, 19
        %v1701 = vpop.permute.xlu0 %1700
        %1702 = vrot.lane.b32.xlu0 %v1501, 19
        %v1703 = vpop.permute.xlu0 %1702
        %1704 = vrot.lane.b32.xlu0 %v1502, 19
        %v1705 = vpop.permute.xlu0 %1704
        %1706 = vrot.lane.b32.xlu0 %v1503, 19
        %v1707 = vpop.permute.xlu0 %1706
        %1708 = vrot.lane.b32.xlu0 %v1497, 19
        %v1709 = vpop.permute.xlu0 %1708
        %1710 = vrot.lane.b32.xlu0 %v1520, 19
        %v1711 = vpop.permute.xlu0 %1710
        %1712 = vrot.lane.b32.xlu0 %v1521, 19
        %v1713 = vpop.permute.xlu0 %1712
        %1714 = vrot.lane.b32.xlu0 %v1522, 19
        %v1715 = vpop.permute.xlu0 %1714
        %1716 = vrot.lane.b32.xlu0 %v1511, 19
        %v1717 = vpop.permute.xlu0 %1716
        %1718 = vrot.lane.b32.xlu0 %v1523, 19
        %v1719 = vpop.permute.xlu0 %1718
        %1720 = vrot.lane.b32.xlu0 %v1524, 19
        %v1721 = vpop.permute.xlu0 %1720
        %1722 = vrot.lane.b32.xlu0 %v1525, 19
        %v1723 = vpop.permute.xlu0 %1722
        %1724 = vrot.lane.b32.xlu0 %v1519, 19
        %v1725 = vpop.permute.xlu0 %1724
        %1726 = vrot.lane.b32.xlu0 %v1542, 19
        %v1727 = vpop.permute.xlu0 %1726
        %1728 = vrot.lane.b32.xlu0 %v1543, 19
        %v1729 = vpop.permute.xlu0 %1728
        %1730 = vrot.lane.b32.xlu0 %v1544, 19
        %v1731 = vpop.permute.xlu0 %1730
        %1732 = vrot.lane.b32.xlu0 %v1533, 19
        %v1733 = vpop.permute.xlu0 %1732
        %1734 = vrot.lane.b32.xlu0 %v1545, 19
        %v1735 = vpop.permute.xlu0 %1734
        %1736 = vrot.lane.b32.xlu0 %v1546, 19
        %v1737 = vpop.permute.xlu0 %1736
        %1738 = vrot.lane.b32.xlu0 %v1547, 19
        %v1739 = vpop.permute.xlu0 %1738
        %1740 = vrot.lane.b32.xlu0 %v1541, 19
        %v1741 = vpop.permute.xlu0 %1740
        %1742 = vrot.lane.b32.xlu0 %v1549, 19
        %v1743 = vpop.permute.xlu0 %1742
        %1744 = vrot.lane.b32.xlu0 %v1560, 19
        %v1745 = vpop.permute.xlu0 %1744
        %1746 = vrot.lane.b32.xlu0 %v1561, 19
        %v1747 = vpop.permute.xlu0 %1746
        %1748 = vrot.lane.b32.xlu0 %v1553, 19
        %v1749 = vpop.permute.xlu0 %1748
        %1750 = vrot.lane.b32.xlu0 %v1555, 19
        %v1751 = vpop.permute.xlu0 %1750
        %1752 = vrot.lane.b32.xlu0 %v1562, 19
        %v1753 = vpop.permute.xlu0 %1752
        %1754 = vrot.lane.b32.xlu0 %v1563, 19
        %v1755 = vpop.permute.xlu0 %1754
        %1756 = vrot.lane.b32.xlu0 %v1559, 19
        %v1757 = vpop.permute.xlu0 %1756
        %1758 = vrot.lane.b32.xlu0 %v1565, 19
        %v1759 = vpop.permute.xlu0 %1758
        %1760 = vrot.lane.b32.xlu0 %v1576, 19
        %v1761 = vpop.permute.xlu0 %1760
        %1762 = vrot.lane.b32.xlu0 %v1577, 19
        %v1763 = vpop.permute.xlu0 %1762
        %1764 = vrot.lane.b32.xlu0 %v1569, 19
        %v1765 = vpop.permute.xlu0 %1764
        %1766 = vrot.lane.b32.xlu0 %v1571, 19
        %v1767 = vpop.permute.xlu0 %1766
        %1768 = vrot.lane.b32.xlu0 %v1578, 19
        %v1769 = vpop.permute.xlu0 %1768
        %1770 = vrot.lane.b32.xlu0 %v1579, 19
        %v1771 = vpop.permute.xlu0 %1770
        %1772 = vrot.lane.b32.xlu0 %v1575, 19
        %v1773 = vpop.permute.xlu0 %1772
        %1774 = vrot.lane.b32.xlu0 %v1581, 19
        %v1775 = vpop.permute.xlu0 %1774
        %1776 = vrot.lane.b32.xlu0 %v1592, 19
        %v1777 = vpop.permute.xlu0 %1776
        %1778 = vrot.lane.b32.xlu0 %v1593, 19
        %v1779 = vpop.permute.xlu0 %1778
        %1780 = vrot.lane.b32.xlu0 %v1585, 19
        %v1781 = vpop.permute.xlu0 %1780
        %1782 = vrot.lane.b32.xlu0 %v1587, 19
        %v1783 = vpop.permute.xlu0 %1782
        %1784 = vrot.lane.b32.xlu0 %v1594, 19
        %v1785 = vpop.permute.xlu0 %1784
        %1786 = vrot.lane.b32.xlu0 %v1595, 19
        %v1787 = vpop.permute.xlu0 %1786
        %1788 = vrot.lane.b32.xlu0 %v1591, 19
        %v1789 = vpop.permute.xlu0 %1788
        %1790 = vrot.lane.b32.xlu0 %v1597, 19
        %v1791 = vpop.permute.xlu0 %1790
        %1792 = vrot.lane.b32.xlu0 %v1608, 19
        %v1793 = vpop.permute.xlu0 %1792
        %1794 = vrot.lane.b32.xlu0 %v1609, 19
        %v1795 = vpop.permute.xlu0 %1794
        %1796 = vrot.lane.b32.xlu0 %v1601, 19
        %v1797 = vpop.permute.xlu0 %1796
        %1798 = vrot.lane.b32.xlu0 %v1603, 19
        %v1799 = vpop.permute.xlu0 %1798
        %1800 = vrot.lane.b32.xlu0 %v1610, 19
        %v1801 = vpop.permute.xlu0 %1800
        %1802 = vrot.lane.b32.xlu0 %v1611, 19
        %v1803 = vpop.permute.xlu0 %1802
        %1804 = vrot.lane.b32.xlu0 %v1607, 19
        %v1805 = vpop.permute.xlu0 %1804
        %1806 = vrot.lane.b32.xlu0 %v1613, 19
        %v1807 = vpop.permute.xlu0 %1806
        %1808 = vrot.lane.b32.xlu0 %v1624, 19
        %v1809 = vpop.permute.xlu0 %1808
        %1810 = vrot.lane.b32.xlu0 %v1625, 19
        %v1811 = vpop.permute.xlu0 %1810
        %1812 = vrot.lane.b32.xlu0 %v1617, 19
        %v1813 = vpop.permute.xlu0 %1812
        %1814 = vrot.lane.b32.xlu0 %v1619, 19
        %v1815 = vpop.permute.xlu0 %1814
        %1816 = vrot.lane.b32.xlu0 %v1626, 19
        %v1817 = vpop.permute.xlu0 %1816
        %1818 = vrot.lane.b32.xlu0 %v1627, 19
        %v1819 = vpop.permute.xlu0 %1818
        %1820 = vrot.lane.b32.xlu0 %v1623, 19
        %v1821 = vpop.permute.xlu0 %1820
        %v1822 = vsel %vm1084, %v1679, %v1681
        %v1823 = vsel %vm1084, %v1681, %v1683
        %v1824 = vsel %vm1084, %v1683, %v1685
        %v1825 = vsel %vm1084, %v1687, %v1689
        %v1826 = vsel %vm1084, %v1689, %v1691
        %v1827 = vsel %vm1084, %v1691, %v1693
        %v1828 = vsel %vm1084, %v1695, %v1697
        %v1829 = vsel %vm1084, %v1697, %v1699
        %v1830 = vsel %vm1084, %v1699, %v1701
        %v1831 = vsel %vm1084, %v1703, %v1705
        %v1832 = vsel %vm1084, %v1705, %v1707
        %v1833 = vsel %vm1084, %v1707, %v1709
        %v1834 = vsel %vm1084, %v1711, %v1713
        %v1835 = vsel %vm1084, %v1713, %v1715
        %v1836 = vsel %vm1084, %v1715, %v1717
        %v1837 = vsel %vm1084, %v1719, %v1721
        %v1838 = vsel %vm1084, %v1721, %v1723
        %v1839 = vsel %vm1084, %v1723, %v1725
        %v1840 = vsel %vm1084, %v1727, %v1729
        %v1841 = vsel %vm1084, %v1729, %v1731
        %v1842 = vsel %vm1084, %v1731, %v1733
        %v1843 = vsel %vm1084, %v1735, %v1737
        %v1844 = vsel %vm1084, %v1737, %v1739
        %v1845 = vsel %vm1084, %v1739, %v1741
        %v1846 = vsel %vm1084, %v1743, %v1745
        %v1847 = vsel %vm1084, %v1745, %v1747
        %v1848 = vsel %vm1084, %v1747, %v1749
        %v1849 = vsel %vm1084, %v1751, %v1753
        %v1850 = vsel %vm1084, %v1753, %v1755
        %v1851 = vsel %vm1084, %v1755, %v1757
        %v1852 = vsel %vm1084, %v1759, %v1761
        %v1853 = vsel %vm1084, %v1761, %v1763
        %v1854 = vsel %vm1084, %v1763, %v1765
        %v1855 = vsel %vm1084, %v1767, %v1769
        %v1856 = vsel %vm1084, %v1769, %v1771
        %v1857 = vsel %vm1084, %v1771, %v1773
        %v1858 = vsel %vm1084, %v1775, %v1777
        %v1859 = vsel %vm1084, %v1777, %v1779
        %v1860 = vsel %vm1084, %v1779, %v1781
        %v1861 = vsel %vm1084, %v1783, %v1785
        %v1862 = vsel %vm1084, %v1785, %v1787
        %v1863 = vsel %vm1084, %v1787, %v1789
        %v1864 = vsel %vm1084, %v1791, %v1793
        %v1865 = vsel %vm1084, %v1793, %v1795
        %v1866 = vsel %vm1084, %v1795, %v1797
        %v1867 = vsel %vm1084, %v1799, %v1801
        %v1868 = vsel %vm1084, %v1801, %v1803
        %v1869 = vsel %vm1084, %v1803, %v1805
        %v1870 = vsel %vm1084, %v1807, %v1809
        %v1871 = vsel %vm1084, %v1809, %v1811
        %v1872 = vsel %vm1084, %v1811, %v1813
        %v1873 = vsel %vm1084, %v1815, %v1817
        %v1874 = vsel %vm1084, %v1817, %v1819
        %v1875 = vsel %vm1084, %v1819, %v1821
        %v1931 = vsel %vm1193, %v1670, 0
        %v1934 = vsel %vm1193, %v1673, 0
        %1936 = vmatpush.bf16.msra.mxu0 %v1843
        %1937 = vmatpush.bf16.msra.mxu0 %v1840
        %1938 = vmatpush.bf16.msra.mxu0 %v1837
        %1939 = vmatpush.bf16.msra.mxu0 %v1834
        %1940 = vmatpush.bf16.msra.mxu0 %v1831
        %1941 = vmatpush.bf16.msra.mxu0 %v1828
        %1942 = vmatpush.bf16.msra.mxu0 %v1825
        %1943 = vmatpush.bf16.msra.mxu0 %v1822
        %1944 = vmatmul.bf16.gmra.mxu0 %v1668
        %v1945 = vpop.f32.mrf.mxu0
        %v1946 = vadd.f32 %v1631, %v1945
        %v1947 = vpop.f32.mrf.mxu0
        %v1948 = vadd.f32 %v1636, %v1947
        %1949 = vmatmul.bf16.gmra.mxu0 %v1671
        %v1950 = vpop.f32.mrf.mxu0
        %v1951 = vadd.f32 %v1641, %v1950
        %v1952 = vpop.f32.mrf.mxu0
        %v1953 = vadd.f32 %v1646, %v1952
        %1954 = vdwg.mxu0
        %1955 = vmatpush.bf16.msra.mxu0 %v1867
        %1956 = vmatpush.bf16.msra.mxu0 %v1864
        %1957 = vmatpush.bf16.msra.mxu0 %v1861
        %1958 = vmatpush.bf16.msra.mxu0 %v1858
        %1959 = vmatpush.bf16.msra.mxu0 %v1855
        %1960 = vmatpush.bf16.msra.mxu0 %v1852
        %1961 = vmatpush.bf16.msra.mxu0 %v1849
        %1962 = vmatpush.bf16.msra.mxu0 %v1846
        %1963 = vmatmul.bf16.gmra.mxu0 %v1669
        %v1964 = vpop.f32.mrf.mxu0
        %v1965 = vadd.f32 %v1946, %v1964
        %v1966 = vpop.f32.mrf.mxu0
        %v1967 = vadd.f32 %v1948, %v1966
        %1968 = vmatmul.bf16.gmra.mxu0 %v1672
        %v1969 = vpop.f32.mrf.mxu0
        %v1970 = vadd.f32 %v1951, %v1969
        %v1971 = vpop.f32.mrf.mxu0
        %v1972 = vadd.f32 %v1953, %v1971
        %1973 = vdwg.mxu0
        %1974 = vmatpush.bf16.msra.mxu0 0
        %1975 = vmatpush.bf16.msra.mxu0 0
        %1976 = vmatpush.bf16.msra.mxu0 0
        %1977 = vmatpush.bf16.msra.mxu0 0
        %1978 = vmatpush.bf16.msra.mxu0 0
        %1979 = vmatpush.bf16.msra.mxu0 0
        %1980 = vmatpush.bf16.msra.mxu0 %v1873
        %1981 = vmatpush.bf16.msra.mxu0 %v1870
        %1982 = vmatmul.bf16.gmra.mxu0 %v1931
        %v1983 = vpop.f32.mrf.mxu0
        %v1984 = vadd.f32 %v1965, %v1983
        %v1985 = vpop.f32.mrf.mxu0
        %v1986 = vadd.f32 %v1967, %v1985
        %1987 = vmatmul.bf16.gmra.mxu0 %v1934
        %v1988 = vpop.f32.mrf.mxu0
        %v1989 = vadd.f32 %v1970, %v1988
        %v1990 = vpop.f32.mrf.mxu0
        %v1991 = vadd.f32 %v1972, %v1990
        %1992 = vdwg.mxu0
        %1993 = vmatpush.bf16.msra.mxu0 %v1844
        %1994 = vmatpush.bf16.msra.mxu0 %v1841
        %1995 = vmatpush.bf16.msra.mxu0 %v1838
        %1996 = vmatpush.bf16.msra.mxu0 %v1835
        %1997 = vmatpush.bf16.msra.mxu0 %v1832
        %1998 = vmatpush.bf16.msra.mxu0 %v1829
        %1999 = vmatpush.bf16.msra.mxu0 %v1826
        %2000 = vmatpush.bf16.msra.mxu0 %v1823
        %2001 = vmatmul.bf16.gmra.mxu0 %v1668
        %v2002 = vpop.f32.mrf.mxu0
        %v2003 = vadd.f32 %v1631, %v2002
        %v2004 = vpop.f32.mrf.mxu0
        %v2005 = vadd.f32 %v1636, %v2004
        %2006 = vmatmul.bf16.gmra.mxu0 %v1671
        %v2007 = vpop.f32.mrf.mxu0
        %v2008 = vadd.f32 %v1641, %v2007
        %v2009 = vpop.f32.mrf.mxu0
        %v2010 = vadd.f32 %v1646, %v2009
        %2011 = vdwg.mxu0
        %2012 = vmatpush.bf16.msra.mxu0 %v1868
        %2013 = vmatpush.bf16.msra.mxu0 %v1865
        %2014 = vmatpush.bf16.msra.mxu0 %v1862
        %2015 = vmatpush.bf16.msra.mxu0 %v1859
        %2016 = vmatpush.bf16.msra.mxu0 %v1856
        %2017 = vmatpush.bf16.msra.mxu0 %v1853
        %2018 = vmatpush.bf16.msra.mxu0 %v1850
        %2019 = vmatpush.bf16.msra.mxu0 %v1847
        %2020 = vmatmul.bf16.gmra.mxu0 %v1669
        %v2021 = vpop.f32.mrf.mxu0
        %v2022 = vadd.f32 %v2003, %v2021
        %v2023 = vpop.f32.mrf.mxu0
        %v2024 = vadd.f32 %v2005, %v2023
        %2025 = vmatmul.bf16.gmra.mxu0 %v1672
        %v2026 = vpop.f32.mrf.mxu0
        %v2027 = vadd.f32 %v2008, %v2026
        %v2028 = vpop.f32.mrf.mxu0
        %v2029 = vadd.f32 %v2010, %v2028
        %2030 = vdwg.mxu0
        %2031 = vmatpush.bf16.msra.mxu0 0
        %2032 = vmatpush.bf16.msra.mxu0 0
        %2033 = vmatpush.bf16.msra.mxu0 0
        %2034 = vmatpush.bf16.msra.mxu0 0
        %2035 = vmatpush.bf16.msra.mxu0 0
        %2036 = vmatpush.bf16.msra.mxu0 0
        %2037 = vmatpush.bf16.msra.mxu0 %v1874
        %2038 = vmatpush.bf16.msra.mxu0 %v1871
        %2039 = vmatmul.bf16.gmra.mxu0 %v1931
        %v2040 = vpop.f32.mrf.mxu0
        %v2041 = vadd.f32 %v2022, %v2040
        %v2042 = vpop.f32.mrf.mxu0
        %v2043 = vadd.f32 %v2024, %v2042
        %2044 = vmatmul.bf16.gmra.mxu0 %v1934
        %v2045 = vpop.f32.mrf.mxu0
        %v2046 = vadd.f32 %v2027, %v2045
        %v2047 = vpop.f32.mrf.mxu0
        %v2048 = vadd.f32 %v2029, %v2047
        %2049 = vdwg.mxu0
        %2050 = vmatpush.bf16.msra.mxu0 %v1845
        %2051 = vmatpush.bf16.msra.mxu0 %v1842
        %2052 = vmatpush.bf16.msra.mxu0 %v1839
        %2053 = vmatpush.bf16.msra.mxu0 %v1836
        %2054 = vmatpush.bf16.msra.mxu0 %v1833
        %2055 = vmatpush.bf16.msra.mxu0 %v1830
        %2056 = vmatpush.bf16.msra.mxu0 %v1827
        %2057 = vmatpush.bf16.msra.mxu0 %v1824
        %2058 = vmatmul.bf16.gmra.mxu0 %v1668
        %v2059 = vpop.f32.mrf.mxu0
        %v2060 = vadd.f32 %v1631, %v2059
        %v2061 = vpop.f32.mrf.mxu0
        %v2062 = vadd.f32 %v1636, %v2061
        %2063 = vmatmul.bf16.gmra.mxu0 %v1671
        %v2064 = vpop.f32.mrf.mxu0
        %v2065 = vadd.f32 %v1641, %v2064
        %v2066 = vpop.f32.mrf.mxu0
        %v2067 = vadd.f32 %v1646, %v2066
        %2068 = vdwg.mxu0
        %2069 = vmatpush.bf16.msra.mxu0 %v1869
        %2070 = vmatpush.bf16.msra.mxu0 %v1866
        %2071 = vmatpush.bf16.msra.mxu0 %v1863
        %2072 = vmatpush.bf16.msra.mxu0 %v1860
        %2073 = vmatpush.bf16.msra.mxu0 %v1857
        %2074 = vmatpush.bf16.msra.mxu0 %v1854
        %2075 = vmatpush.bf16.msra.mxu0 %v1851
        %2076 = vmatpush.bf16.msra.mxu0 %v1848
        %2077 = vmatmul.bf16.gmra.mxu0 %v1669
        %v2078 = vpop.f32.mrf.mxu0
        %v2079 = vadd.f32 %v2060, %v2078
        %v2080 = vpop.f32.mrf.mxu0
        %v2081 = vadd.f32 %v2062, %v2080
        %2082 = vmatmul.bf16.gmra.mxu0 %v1672
        %v2083 = vpop.f32.mrf.mxu0
        %v2084 = vadd.f32 %v2065, %v2083
        %v2085 = vpop.f32.mrf.mxu0
        %v2086 = vadd.f32 %v2067, %v2085
        %2087 = vdwg.mxu0
        %2088 = vmatpush.bf16.msra.mxu0 0
        %2089 = vmatpush.bf16.msra.mxu0 0
        %2090 = vmatpush.bf16.msra.mxu0 0
        %2091 = vmatpush.bf16.msra.mxu0 0
        %2092 = vmatpush.bf16.msra.mxu0 0
        %2093 = vmatpush.bf16.msra.mxu0 0
        %2094 = vmatpush.bf16.msra.mxu0 %v1875
        %2095 = vmatpush.bf16.msra.mxu0 %v1872
        %2096 = vmatmul.bf16.gmra.mxu0 %v1931
        %v2097 = vpop.f32.mrf.mxu0
        %v2098 = vadd.f32 %v2079, %v2097
        %v2099 = vpop.f32.mrf.mxu0
        %v2100 = vadd.f32 %v2081, %v2099
        %2101 = vmatmul.bf16.gmra.mxu0 %v1934
        %v2102 = vpop.f32.mrf.mxu0
        %v2103 = vadd.f32 %v2084, %v2102
        %v2104 = vpop.f32.mrf.mxu0
        %v2105 = vadd.f32 %v2086, %v2104
        %2106 = vdwg.mxu0
        %v2107 = vmul.f32 %v1984, %v1384
        %v2108 = vmul.f32 %v2041, %v1385
        %v2109 = vmul.f32 %v2098, %v1386
        %v2110 = vmul.f32 %v1986, %v1384
        %v2111 = vmul.f32 %v2043, %v1385
        %v2112 = vmul.f32 %v2100, %v1386
        %v2113 = vmul.f32 %v1989, %v1384
        %v2114 = vmul.f32 %v2046, %v1385
        %v2115 = vmul.f32 %v2103, %v1386
        %v2116 = vmul.f32 %v1991, %v1384
        %v2117 = vmul.f32 %v2048, %v1385
        %v2118 = vmul.f32 %v2105, %v1386
        %v2119 = vadd.f32 %v2107, %v2108
        %v2120 = vsel %vm1193, %v2109, 0.0
        %v2121 = vadd.f32 %v2119, %v2120
        %2122 = vadd.xlane.f32.xlu0 %v2121
        %v2123 = vpop.xlane.xlu0 %2122
        %v2124 = vadd.f32 %v2110, %v2111
        %v2125 = vsel %vm1193, %v2112, 0.0
        %v2126 = vadd.f32 %v2124, %v2125
        %2127 = vadd.xlane.f32.xlu0 %v2126
        %v2128 = vpop.xlane.xlu0 %2127
        %v2129 = vadd.f32 %v2113, %v2114
        %v2130 = vsel %vm1193, %v2115, 0.0
        %v2131 = vadd.f32 %v2129, %v2130
        %2132 = vadd.xlane.f32.xlu0 %v2131
        %v2133 = vpop.xlane.xlu0 %2132
        %v2134 = vadd.f32 %v2116, %v2117
        %v2135 = vsel %vm1193, %v2118, 0.0
        %v2136 = vadd.f32 %v2134, %v2135
        %2137 = vadd.xlane.f32.xlu0 %v2136
        %v2138 = vpop.xlane.xlu0 %2137
        %v2139 = vmul.f32 %v2123, 0.00390625
        %v2140 = vmul.f32 %v2128, 0.00390625
        %v2141 = vmul.f32 %v2133, 0.00390625
        %v2142 = vmul.f32 %v2138, 0.00390625
        %v2143 = vld [vmem:[%s576] sm:$0xf]
        %v2144 = vld [vmem:[%s584] sm:$0xf]
        %v2146 = vsel %vm1193, %v2143, 0
        %2148 = vmatpush.msra.mxu0 0.0
        %2149 = vmatpush.msra.mxu0 0.0
        %2150 = vmatpush.msra.mxu0 0.0
        %2151 = vmatpush.msra.mxu0 0.0
        %2152 = vmatpush.msra.mxu0 0.0
        %2153 = vmatpush.msra.mxu0 0.0
        %2154 = vmatpush.msra.mxu0 0.0
        %2155 = vmatpush.msra.mxu0 0.0
        %2156 = vmatpush.msra.mxu0 0.0
        %2157 = vmatpush.msra.mxu0 0.0
        %2158 = vmatpush.msra.mxu0 0.0
        %2159 = vmatpush.msra.mxu0 0.0
        %2160 = vmatpush.msra.mxu0 %v2142
        %2161 = vmatpush.msra.mxu0 %v2141
        %2162 = vmatpush.msra.mxu0 %v2140
        %2163 = vmatpush.msra.mxu0 %v2139
        %2164 = vmatmul.f32.gmra.mxu0 %v2146
        %v2165 = vpop.f32.mrf.mxu0
        %v2166 = vadd.f32 %v2144, %v2165
        %2167 = vdwg.mxu0
        %v2168 = vmax.f32 %v2166, 0.0
        %v2169 = vld [vmem:[%s593] sm:$0xff]
        %v2170 = vld [vmem:[%s593 + $0x8] sm:$0xff]
        %v2171 = vld [vmem:[%s593 + $0x10] sm:$0xff]
        %v2172 = vld [vmem:[%s593 + $0x18] sm:$0xff]
        %v2173 = vld [vmem:[%s602] sm:$0xff]
        %v2174 = vld [vmem:[%s602 + $0x8] sm:$0xff]
        %v2175 = vld [vmem:[%s602 + $0x10] sm:$0xff]
        %v2176 = vld [vmem:[%s602 + $0x18] sm:$0xff]
        %vm2177 = vcmask 31744
        %v2179 = vsel %vm2177, %v2169, 0
        %v2182 = vsel %vm2177, %v2170, 0
        %v2185 = vsel %vm2177, %v2171, 0
        %v2188 = vsel %vm2177, %v2172, 0
        %vm2190 = vcmask 1043456
        %v2192 = vsel %vm2190, %v2168, 0
        %2194 = vmatpush.msra.mxu0 0.0
        %2195 = vmatpush.msra.mxu0 0.0
        %2196 = vmatpush.msra.mxu0 0.0
        %2197 = vmatpush.msra.mxu0 0.0
        %2198 = vmatpush.msra.mxu0 0.0
        %2199 = vmatpush.msra.mxu0 0.0
        %2200 = vmatpush.msra.mxu0 0.0
        %2201 = vmatpush.msra.mxu0 0.0
        %2202 = vmatpush.msra.mxu0 0.0
        %2203 = vmatpush.msra.mxu0 0.0
        %2204 = vmatpush.msra.mxu0 0.0
        %2205 = vmatpush.msra.mxu0 0.0
        %2206 = vmatpush.msra.mxu0 0.0
        %2207 = vmatpush.msra.mxu0 0.0
        %2208 = vmatpush.msra.mxu0 0.0
        %2209 = vmatpush.msra.mxu0 %v2192
        %2210 = vmatmul.f32.gmra.mxu0 %v2179
        %v2211 = vpop.f32.mrf.mxu0
        %v2212 = vadd.f32 %v2173, %v2211
        %2213 = vmatmul.f32.gmra.mxu0 %v2182
        %v2214 = vpop.f32.mrf.mxu0
        %v2215 = vadd.f32 %v2174, %v2214
        %2216 = vmatmul.f32.gmra.mxu0 %v2185
        %v2217 = vpop.f32.mrf.mxu0
        %v2218 = vadd.f32 %v2175, %v2217
        %2219 = vmatmul.f32.gmra.mxu0 %v2188
        %v2220 = vpop.f32.mrf.mxu0
        %v2221 = vadd.f32 %v2176, %v2220
        %2222 = vdwg.mxu0
        %v2223 = vxor.u32 %v2212, 2147483648
        %v2224 = vxor.u32 %v2215, 2147483648
        %v2225 = vxor.u32 %v2218, 2147483648
        %v2226 = vxor.u32 %v2221, 2147483648
        %v2227 = vmul.f32 %v2223, 1.442695
        %v2228 = vpow.pop %v2227
        %v2229 = vmul.f32 %v2224, 1.442695
        %v2230 = vpow.pop %v2229
        %v2231 = vmul.f32 %v2225, 1.442695
        %v2232 = vpow.pop %v2231
        %v2233 = vmul.f32 %v2226, 1.442695
        %v2234 = vpow.pop %v2233
        %v2235 = vadd.f32 %v2228, 1.0
        %v2236 = vadd.f32 %v2230, 1.0
        %v2237 = vadd.f32 %v2232, 1.0
        %v2238 = vadd.f32 %v2234, 1.0
        %v2239 = vrcp.pop %v2235
        %v2240 = vmul.f32 %v2235, %v2239
        %v2241 = vsub.f32 1.0, %v2240
        %v2242 = vmul.f32 %v2239, %v2241
        %v2243 = vadd.f32 %v2239, %v2242
        %vm2244 = vweird.f32 %v2235
        %vm2245 = vweird.f32 %v2239
        %vm2246 = vmor %vm2244, %vm2245
        %v2247 = vsel %vm2246, %v2239, %v2243
        %v2248 = vand.u32 2147483647, %v2235
        %vm2249 = vcmp.eq.f32.partialorder %v2248, 8.507059e+37
        %v2250 = vand.u32 %v2235, 2147483648
        %v2251 = vor.u32 1.1754944e-38, %v2250
        %v2252 = vsel %vm2249, %v2251, %v2247
        %v2253 = vmul.f32 1.0, %v2252
        %v2254 = vrcp.pop %v2236
        %v2255 = vmul.f32 %v2236, %v2254
        %v2256 = vsub.f32 1.0, %v2255
        %v2257 = vmul.f32 %v2254, %v2256
        %v2258 = vadd.f32 %v2254, %v2257
        %vm2259 = vweird.f32 %v2236
        %vm2260 = vweird.f32 %v2254
        %vm2261 = vmor %vm2259, %vm2260
        %v2262 = vsel %vm2261, %v2254, %v2258
        %v2263 = vand.u32 2147483647, %v2236
        %vm2264 = vcmp.eq.f32.partialorder %v2263, 8.507059e+37
        %v2265 = vand.u32 %v2236, 2147483648
        %v2266 = vor.u32 1.1754944e-38, %v2265
        %v2267 = vsel %vm2264, %v2266, %v2262
        %v2268 = vmul.f32 1.0, %v2267
        %v2269 = vrcp.pop %v2237
        %v2270 = vmul.f32 %v2237, %v2269
        %v2271 = vsub.f32 1.0, %v2270
        %v2272 = vmul.f32 %v2269, %v2271
        %v2273 = vadd.f32 %v2269, %v2272
        %vm2274 = vweird.f32 %v2237
        %vm2275 = vweird.f32 %v2269
        %vm2276 = vmor %vm2274, %vm2275
        %v2277 = vsel %vm2276, %v2269, %v2273
        %v2278 = vand.u32 2147483647, %v2237
        %vm2279 = vcmp.eq.f32.partialorder %v2278, 8.507059e+37
        %v2280 = vand.u32 %v2237, 2147483648
        %v2281 = vor.u32 1.1754944e-38, %v2280
        %v2282 = vsel %vm2279, %v2281, %v2277
        %v2283 = vmul.f32 1.0, %v2282
        %v2284 = vrcp.pop %v2238
        %v2285 = vmul.f32 %v2238, %v2284
        %v2286 = vsub.f32 1.0, %v2285
        %v2287 = vmul.f32 %v2284, %v2286
        %v2288 = vadd.f32 %v2284, %v2287
        %vm2289 = vweird.f32 %v2238
        %vm2290 = vweird.f32 %v2284
        %vm2291 = vmor %vm2289, %vm2290
        %v2292 = vsel %vm2291, %v2284, %v2288
        %v2293 = vand.u32 2147483647, %v2238
        %vm2294 = vcmp.eq.f32.partialorder %v2293, 8.507059e+37
        %v2295 = vand.u32 %v2238, 2147483648
        %v2296 = vor.u32 1.1754944e-38, %v2295
        %v2297 = vsel %vm2294, %v2296, %v2292
        %v2298 = vmul.f32 1.0, %v2297
        %2300 = vset.pattern.permute.xlu0 0
        %2301 = vperm.xlu0 %2300, %v2253
        %v2302 = vpop.permute.xlu0 %2301
        %2305 = vset.pattern.permute.xlu0 0
        %2306 = vperm.xlu0 %2305, %v2268
        %v2307 = vpop.permute.xlu0 %2306
        %2310 = vset.pattern.permute.xlu0 0
        %2311 = vperm.xlu0 %2310, %v2283
        %v2312 = vpop.permute.xlu0 %2311
        %2315 = vset.pattern.permute.xlu0 0
        %2316 = vperm.xlu0 %2315, %v2298
        %v2317 = vpop.permute.xlu0 %2316
        %v2319 = vmul.f32 %v2107, %v2302
        %v2320 = vmul.f32 %v2108, %v2302
        %v2321 = vmul.f32 %v2109, %v2302
        %v2322 = vmul.f32 %v2110, %v2307
        %v2323 = vmul.f32 %v2111, %v2307
        %v2324 = vmul.f32 %v2112, %v2307
        %v2325 = vmul.f32 %v2113, %v2312
        %v2326 = vmul.f32 %v2114, %v2312
        %v2327 = vmul.f32 %v2115, %v2312
        %v2328 = vmul.f32 %v2116, %v2317
        %v2329 = vmul.f32 %v2117, %v2317
        %v2330 = vmul.f32 %v2118, %v2317
        %v2331 = vld [vmem:[#allocation2 + $0x8] sm:$0xff]
        %v2332 = vld [vmem:[#allocation2 + $0x10] sm:$0xff]
        %v2333 = vld [vmem:[#allocation2 + $0x18] sm:$0xff]
        %v2334 = vld [vmem:[#allocation2 + $0x28] sm:$0xff]
        %v2335 = vld [vmem:[#allocation2 + $0x30] sm:$0xff]
        %v2336 = vld [vmem:[#allocation2 + $0x38] sm:$0xff]
        %v2337 = vld [vmem:[#allocation2 + $0x48] sm:$0xff]
        %v2338 = vld [vmem:[#allocation2 + $0x50] sm:$0xff]
        %v2339 = vld [vmem:[#allocation2 + $0x58] sm:$0xff]
        %v2340 = vld [vmem:[#allocation2 + $0x68] sm:$0xff]
        %v2341 = vld [vmem:[#allocation2 + $0x70] sm:$0xff]
        %v2342 = vld [vmem:[#allocation2 + $0x78] sm:$0xff]
        %v2343 = vadd.f32 %v2319, %v2331
        %v2344 = vadd.f32 %v2320, %v2332
        %v2345 = vadd.f32 %v2321, %v2333
        %v2346 = vadd.f32 %v2322, %v2334
        %v2347 = vadd.f32 %v2323, %v2335
        %v2348 = vadd.f32 %v2324, %v2336
        %v2349 = vadd.f32 %v2325, %v2337
        %v2350 = vadd.f32 %v2326, %v2338
        %v2351 = vadd.f32 %v2327, %v2339
        %v2352 = vadd.f32 %v2328, %v2340
        %v2353 = vadd.f32 %v2329, %v2341
        %v2354 = vadd.f32 %v2330, %v2342
        %2355 = vst [vmem:[#allocation2 + $0x8] sm:$0xff] %v2343
        %2356 = vst [vmem:[#allocation2 + $0x10] sm:$0xff] %v2344
        %2357 = vst.msk [vmem:[#allocation2 + $0x18] sm:$0xff] %vm1193, %v2345
        %2358 = vst [vmem:[#allocation2 + $0x28] sm:$0xff] %v2346
        %2359 = vst [vmem:[#allocation2 + $0x30] sm:$0xff] %v2347
        %2360 = vst.msk [vmem:[#allocation2 + $0x38] sm:$0xff] %vm1193, %v2348
        %2361 = vst [vmem:[#allocation2 + $0x48] sm:$0xff] %v2349
        %2362 = vst [vmem:[#allocation2 + $0x50] sm:$0xff] %v2350
        %2363 = vst.msk [vmem:[#allocation2 + $0x58] sm:$0xff] %vm1193, %v2351
        %2364 = vst [vmem:[#allocation2 + $0x68] sm:$0xff] %v2352
        %2365 = vst [vmem:[#allocation2 + $0x70] sm:$0xff] %v2353
        %2366 = vst.msk [vmem:[#allocation2 + $0x78] sm:$0xff] %vm1193, %v2354
      $region68: #{residual_group.1} parent=59 // pred_fallthru
        _
      %p2367 = scmp.eq.s32.totalorder %s26, 4
      // Predicated region
      $region69: #{residual_group.1} parent=59 // pred_check
        %p2368 = pneg %p2367
      $region70: #{residual_group.1} parent=59 // pred_check_branch
        %2370 = sbr.rel (%p2368) target = $region72
      $region71: #{residual_group.1} parent=59 // pred_region
        %v2371 = vld [vmem:[%s547] sm:$0xff]
        %v2372 = vld [vmem:[%s547 + $0x8] sm:$0xf]
        %v2373 = vld [vmem:[%s547 + $0xc] sm:$0xff]
        %v2374 = vld [vmem:[%s547 + $0x14] sm:$0xf]
        %v2375 = vld [vmem:[%s547 + $0x18] sm:$0xff]
        %v2376 = vld [vmem:[%s547 + $0x20] sm:$0xf]
        %v2377 = vld [vmem:[%s547 + $0x24] sm:$0xff]
        %v2378 = vld [vmem:[%s547 + $0x2c] sm:$0xf]
        %v2379 = vld [vmem:[%s552] sm:$0xff]
        %v2380 = vld [vmem:[%s552 + $0x8] sm:$0xff]
        %v2381 = vld [vmem:[%s552 + $0x10] sm:$0xff]
        %v2382 = vld [vmem:[%s552 + $0x18] sm:$0xff]
        %v2383 = vld [vmem:[#allocation2] sm:$0xff]
        %v2384 = vld [vmem:[#allocation2 + $0x8] sm:$0xff]
        %v2385 = vld [vmem:[#allocation2 + $0x10] sm:$0xff]
        %v2386 = vld [vmem:[#allocation2 + $0x18] sm:$0xff]
        %v2387 = vld [vmem:[#allocation2 + $0x20] sm:$0xff]
        %v2388 = vld [vmem:[#allocation2 + $0x28] sm:$0xff]
        %v2389 = vld [vmem:[#allocation2 + $0x30] sm:$0xff]
        %v2390 = vld [vmem:[#allocation2 + $0x38] sm:$0xff]
        %v2391 = vld [vmem:[#allocation2 + $0x40] sm:$0xff]
        %v2392 = vld [vmem:[#allocation2 + $0x48] sm:$0xff]
        %v2393 = vld [vmem:[#allocation2 + $0x50] sm:$0xff]
        %v2394 = vld [vmem:[#allocation2 + $0x58] sm:$0xff]
        %v2395 = vld [vmem:[#allocation2 + $0x60] sm:$0xff]
        %v2396 = vld [vmem:[#allocation2 + $0x68] sm:$0xff]
        %v2397 = vld [vmem:[#allocation2 + $0x70] sm:$0xff]
        %v2398 = vld [vmem:[#allocation2 + $0x78] sm:$0xff]
        %v2399 = vpack.c.bf16 %v2384, %v2383
        %v2400 = vpack.c.bf16 %v2386, %v2385
        %v2401 = vpack.c.bf16 %v2388, %v2387
        %v2402 = vpack.c.bf16 %v2390, %v2389
        %v2403 = vpack.c.bf16 %v2392, %v2391
        %v2404 = vpack.c.bf16 %v2394, %v2393
        %v2405 = vpack.c.bf16 %v2396, %v2395
        %v2406 = vpack.c.bf16 %v2398, %v2397
        %v2415 = vunpack.c.l.b16 %v2399
        %v2416 = vunpack.c.h.b16 %v2399
        %v2417 = vunpack.c.l.b16 %v2400
        %v2418 = vunpack.c.h.b16 %v2400
        %v2419 = vunpack.c.l.b16 %v2401
        %v2420 = vunpack.c.h.b16 %v2401
        %v2421 = vunpack.c.l.b16 %v2402
        %v2422 = vunpack.c.h.b16 %v2402
        %v2423 = vunpack.c.l.b16 %v2403
        %v2424 = vunpack.c.h.b16 %v2403
        %v2425 = vunpack.c.l.b16 %v2404
        %v2426 = vunpack.c.h.b16 %v2404
        %v2427 = vunpack.c.l.b16 %v2405
        %v2428 = vunpack.c.h.b16 %v2405
        %v2429 = vunpack.c.l.b16 %v2406
        %v2430 = vunpack.c.h.b16 %v2406
        %v2431 = vpack.c.b16 %v2419, %v2415
        %v2432 = vpack.c.b16 %v2420, %v2416
        %v2433 = vpack.c.b16 %v2421, %v2417
        %v2434 = vpack.c.b16 %v2422, %v2418
        %v2435 = vpack.c.b16 %v2427, %v2423
        %v2436 = vpack.c.b16 %v2428, %v2424
        %v2437 = vpack.c.b16 %v2429, %v2425
        %v2438 = vpack.c.b16 %v2430, %v2426
        %2439 = vrot.lane.b32.xlu0 %v2431, 127
        %v2440 = vpop.permute.xlu0 %2439
        %2441 = vrot.lane.b32.xlu0 %v2432, 127
        %v2442 = vpop.permute.xlu0 %2441
        %2443 = vrot.lane.b32.xlu0 %v2433, 127
        %v2444 = vpop.permute.xlu0 %2443
        %2445 = vrot.lane.b32.xlu0 %v2434, 127
        %v2446 = vpop.permute.xlu0 %2445
        %2447 = vrot.lane.b32.xlu0 %v2435, 127
        %v2448 = vpop.permute.xlu0 %2447
        %2449 = vrot.lane.b32.xlu0 %v2436, 127
        %v2450 = vpop.permute.xlu0 %2449
        %2451 = vrot.lane.b32.xlu0 %v2437, 127
        %v2452 = vpop.permute.xlu0 %2451
        %2453 = vrot.lane.b32.xlu0 %v2438, 127
        %v2454 = vpop.permute.xlu0 %2453
        %vm2455 = vcmask 1039360
        %v2456 = vsel %vm2455, %v2440, %v2442
        %v2457 = vsel %vm2455, %v2442, %v2444
        %v2458 = vsel %vm2455, %v2444, %v2446
        %v2459 = vsel %vm2455, %v2448, %v2450
        %v2460 = vsel %vm2455, %v2450, %v2452
        %v2461 = vsel %vm2455, %v2452, %v2454
        %2462 = vrot.lane.b32.xlu0 %v2431, 126
        %v2463 = vpop.permute.xlu0 %2462
        %2464 = vrot.lane.b32.xlu0 %v2432, 126
        %v2465 = vpop.permute.xlu0 %2464
        %2466 = vrot.lane.b32.xlu0 %v2433, 126
        %v2467 = vpop.permute.xlu0 %2466
        %2468 = vrot.lane.b32.xlu0 %v2434, 126
        %v2469 = vpop.permute.xlu0 %2468
        %2470 = vrot.lane.b32.xlu0 %v2435, 126
        %v2471 = vpop.permute.xlu0 %2470
        %2472 = vrot.lane.b32.xlu0 %v2436, 126
        %v2473 = vpop.permute.xlu0 %2472
        %2474 = vrot.lane.b32.xlu0 %v2437, 126
        %v2475 = vpop.permute.xlu0 %2474
        %2476 = vrot.lane.b32.xlu0 %v2438, 126
        %v2477 = vpop.permute.xlu0 %2476
        %vm2478 = vcmask 1031168
        %v2479 = vsel %vm2478, %v2463, %v2465
        %v2480 = vsel %vm2478, %v2465, %v2467
        %v2481 = vsel %vm2478, %v2467, %v2469
        %v2482 = vsel %vm2478, %v2471, %v2473
        %v2483 = vsel %vm2478, %v2473, %v2475
        %v2484 = vsel %vm2478, %v2475, %v2477
        %2485 = vrot.lane.b32.xlu0 %v2431, 110
        %v2486 = vpop.permute.xlu0 %2485
        %2487 = vrot.lane.b32.xlu0 %v2432, 110
        %v2488 = vpop.permute.xlu0 %2487
        %2489 = vrot.lane.b32.xlu0 %v2433, 110
        %v2490 = vpop.permute.xlu0 %2489
        %2491 = vrot.lane.b32.xlu0 %v2434, 110
        %v2492 = vpop.permute.xlu0 %2491
        %2493 = vrot.lane.b32.xlu0 %v2435, 110
        %v2494 = vpop.permute.xlu0 %2493
        %2495 = vrot.lane.b32.xlu0 %v2436, 110
        %v2496 = vpop.permute.xlu0 %2495
        %2497 = vrot.lane.b32.xlu0 %v2437, 110
        %v2498 = vpop.permute.xlu0 %2497
        %2499 = vrot.lane.b32.xlu0 %v2438, 110
        %v2500 = vpop.permute.xlu0 %2499
        %vm2501 = vcmask 900096
        %v2502 = vsel %vm2501, %v2486, %v2488
        %v2503 = vsel %vm2501, %v2488, %v2490
        %v2504 = vsel %vm2501, %v2490, %v2492
        %v2505 = vsel %vm2501, %v2494, %v2496
        %v2506 = vsel %vm2501, %v2496, %v2498
        %v2507 = vsel %vm2501, %v2498, %v2500
        %2508 = vrot.lane.b32.xlu0 %v2432, 109
        %v2509 = vpop.permute.xlu0 %2508
        %2510 = vrot.lane.b32.xlu0 %v2433, 109
        %v2511 = vpop.permute.xlu0 %2510
        %2512 = vrot.lane.b32.xlu0 %v2434, 109
        %v2513 = vpop.permute.xlu0 %2512
        %2514 = vrot.lane.b32.xlu0 %v2436, 109
        %v2515 = vpop.permute.xlu0 %2514
        %2516 = vrot.lane.b32.xlu0 %v2437, 109
        %v2517 = vpop.permute.xlu0 %2516
        %2518 = vrot.lane.b32.xlu0 %v2438, 109
        %v2519 = vpop.permute.xlu0 %2518
        %vm2520 = vcmask 891904
        %v2521 = vsel %vm2520, %v2509, %v2511
        %v2522 = vsel %vm2520, %v2511, %v2513
        %v2523 = vsel %vm2520, %v2515, %v2517
        %v2524 = vsel %vm2520, %v2517, %v2519
        %2525 = vrot.lane.b32.xlu0 %v2432, 108
        %v2526 = vpop.permute.xlu0 %2525
        %2527 = vrot.lane.b32.xlu0 %v2433, 108
        %v2528 = vpop.permute.xlu0 %2527
        %2529 = vrot.lane.b32.xlu0 %v2434, 108
        %v2530 = vpop.permute.xlu0 %2529
        %2531 = vrot.lane.b32.xlu0 %v2436, 108
        %v2532 = vpop.permute.xlu0 %2531
        %2533 = vrot.lane.b32.xlu0 %v2437, 108
        %v2534 = vpop.permute.xlu0 %2533
        %2535 = vrot.lane.b32.xlu0 %v2438, 108
        %v2536 = vpop.permute.xlu0 %2535
        %vm2537 = vcmask 883712
        %v2538 = vsel %vm2537, %v2526, %v2528
        %v2539 = vsel %vm2537, %v2528, %v2530
        %v2540 = vsel %vm2537, %v2532, %v2534
        %v2541 = vsel %vm2537, %v2534, %v2536
        %2542 = vrot.lane.b32.xlu0 %v2432, 92
        %v2543 = vpop.permute.xlu0 %2542
        %2544 = vrot.lane.b32.xlu0 %v2433, 92
        %v2545 = vpop.permute.xlu0 %2544
        %2546 = vrot.lane.b32.xlu0 %v2434, 92
        %v2547 = vpop.permute.xlu0 %2546
        %2548 = vrot.lane.b32.xlu0 %v2436, 92
        %v2549 = vpop.permute.xlu0 %2548
        %2550 = vrot.lane.b32.xlu0 %v2437, 92
        %v2551 = vpop.permute.xlu0 %2550
        %2552 = vrot.lane.b32.xlu0 %v2438, 92
        %v2553 = vpop.permute.xlu0 %2552
        %vm2554 = vcmask 752640
        %v2555 = vsel %vm2554, %v2543, %v2545
        %v2556 = vsel %vm2554, %v2545, %v2547
        %v2557 = vsel %vm2554, %v2549, %v2551
        %v2558 = vsel %vm2554, %v2551, %v2553
        %2559 = vrot.lane.b32.xlu0 %v2432, 91
        %v2560 = vpop.permute.xlu0 %2559
        %2561 = vrot.lane.b32.xlu0 %v2433, 91
        %v2562 = vpop.permute.xlu0 %2561
        %2563 = vrot.lane.b32.xlu0 %v2434, 91
        %v2564 = vpop.permute.xlu0 %2563
        %2565 = vrot.lane.b32.xlu0 %v2436, 91
        %v2566 = vpop.permute.xlu0 %2565
        %2567 = vrot.lane.b32.xlu0 %v2437, 91
        %v2568 = vpop.permute.xlu0 %2567
        %2569 = vrot.lane.b32.xlu0 %v2438, 91
        %v2570 = vpop.permute.xlu0 %2569
        %vm2571 = vcmask 744448
        %v2572 = vsel %vm2571, %v2560, %v2562
        %v2573 = vsel %vm2571, %v2562, %v2564
        %v2574 = vsel %vm2571, %v2566, %v2568
        %v2575 = vsel %vm2571, %v2568, %v2570
        %2576 = vrot.lane.b32.xlu0 %v2432, 90
        %v2577 = vpop.permute.xlu0 %2576
        %2578 = vrot.lane.b32.xlu0 %v2433, 90
        %v2579 = vpop.permute.xlu0 %2578
        %2580 = vrot.lane.b32.xlu0 %v2434, 90
        %v2581 = vpop.permute.xlu0 %2580
        %2582 = vrot.lane.b32.xlu0 %v2436, 90
        %v2583 = vpop.permute.xlu0 %2582
        %2584 = vrot.lane.b32.xlu0 %v2437, 90
        %v2585 = vpop.permute.xlu0 %2584
        %2586 = vrot.lane.b32.xlu0 %v2438, 90
        %v2587 = vpop.permute.xlu0 %2586
        %vm2588 = vcmask 736256
        %v2589 = vsel %vm2588, %v2577, %v2579
        %v2590 = vsel %vm2588, %v2579, %v2581
        %v2591 = vsel %vm2588, %v2583, %v2585
        %v2592 = vsel %vm2588, %v2585, %v2587
        %2594 = vset.pattern.permute.xlu0 0
        %2595 = vperm.xlu0 %2594, %v2379
        %v2596 = vpop.permute.xlu0 %2595
        %2599 = vset.pattern.permute.xlu0 0
        %2600 = vperm.xlu0 %2599, %v2380
        %v2601 = vpop.permute.xlu0 %2600
        %2604 = vset.pattern.permute.xlu0 0
        %2605 = vperm.xlu0 %2604, %v2381
        %v2606 = vpop.permute.xlu0 %2605
        %2609 = vset.pattern.permute.xlu0 0
        %2610 = vperm.xlu0 %2609, %v2382
        %v2611 = vpop.permute.xlu0 %2610
        %v2621 = vunpack.c.l.b16 %v2371
        %v2622 = vunpack.c.h.b16 %v2371
        %v2623 = vunpack.c.l.b16 %v2372
        %v2624 = vunpack.c.l.b16 %v2373
        %v2625 = vunpack.c.h.b16 %v2373
        %v2626 = vunpack.c.l.b16 %v2374
        %v2627 = vunpack.c.l.b16 %v2375
        %v2628 = vunpack.c.h.b16 %v2375
        %v2629 = vunpack.c.l.b16 %v2376
        %v2630 = vunpack.c.l.b16 %v2377
        %v2631 = vunpack.c.h.b16 %v2377
        %v2632 = vunpack.c.l.b16 %v2378
        %v2633 = vpack.c.b16 %v2624, %v2621
        %v2634 = vpack.c.b16 %v2625, %v2622
        %v2635 = vpack.c.b16 %v2626, %v2623
        %v2636 = vpack.c.b16 %v2630, %v2627
        %v2637 = vpack.c.b16 %v2631, %v2628
        %v2638 = vpack.c.b16 %v2632, %v2629
        %2643 = vrot.lane.b32.xlu0 %v2431, 19
        %v2644 = vpop.permute.xlu0 %2643
        %2645 = vrot.lane.b32.xlu0 %v2432, 19
        %v2646 = vpop.permute.xlu0 %2645
        %2647 = vrot.lane.b32.xlu0 %v2433, 19
        %v2648 = vpop.permute.xlu0 %2647
        %2649 = vrot.lane.b32.xlu0 %v2434, 19
        %v2650 = vpop.permute.xlu0 %2649
        %2651 = vrot.lane.b32.xlu0 %v2435, 19
        %v2652 = vpop.permute.xlu0 %2651
        %2653 = vrot.lane.b32.xlu0 %v2436, 19
        %v2654 = vpop.permute.xlu0 %2653
        %2655 = vrot.lane.b32.xlu0 %v2437, 19
        %v2656 = vpop.permute.xlu0 %2655
        %2657 = vrot.lane.b32.xlu0 %v2438, 19
        %v2658 = vpop.permute.xlu0 %2657
        %2659 = vrot.lane.b32.xlu0 %v2456, 19
        %v2660 = vpop.permute.xlu0 %2659
        %2661 = vrot.lane.b32.xlu0 %v2457, 19
        %v2662 = vpop.permute.xlu0 %2661
        %2663 = vrot.lane.b32.xlu0 %v2458, 19
        %v2664 = vpop.permute.xlu0 %2663
        %2665 = vrot.lane.b32.xlu0 %v2446, 19
        %v2666 = vpop.permute.xlu0 %2665
        %2667 = vrot.lane.b32.xlu0 %v2459, 19
        %v2668 = vpop.permute.xlu0 %2667
        %2669 = vrot.lane.b32.xlu0 %v2460, 19
        %v2670 = vpop.permute.xlu0 %2669
        %2671 = vrot.lane.b32.xlu0 %v2461, 19
        %v2672 = vpop.permute.xlu0 %2671
        %2673 = vrot.lane.b32.xlu0 %v2454, 19
        %v2674 = vpop.permute.xlu0 %2673
        %2675 = vrot.lane.b32.xlu0 %v2479, 19
        %v2676 = vpop.permute.xlu0 %2675
        %2677 = vrot.lane.b32.xlu0 %v2480, 19
        %v2678 = vpop.permute.xlu0 %2677
        %2679 = vrot.lane.b32.xlu0 %v2481, 19
        %v2680 = vpop.permute.xlu0 %2679
        %2681 = vrot.lane.b32.xlu0 %v2469, 19
        %v2682 = vpop.permute.xlu0 %2681
        %2683 = vrot.lane.b32.xlu0 %v2482, 19
        %v2684 = vpop.permute.xlu0 %2683
        %2685 = vrot.lane.b32.xlu0 %v2483, 19
        %v2686 = vpop.permute.xlu0 %2685
        %2687 = vrot.lane.b32.xlu0 %v2484, 19
        %v2688 = vpop.permute.xlu0 %2687
        %2689 = vrot.lane.b32.xlu0 %v2477, 19
        %v2690 = vpop.permute.xlu0 %2689
        %2691 = vrot.lane.b32.xlu0 %v2502, 19
        %v2692 = vpop.permute.xlu0 %2691
        %2693 = vrot.lane.b32.xlu0 %v2503, 19
        %v2694 = vpop.permute.xlu0 %2693
        %2695 = vrot.lane.b32.xlu0 %v2504, 19
        %v2696 = vpop.permute.xlu0 %2695
        %2697 = vrot.lane.b32.xlu0 %v2492, 19
        %v2698 = vpop.permute.xlu0 %2697
        %2699 = vrot.lane.b32.xlu0 %v2505, 19
        %v2700 = vpop.permute.xlu0 %2699
        %2701 = vrot.lane.b32.xlu0 %v2506, 19
        %v2702 = vpop.permute.xlu0 %2701
        %2703 = vrot.lane.b32.xlu0 %v2507, 19
        %v2704 = vpop.permute.xlu0 %2703
        %2705 = vrot.lane.b32.xlu0 %v2500, 19
        %v2706 = vpop.permute.xlu0 %2705
        %2707 = vrot.lane.b32.xlu0 %v2509, 19
        %v2708 = vpop.permute.xlu0 %2707
        %2709 = vrot.lane.b32.xlu0 %v2521, 19
        %v2710 = vpop.permute.xlu0 %2709
        %2711 = vrot.lane.b32.xlu0 %v2522, 19
        %v2712 = vpop.permute.xlu0 %2711
        %2713 = vrot.lane.b32.xlu0 %v2513, 19
        %v2714 = vpop.permute.xlu0 %2713
        %2715 = vrot.lane.b32.xlu0 %v2515, 19
        %v2716 = vpop.permute.xlu0 %2715
        %2717 = vrot.lane.b32.xlu0 %v2523, 19
        %v2718 = vpop.permute.xlu0 %2717
        %2719 = vrot.lane.b32.xlu0 %v2524, 19
        %v2720 = vpop.permute.xlu0 %2719
        %2721 = vrot.lane.b32.xlu0 %v2519, 19
        %v2722 = vpop.permute.xlu0 %2721
        %2723 = vrot.lane.b32.xlu0 %v2526, 19
        %v2724 = vpop.permute.xlu0 %2723
        %2725 = vrot.lane.b32.xlu0 %v2538, 19
        %v2726 = vpop.permute.xlu0 %2725
        %2727 = vrot.lane.b32.xlu0 %v2539, 19
        %v2728 = vpop.permute.xlu0 %2727
        %2729 = vrot.lane.b32.xlu0 %v2530, 19
        %v2730 = vpop.permute.xlu0 %2729
        %2731 = vrot.lane.b32.xlu0 %v2532, 19
        %v2732 = vpop.permute.xlu0 %2731
        %2733 = vrot.lane.b32.xlu0 %v2540, 19
        %v2734 = vpop.permute.xlu0 %2733
        %2735 = vrot.lane.b32.xlu0 %v2541, 19
        %v2736 = vpop.permute.xlu0 %2735
        %2737 = vrot.lane.b32.xlu0 %v2536, 19
        %v2738 = vpop.permute.xlu0 %2737
        %2739 = vrot.lane.b32.xlu0 %v2543, 19
        %v2740 = vpop.permute.xlu0 %2739
        %2741 = vrot.lane.b32.xlu0 %v2555, 19
        %v2742 = vpop.permute.xlu0 %2741
        %2743 = vrot.lane.b32.xlu0 %v2556, 19
        %v2744 = vpop.permute.xlu0 %2743
        %2745 = vrot.lane.b32.xlu0 %v2547, 19
        %v2746 = vpop.permute.xlu0 %2745
        %2747 = vrot.lane.b32.xlu0 %v2549, 19
        %v2748 = vpop.permute.xlu0 %2747
        %2749 = vrot.lane.b32.xlu0 %v2557, 19
        %v2750 = vpop.permute.xlu0 %2749
        %2751 = vrot.lane.b32.xlu0 %v2558, 19
        %v2752 = vpop.permute.xlu0 %2751
        %2753 = vrot.lane.b32.xlu0 %v2553, 19
        %v2754 = vpop.permute.xlu0 %2753
        %2755 = vrot.lane.b32.xlu0 %v2560, 19
        %v2756 = vpop.permute.xlu0 %2755
        %2757 = vrot.lane.b32.xlu0 %v2572, 19
        %v2758 = vpop.permute.xlu0 %2757
        %2759 = vrot.lane.b32.xlu0 %v2573, 19
        %v2760 = vpop.permute.xlu0 %2759
        %2761 = vrot.lane.b32.xlu0 %v2564, 19
        %v2762 = vpop.permute.xlu0 %2761
        %2763 = vrot.lane.b32.xlu0 %v2566, 19
        %v2764 = vpop.permute.xlu0 %2763
        %2765 = vrot.lane.b32.xlu0 %v2574, 19
        %v2766 = vpop.permute.xlu0 %2765
        %2767 = vrot.lane.b32.xlu0 %v2575, 19
        %v2768 = vpop.permute.xlu0 %2767
        %2769 = vrot.lane.b32.xlu0 %v2570, 19
        %v2770 = vpop.permute.xlu0 %2769
        %2771 = vrot.lane.b32.xlu0 %v2577, 19
        %v2772 = vpop.permute.xlu0 %2771
        %2773 = vrot.lane.b32.xlu0 %v2589, 19
        %v2774 = vpop.permute.xlu0 %2773
        %2775 = vrot.lane.b32.xlu0 %v2590, 19
        %v2776 = vpop.permute.xlu0 %2775
        %2777 = vrot.lane.b32.xlu0 %v2581, 19
        %v2778 = vpop.permute.xlu0 %2777
        %2779 = vrot.lane.b32.xlu0 %v2583, 19
        %v2780 = vpop.permute.xlu0 %2779
        %2781 = vrot.lane.b32.xlu0 %v2591, 19
        %v2782 = vpop.permute.xlu0 %2781
        %2783 = vrot.lane.b32.xlu0 %v2592, 19
        %v2784 = vpop.permute.xlu0 %2783
        %2785 = vrot.lane.b32.xlu0 %v2587, 19
        %v2786 = vpop.permute.xlu0 %2785
        %vm2787 = vcmask 154624
        %v2788 = vsel %vm2787, %v2644, %v2646
        %v2789 = vsel %vm2787, %v2646, %v2648
        %v2790 = vsel %vm2787, %v2648, %v2650
        %v2791 = vsel %vm2787, %v2652, %v2654
        %v2792 = vsel %vm2787, %v2654, %v2656
        %v2793 = vsel %vm2787, %v2656, %v2658
        %v2794 = vsel %vm2787, %v2660, %v2662
        %v2795 = vsel %vm2787, %v2662, %v2664
        %v2796 = vsel %vm2787, %v2664, %v2666
        %v2797 = vsel %vm2787, %v2668, %v2670
        %v2798 = vsel %vm2787, %v2670, %v2672
        %v2799 = vsel %vm2787, %v2672, %v2674
        %v2800 = vsel %vm2787, %v2676, %v2678
        %v2801 = vsel %vm2787, %v2678, %v2680
        %v2802 = vsel %vm2787, %v2680, %v2682
        %v2803 = vsel %vm2787, %v2684, %v2686
        %v2804 = vsel %vm2787, %v2686, %v2688
        %v2805 = vsel %vm2787, %v2688, %v2690
        %v2806 = vsel %vm2787, %v2692, %v2694
        %v2807 = vsel %vm2787, %v2694, %v2696
        %v2808 = vsel %vm2787, %v2696, %v2698
        %v2809 = vsel %vm2787, %v2700, %v2702
        %v2810 = vsel %vm2787, %v2702, %v2704
        %v2811 = vsel %vm2787, %v2704, %v2706
        %v2812 = vsel %vm2787, %v2708, %v2710
        %v2813 = vsel %vm2787, %v2710, %v2712
        %v2814 = vsel %vm2787, %v2712, %v2714
        %v2815 = vsel %vm2787, %v2716, %v2718
        %v2816 = vsel %vm2787, %v2718, %v2720
        %v2817 = vsel %vm2787, %v2720, %v2722
        %v2818 = vsel %vm2787, %v2724, %v2726
        %v2819 = vsel %vm2787, %v2726, %v2728
        %v2820 = vsel %vm2787, %v2728, %v2730
        %v2821 = vsel %vm2787, %v2732, %v2734
        %v2822 = vsel %vm2787, %v2734, %v2736
        %v2823 = vsel %vm2787, %v2736, %v2738
        %v2824 = vsel %vm2787, %v2740, %v2742
        %v2825 = vsel %vm2787, %v2742, %v2744
        %v2826 = vsel %vm2787, %v2744, %v2746
        %v2827 = vsel %vm2787, %v2748, %v2750
        %v2828 = vsel %vm2787, %v2750, %v2752
        %v2829 = vsel %vm2787, %v2752, %v2754
        %v2830 = vsel %vm2787, %v2756, %v2758
        %v2831 = vsel %vm2787, %v2758, %v2760
        %v2832 = vsel %vm2787, %v2760, %v2762
        %v2833 = vsel %vm2787, %v2764, %v2766
        %v2834 = vsel %vm2787, %v2766, %v2768
        %v2835 = vsel %vm2787, %v2768, %v2770
        %v2836 = vsel %vm2787, %v2772, %v2774
        %v2837 = vsel %vm2787, %v2774, %v2776
        %v2838 = vsel %vm2787, %v2776, %v2778
        %v2839 = vsel %vm2787, %v2780, %v2782
        %v2840 = vsel %vm2787, %v2782, %v2784
        %v2841 = vsel %vm2787, %v2784, %v2786
        %vm2896 = vcmask 261120
        %v2898 = vsel %vm2896, %v2635, 0
        %v2901 = vsel %vm2896, %v2638, 0
        %2903 = vmatpush.bf16.msra.mxu0 %v2809
        %2904 = vmatpush.bf16.msra.mxu0 %v2806
        %2905 = vmatpush.bf16.msra.mxu0 %v2803
        %2906 = vmatpush.bf16.msra.mxu0 %v2800
        %2907 = vmatpush.bf16.msra.mxu0 %v2797
        %2908 = vmatpush.bf16.msra.mxu0 %v2794
        %2909 = vmatpush.bf16.msra.mxu0 %v2791
        %2910 = vmatpush.bf16.msra.mxu0 %v2788
        %2911 = vmatmul.bf16.gmra.mxu0 %v2633
        %v2912 = vpop.f32.mrf.mxu0
        %v2913 = vadd.f32 %v2596, %v2912
        %v2914 = vpop.f32.mrf.mxu0
        %v2915 = vadd.f32 %v2601, %v2914
        %2916 = vmatmul.bf16.gmra.mxu0 %v2636
        %v2917 = vpop.f32.mrf.mxu0
        %v2918 = vadd.f32 %v2606, %v2917
        %v2919 = vpop.f32.mrf.mxu0
        %v2920 = vadd.f32 %v2611, %v2919
        %2921 = vdwg.mxu0
        %2922 = vmatpush.bf16.msra.mxu0 %v2833
        %2923 = vmatpush.bf16.msra.mxu0 %v2830
        %2924 = vmatpush.bf16.msra.mxu0 %v2827
        %2925 = vmatpush.bf16.msra.mxu0 %v2824
        %2926 = vmatpush.bf16.msra.mxu0 %v2821
        %2927 = vmatpush.bf16.msra.mxu0 %v2818
        %2928 = vmatpush.bf16.msra.mxu0 %v2815
        %2929 = vmatpush.bf16.msra.mxu0 %v2812
        %2930 = vmatmul.bf16.gmra.mxu0 %v2634
        %v2931 = vpop.f32.mrf.mxu0
        %v2932 = vadd.f32 %v2913, %v2931
        %v2933 = vpop.f32.mrf.mxu0
        %v2934 = vadd.f32 %v2915, %v2933
        %2935 = vmatmul.bf16.gmra.mxu0 %v2637
        %v2936 = vpop.f32.mrf.mxu0
        %v2937 = vadd.f32 %v2918, %v2936
        %v2938 = vpop.f32.mrf.mxu0
        %v2939 = vadd.f32 %v2920, %v2938
        %2940 = vdwg.mxu0
        %2941 = vmatpush.bf16.msra.mxu0 0
        %2942 = vmatpush.bf16.msra.mxu0 0
        %2943 = vmatpush.bf16.msra.mxu0 0
        %2944 = vmatpush.bf16.msra.mxu0 0
        %2945 = vmatpush.bf16.msra.mxu0 0
        %2946 = vmatpush.bf16.msra.mxu0 0
        %2947 = vmatpush.bf16.msra.mxu0 %v2839
        %2948 = vmatpush.bf16.msra.mxu0 %v2836
        %2949 = vmatmul.bf16.gmra.mxu0 %v2898
        %v2950 = vpop.f32.mrf.mxu0
        %v2951 = vadd.f32 %v2932, %v2950
        %v2952 = vpop.f32.mrf.mxu0
        %v2953 = vadd.f32 %v2934, %v2952
        %2954 = vmatmul.bf16.gmra.mxu0 %v2901
        %v2955 = vpop.f32.mrf.mxu0
        %v2956 = vadd.f32 %v2937, %v2955
        %v2957 = vpop.f32.mrf.mxu0
        %v2958 = vadd.f32 %v2939, %v2957
        %2959 = vdwg.mxu0
        %2960 = vmatpush.bf16.msra.mxu0 %v2810
        %2961 = vmatpush.bf16.msra.mxu0 %v2807
        %2962 = vmatpush.bf16.msra.mxu0 %v2804
        %2963 = vmatpush.bf16.msra.mxu0 %v2801
        %2964 = vmatpush.bf16.msra.mxu0 %v2798
        %2965 = vmatpush.bf16.msra.mxu0 %v2795
        %2966 = vmatpush.bf16.msra.mxu0 %v2792
        %2967 = vmatpush.bf16.msra.mxu0 %v2789
        %2968 = vmatmul.bf16.gmra.mxu0 %v2633
        %v2969 = vpop.f32.mrf.mxu0
        %v2970 = vadd.f32 %v2596, %v2969
        %v2971 = vpop.f32.mrf.mxu0
        %v2972 = vadd.f32 %v2601, %v2971
        %2973 = vmatmul.bf16.gmra.mxu0 %v2636
        %v2974 = vpop.f32.mrf.mxu0
        %v2975 = vadd.f32 %v2606, %v2974
        %v2976 = vpop.f32.mrf.mxu0
        %v2977 = vadd.f32 %v2611, %v2976
        %2978 = vdwg.mxu0
        %2979 = vmatpush.bf16.msra.mxu0 %v2834
        %2980 = vmatpush.bf16.msra.mxu0 %v2831
        %2981 = vmatpush.bf16.msra.mxu0 %v2828
        %2982 = vmatpush.bf16.msra.mxu0 %v2825
        %2983 = vmatpush.bf16.msra.mxu0 %v2822
        %2984 = vmatpush.bf16.msra.mxu0 %v2819
        %2985 = vmatpush.bf16.msra.mxu0 %v2816
        %2986 = vmatpush.bf16.msra.mxu0 %v2813
        %2987 = vmatmul.bf16.gmra.mxu0 %v2634
        %v2988 = vpop.f32.mrf.mxu0
        %v2989 = vadd.f32 %v2970, %v2988
        %v2990 = vpop.f32.mrf.mxu0
        %v2991 = vadd.f32 %v2972, %v2990
        %2992 = vmatmul.bf16.gmra.mxu0 %v2637
        %v2993 = vpop.f32.mrf.mxu0
        %v2994 = vadd.f32 %v2975, %v2993
        %v2995 = vpop.f32.mrf.mxu0
        %v2996 = vadd.f32 %v2977, %v2995
        %2997 = vdwg.mxu0
        %2998 = vmatpush.bf16.msra.mxu0 0
        %2999 = vmatpush.bf16.msra.mxu0 0
        %3000 = vmatpush.bf16.msra.mxu0 0
        %3001 = vmatpush.bf16.msra.mxu0 0
        %3002 = vmatpush.bf16.msra.mxu0 0
        %3003 = vmatpush.bf16.msra.mxu0 0
        %3004 = vmatpush.bf16.msra.mxu0 %v2840
        %3005 = vmatpush.bf16.msra.mxu0 %v2837
        %3006 = vmatmul.bf16.gmra.mxu0 %v2898
        %v3007 = vpop.f32.mrf.mxu0
        %v3008 = vadd.f32 %v2989, %v3007
        %v3009 = vpop.f32.mrf.mxu0
        %v3010 = vadd.f32 %v2991, %v3009
        %3011 = vmatmul.bf16.gmra.mxu0 %v2901
        %v3012 = vpop.f32.mrf.mxu0
        %v3013 = vadd.f32 %v2994, %v3012
        %v3014 = vpop.f32.mrf.mxu0
        %v3015 = vadd.f32 %v2996, %v3014
        %3016 = vdwg.mxu0
        %3017 = vmatpush.bf16.msra.mxu0 %v2811
        %3018 = vmatpush.bf16.msra.mxu0 %v2808
        %3019 = vmatpush.bf16.msra.mxu0 %v2805
        %3020 = vmatpush.bf16.msra.mxu0 %v2802
        %3021 = vmatpush.bf16.msra.mxu0 %v2799
        %3022 = vmatpush.bf16.msra.mxu0 %v2796
        %3023 = vmatpush.bf16.msra.mxu0 %v2793
        %3024 = vmatpush.bf16.msra.mxu0 %v2790
        %3025 = vmatmul.bf16.gmra.mxu0 %v2633
        %v3026 = vpop.f32.mrf.mxu0
        %v3027 = vadd.f32 %v2596, %v3026
        %v3028 = vpop.f32.mrf.mxu0
        %v3029 = vadd.f32 %v2601, %v3028
        %3030 = vmatmul.bf16.gmra.mxu0 %v2636
        %v3031 = vpop.f32.mrf.mxu0
        %v3032 = vadd.f32 %v2606, %v3031
        %v3033 = vpop.f32.mrf.mxu0
        %v3034 = vadd.f32 %v2611, %v3033
        %3035 = vdwg.mxu0
        %3036 = vmatpush.bf16.msra.mxu0 %v2835
        %3037 = vmatpush.bf16.msra.mxu0 %v2832
        %3038 = vmatpush.bf16.msra.mxu0 %v2829
        %3039 = vmatpush.bf16.msra.mxu0 %v2826
        %3040 = vmatpush.bf16.msra.mxu0 %v2823
        %3041 = vmatpush.bf16.msra.mxu0 %v2820
        %3042 = vmatpush.bf16.msra.mxu0 %v2817
        %3043 = vmatpush.bf16.msra.mxu0 %v2814
        %3044 = vmatmul.bf16.gmra.mxu0 %v2634
        %v3045 = vpop.f32.mrf.mxu0
        %v3046 = vadd.f32 %v3027, %v3045
        %v3047 = vpop.f32.mrf.mxu0
        %v3048 = vadd.f32 %v3029, %v3047
        %3049 = vmatmul.bf16.gmra.mxu0 %v2637
        %v3050 = vpop.f32.mrf.mxu0
        %v3051 = vadd.f32 %v3032, %v3050
        %v3052 = vpop.f32.mrf.mxu0
        %v3053 = vadd.f32 %v3034, %v3052
        %3054 = vdwg.mxu0
        %3055 = vmatpush.bf16.msra.mxu0 0
        %3056 = vmatpush.bf16.msra.mxu0 0
        %3057 = vmatpush.bf16.msra.mxu0 0
        %3058 = vmatpush.bf16.msra.mxu0 0
        %3059 = vmatpush.bf16.msra.mxu0 0
        %3060 = vmatpush.bf16.msra.mxu0 0
        %3061 = vmatpush.bf16.msra.mxu0 %v2841
        %3062 = vmatpush.bf16.msra.mxu0 %v2838
        %3063 = vmatmul.bf16.gmra.mxu0 %v2898
        %v3064 = vpop.f32.mrf.mxu0
        %v3065 = vadd.f32 %v3046, %v3064
        %v3066 = vpop.f32.mrf.mxu0
        %v3067 = vadd.f32 %v3048, %v3066
        %3068 = vmatmul.bf16.gmra.mxu0 %v2901
        %v3069 = vpop.f32.mrf.mxu0
        %v3070 = vadd.f32 %v3051, %v3069
        %v3071 = vpop.f32.mrf.mxu0
        %v3072 = vadd.f32 %v3053, %v3071
        %3073 = vdwg.mxu0
        %v3075 = vperm.slane %v611, 0
        %v3076 = vperm.slane %v611, 1
        %v3077 = vperm.slane %v611, 2
        %v3081 = vmul.f32 %v2951, %v3075
        %v3082 = vmul.f32 %v3008, %v3076
        %v3083 = vmul.f32 %v3065, %v3077
        %v3084 = vmul.f32 %v2953, %v3075
        %v3085 = vmul.f32 %v3010, %v3076
        %v3086 = vmul.f32 %v3067, %v3077
        %v3087 = vmul.f32 %v2956, %v3075
        %v3088 = vmul.f32 %v3013, %v3076
        %v3089 = vmul.f32 %v3070, %v3077
        %v3090 = vmul.f32 %v2958, %v3075
        %v3091 = vmul.f32 %v3015, %v3076
        %v3092 = vmul.f32 %v3072, %v3077
        %3093 = vst [vmem:[%s609] sm:$0xff] 0.0
        %3094 = vst [vmem:[%s609 + $0x8] sm:$0xff] 0.0
        %3095 = vst [vmem:[%s609 + $0x10] sm:$0xff] 0.0
        %3096 = vst [vmem:[%s609 + $0x18] sm:$0xff] 0.0
        %3097 = vst [vmem:[%s609 + $0x20] sm:$0xff] 0.0
        %3098 = vst [vmem:[%s609 + $0x28] sm:$0xff] 0.0
        %3099 = vst [vmem:[%s609 + $0x30] sm:$0xff] 0.0
        %3100 = vst [vmem:[%s609 + $0x38] sm:$0xff] 0.0
        %3101 = vst [vmem:[%s609 + $0x40] sm:$0xff] 0.0
        %3102 = vst [vmem:[%s609 + $0x48] sm:$0xff] 0.0
        %3103 = vst [vmem:[%s609 + $0x50] sm:$0xff] 0.0
        %3104 = vst [vmem:[%s609 + $0x58] sm:$0xff] 0.0
        %3105 = vst [vmem:[%s609 + $0x60] sm:$0xff] 0.0
        %3106 = vst [vmem:[%s609 + $0x68] sm:$0xff] 0.0
        %3107 = vst [vmem:[%s609 + $0x70] sm:$0xff] 0.0
        %3108 = vst [vmem:[%s609 + $0x78] sm:$0xff] 0.0
        %v3109 = vld [vmem:[%s542 + $0x8] sm:$0xff]
        %v3110 = vld [vmem:[%s542 + $0x10] sm:$0xff]
        %v3111 = vld [vmem:[%s542 + $0x18] sm:$0xff]
        %v3112 = vld [vmem:[%s542 + $0x28] sm:$0xff]
        %v3113 = vld [vmem:[%s542 + $0x30] sm:$0xff]
        %v3114 = vld [vmem:[%s542 + $0x38] sm:$0xff]
        %v3115 = vld [vmem:[%s542 + $0x48] sm:$0xff]
        %v3116 = vld [vmem:[%s542 + $0x50] sm:$0xff]
        %v3117 = vld [vmem:[%s542 + $0x58] sm:$0xff]
        %v3118 = vld [vmem:[%s542 + $0x68] sm:$0xff]
        %v3119 = vld [vmem:[%s542 + $0x70] sm:$0xff]
        %v3120 = vld [vmem:[%s542 + $0x78] sm:$0xff]
        %v3121 = vadd.f32 %v3081, %v3109
        %v3122 = vadd.f32 %v3082, %v3110
        %v3123 = vadd.f32 %v3083, %v3111
        %v3124 = vadd.f32 %v3084, %v3112
        %v3125 = vadd.f32 %v3085, %v3113
        %v3126 = vadd.f32 %v3086, %v3114
        %v3127 = vadd.f32 %v3087, %v3115
        %v3128 = vadd.f32 %v3088, %v3116
        %v3129 = vadd.f32 %v3089, %v3117
        %v3130 = vadd.f32 %v3090, %v3118
        %v3131 = vadd.f32 %v3091, %v3119
        %v3132 = vadd.f32 %v3092, %v3120
        %3133 = vst [vmem:[%s609 + $0x8] sm:$0xff] %v3121
        %3134 = vst [vmem:[%s609 + $0x10] sm:$0xff] %v3122
        %3135 = vst.msk [vmem:[%s609 + $0x18] sm:$0xff] %vm2896, %v3123
        %3136 = vst [vmem:[%s609 + $0x28] sm:$0xff] %v3124
        %3137 = vst [vmem:[%s609 + $0x30] sm:$0xff] %v3125
        %3138 = vst.msk [vmem:[%s609 + $0x38] sm:$0xff] %vm2896, %v3126
        %3139 = vst [vmem:[%s609 + $0x48] sm:$0xff] %v3127
        %3140 = vst [vmem:[%s609 + $0x50] sm:$0xff] %v3128
        %3141 = vst.msk [vmem:[%s609 + $0x58] sm:$0xff] %vm2896, %v3129
        %3142 = vst [vmem:[%s609 + $0x68] sm:$0xff] %v3130
        %3143 = vst [vmem:[%s609 + $0x70] sm:$0xff] %v3131
        %3144 = vst.msk [vmem:[%s609 + $0x78] sm:$0xff] %vm2896, %v3132
      $region72: #{residual_group.1} parent=59 // pred_fallthru
        _
      %p3145 = scmp.lt.s32.totalorder %s25, 1
      %s3146 = scalar_select %p3145, %s25, 1
      %s3147 = smul.addr %s3146, 16
      %s3148 = smul.addr %s3147, 8
      %s3149 = scalar_lea.vmem %s10, %s3148
      // Predicated region
      $region73: #{residual_group.1} parent=59 // pred_check
        %p3150 = pneg %p330
      $region74: #{residual_group.1} parent=59 // pred_check_branch
        %3152 = sbr.rel (%p3150) target = $region76
      $region75: #{residual_group.1} parent=59 // pred_region
        _
      $region76: #{residual_group.1} parent=59 // pred_fallthru
        _
    $region60: #{residual_group.1} parent=5 // pred_fallthru
      _
    %p3153 = scmp.le.s32.totalorder 2, %s16
    // Predicated region
    $region77: #{residual_group.1} parent=5 // pred_check
      %p3154 = pneg %p3153
    $region78: #{residual_group.1} parent=5 // pred_check_branch
      %3156 = sbr.rel (%p3154) target = $region80
    $region79: #{residual_group.1} parent=5 // pred_region
      %s3157 = ssub.s32 %s16, 2
      // Predicated region
      $region81: #{residual_group.1} parent=79 // pred_check
        %p3158 = pneg %p336
      $region82: #{residual_group.1} parent=79 // pred_check_branch
        %3160 = sbr.rel (%p3158) target = $region84
      $region83: #{residual_group.1} parent=79 // pred_region
        %p3161 = scmp.lt.s32.totalorder %s27, 1
        %s3162 = scalar_select %p3161, %s27, 1
        %s3163 = smul.addr %s3162, 16
        %s3164 = smul.addr %s3163, 8
        %s3165 = scalar_lea.vmem %s10, %s3164
      $region84: #{residual_group.1} parent=79 // pred_fallthru
        _
    $region80: #{residual_group.1} parent=5 // pred_fallthru
      _
  $region6: #{residual_group.1} parent=0 // loop_footer
    %s20 = sadd.s32 1, %s16
  $region7: #{residual_group.1} parent=0 // loop_footer_branch
    %15 = sbr.rel target = $region3
  $region8: #{residual_group.1} parent=0 // loop_exit
    _

</llo_original>
